<compile_context>
chip_gen: v5e
topology: v5e:2x2
jax: 0.10.0
libtpu: 0.0.40
codegen_flags: <defaults>
</compile_context>

<pallas_src>
import jax
import jax.numpy as jnp
import numpy as np
from jax.experimental import pallas as pl
from jax.experimental.pallas import tpu as pltpu

_VMEM_LIMIT = 48 * 1024 * 1024   # v7x-safe scoped VMEM ceiling (64 MiB physical)


def _largest_divisor_tile(n, target, step):
    """Largest multiple of `step` that divides `n` and is <= target (fallback: n)."""
    t = (min(n, target) // step) * step
    while t >= step:
        if n % t == 0:
            return t
        t -= step
    return n


# ----------------------------------------------------------------------------
# Pallas kernel 1: hoisted input projection  gates_x = X @ W_ih^T + (b_ih+b_hh)
# ----------------------------------------------------------------------------
def _input_proj_kernel(x_ref, w_ref, b_ref, out_ref):
    out_ref[...] = (
        jnp.dot(x_ref[...], w_ref[...], preferred_element_type=jnp.float32)
        + b_ref[...])


def input_projection(x_flat, wih_t, bias, *, tile_n=512):
    """x_flat: (N, E) bf16, wih_t: (E, 4H) bf16, bias: (1, 4H) f32 -> (N, 4H) f32."""
    N, E = x_flat.shape
    G = wih_t.shape[-1]
    tn = _largest_divisor_tile(N, tile_n, 8)
    assert N % tn == 0
    cost = pl.CostEstimate(
        flops=2 * N * E * G,
        transcendentals=0,
        bytes_accessed=N * E * 2 + E * G * 2 + G * 4 + N * G * 4)
    return pl.pallas_call(
        _input_proj_kernel,
        out_shape=jax.ShapeDtypeStruct((N, G), jnp.float32),
        grid_spec=pltpu.PrefetchScalarGridSpec(
            num_scalar_prefetch=0,
            grid=(N // tn,),
            in_specs=[
                pl.BlockSpec((tn, E), lambda i: (i, 0)),   # x rows (bf16)
                pl.BlockSpec((E, G), lambda i: (0, 0)),    # W_ih^T (bf16)
                pl.BlockSpec((1, G), lambda i: (0, 0)),    # fused bias (f32)
            ],
            out_specs=pl.BlockSpec((tn, G), lambda i: (i, 0)),
        ),
        compiler_params=pltpu.CompilerParams(
            dimension_semantics=("parallel",),
            vmem_limit_bytes=_VMEM_LIMIT),
        cost_estimate=cost,
    )(x_flat, wih_t, bias)


# ----------------------------------------------------------------------------
# Pallas kernel 2: LSTM recurrence — T-chunked grid ("arbitrary"), h/c carry in
# VMEM scratch, bounded unroll inside each chunk, bf16 hidden writeback.
# ----------------------------------------------------------------------------
def _lstm_recurrence_kernel(gx_ref, whh_ref, h0_ref, c0_ref,
                            out_ref, hN_ref, cN_ref, h_scr, c_scr):
    Tc = gx_ref.shape[0]
    H = h0_ref.shape[-1]

    @pl.when(pl.program_id(0) == 0)
    def _():
        h_scr[...] = h0_ref[...]
        c_scr[...] = c0_ref[...]

    # TODO(synk): keep W_hh resident in the MXU across steps via
    # pltpu.matmul_push_rhs / matmul_acc_lhs / matmul_pop to remove the
    # per-step weight push from the serial critical path.
    def step(t, carry):
        h, c = carry
        gates = gx_ref[t] + jnp.dot(                     # (B, 4H) f32 accumulate
            h.astype(whh_ref.dtype), whh_ref[...],
            preferred_element_type=jnp.float32)
        # PyTorch gate order: i, f, g, o ; gate math kept in f32.
        i = jax.nn.sigmoid(gates[:, 0 * H:1 * H])
        f = jax.nn.sigmoid(gates[:, 1 * H:2 * H])
        g = jnp.tanh(gates[:, 2 * H:3 * H])
        o = jax.nn.sigmoid(gates[:, 3 * H:4 * H])
        c_new = f * c + i * g
        h_new = o * jnp.tanh(c_new)
        out_ref[t] = h_new.astype(out_ref.dtype)         # one bf16 store per step
        return h_new, c_new

    h_T, c_T = jax.lax.fori_loop(
        0, Tc, step, (h_scr[...], c_scr[...]), unroll=True)
    h_scr[...] = h_T
    c_scr[...] = c_T
    hN_ref[...] = h_T                                    # last chunk's value wins
    cN_ref[...] = c_T


def lstm_recurrence(gates_x, whh_t, h0, c0, *, chunk_t=16):
    """gates_x: (T, B, 4H) f32, whh_t: (H, 4H) bf16, h0/c0: (B, H) f32.

    Returns (out (T,B,H) bf16, h_T (B,H) f32, c_T (B,H) f32).
    """
    # TODO(synk): on v7x, split the (independent-per-row) recurrence across the
    # two TensorCores with a leading "parallel" batch-half grid axis.
    T, B, G = gates_x.shape
    H = h0.shape[-1]
    Tc = _largest_divisor_tile(T, chunk_t, 1)
    assert T % Tc == 0
    out_shapes = (
        jax.ShapeDtypeStruct((T, B, H), jnp.bfloat16),   # per-step hidden (bf16)
        jax.ShapeDtypeStruct((B, H), jnp.float32),       # final h
        jax.ShapeDtypeStruct((B, H), jnp.float32),       # final c
    )
    return pl.pallas_call(
        _lstm_recurrence_kernel,
        out_shape=out_shapes,
        grid_spec=pltpu.PrefetchScalarGridSpec(
            num_scalar_prefetch=0,
            grid=(T // Tc,),
            in_specs=[
                pl.BlockSpec((Tc, B, G), lambda t: (t, 0, 0)),  # gate chunk (f32)
                pl.BlockSpec((H, G), lambda t: (0, 0)),         # W_hh^T (bf16)
                pl.BlockSpec((B, H), lambda t: (0, 0)),          # h0
                pl.BlockSpec((B, H), lambda t: (0, 0)),          # c0
            ],
            out_specs=(
                pl.BlockSpec((Tc, B, H), lambda t: (t, 0, 0)),
                pl.BlockSpec((B, H), lambda t: (0, 0)),
                pl.BlockSpec((B, H), lambda t: (0, 0)),
            ),
            scratch_shapes=[
                pltpu.VMEM((B, H), jnp.float32),   # h carry across chunks
                pltpu.VMEM((B, H), jnp.float32),   # c carry across chunks
            ],
        ),
        compiler_params=pltpu.CompilerParams(
            dimension_semantics=("arbitrary",),
            vmem_limit_bytes=_VMEM_LIMIT),
    )(gates_x, whh_t, h0, c0)


# ----------------------------------------------------------------------------
# Pallas kernel 3a: classifier (Linear -> ReLU -> tied Linear) with the vocab
# axis tiled and an online (flash-style) log-sum-exp accumulated in scratch.
# Emits raw logits + per-row LSE.
# ----------------------------------------------------------------------------
def _classifier_logits_kernel(h_ref, w1_ref, b1_ref, w2_ref,
                              logits_ref, lse_ref, z_scr, m_scr, l_scr):
    j = pl.program_id(1)

    @pl.when(j == 0)
    def _():
        z = jnp.dot(h_ref[...], w1_ref[...],
                    preferred_element_type=jnp.float32) + b1_ref[...]
        z = jnp.maximum(z, 0.0)
        z_scr[...] = z.astype(z_scr.dtype)       # cached across V-tiles (bf16)
        m_scr[...] = jnp.full(m_scr.shape, -jnp.inf, m_scr.dtype)
        l_scr[...] = jnp.zeros(l_scr.shape, l_scr.dtype)

    logits = jnp.dot(z_scr[...], w2_ref[...],
                     preferred_element_type=jnp.float32)
    logits_ref[...] = logits

    m_prev = m_scr[...]
    m_new = jnp.maximum(m_prev, jnp.max(logits, axis=-1, keepdims=True))
    l_scr[...] = (l_scr[...] * jnp.exp(m_prev - m_new)
                  + jnp.sum(jnp.exp(logits - m_new), axis=-1, keepdims=True))
    m_scr[...] = m_new

    @pl.when(j == pl.num_programs(1) - 1)
    def _():
        lse_ref[...] = m_scr[...] + jnp.log(l_scr[...])


def classifier_logits(h_flat, w1_t, b1, w2_t, *, tile_n=256, tile_v=1024):
    """h_flat: (N, H) bf16 -> (logits (N, V) f32, lse (N, 1) f32)."""
    N, H = h_flat.shape
    E = w1_t.shape[-1]
    V = w2_t.shape[-1]
    tn = _largest_divisor_tile(N, tile_n, 8)
    tv = _largest_divisor_tile(V, tile_v, 128)
    assert N % tn == 0 and V % tv == 0
    cost = pl.CostEstimate(
        flops=2 * N * H * E + 2 * N * E * V,
        transcendentals=N * V,
        bytes_accessed=N * H * 2 + H * E * 2 + E * V * 2 + N * V * 4 + N * 4)
    return pl.pallas_call(
        _classifier_logits_kernel,
        out_shape=(jax.ShapeDtypeStruct((N, V), jnp.float32),
                   jax.ShapeDtypeStruct((N, 1), jnp.float32)),
        grid_spec=pltpu.PrefetchScalarGridSpec(
            num_scalar_prefetch=0,
            grid=(N // tn, V // tv),
            in_specs=[
                pl.BlockSpec((tn, H), lambda i, j: (i, 0)),   # hidden rows (bf16)
                pl.BlockSpec((H, E), lambda i, j: (0, 0)),    # W1^T (bf16)
                pl.BlockSpec((1, E), lambda i, j: (0, 0)),    # b1 (f32)
                pl.BlockSpec((E, tv), lambda i, j: (0, j)),   # tied W2^T V-tile (bf16)
            ],
            out_specs=(
                pl.BlockSpec((tn, tv), lambda i, j: (i, j)),  # raw logits
                pl.BlockSpec((tn, 1), lambda i, j: (i, 0)),   # per-row LSE
            ),
            scratch_shapes=[
                pltpu.VMEM((tn, E), jnp.bfloat16),   # cached ReLU(h @ W1 + b1)
                pltpu.VMEM((tn, 1), jnp.float32),    # running max
                pltpu.VMEM((tn, 1), jnp.float32),    # running sum-exp
            ],
        ),
        compiler_params=pltpu.CompilerParams(
            dimension_semantics=("parallel", "arbitrary"),
            vmem_limit_bytes=_VMEM_LIMIT),
        cost_estimate=cost,
    )(h_flat, w1_t, b1, w2_t)


# ----------------------------------------------------------------------------
# Pallas kernel 3b: cheap mem-bound pass — log_probs = logits - lse.
# ----------------------------------------------------------------------------
def _normalize_kernel(logits_ref, lse_ref, out_ref):
    out_ref[...] = logits_ref[...] - lse_ref[...]


def normalize_logits(logits, lse, *, tile_n=256, tile_v=2048):
    N, V = logits.shape
    tn = _largest_divisor_tile(N, tile_n, 8)
    tv = _largest_divisor_tile(V, tile_v, 128)
    cost = pl.CostEstimate(flops=N * V, transcendentals=0,
                           bytes_accessed=2 * N * V * 4 + N * 4)
    return pl.pallas_call(
        _normalize_kernel,
        out_shape=jax.ShapeDtypeStruct((N, V), jnp.float32),
        grid_spec=pltpu.PrefetchScalarGridSpec(
            num_scalar_prefetch=0,
            grid=(N // tn, V // tv),
            in_specs=[
                pl.BlockSpec((tn, tv), lambda i, j: (i, j)),
                pl.BlockSpec((tn, 1), lambda i, j: (i, 0)),
            ],
            out_specs=pl.BlockSpec((tn, tv), lambda i, j: (i, j)),
        ),
        compiler_params=pltpu.CompilerParams(
            dimension_semantics=("parallel", "parallel"),
            vmem_limit_bytes=_VMEM_LIMIT),
        cost_estimate=cost,
    )(logits, lse)


# ----------------------------------------------------------------------------
# Full model forward (glue in plain JAX)
# ----------------------------------------------------------------------------
@jax.jit
def lstm_lm_forward(inputs, h0, c0, params):
    B, T = inputs.shape
    H = params["whh_t"].shape[0]
    V = params["embedding"].shape[0]

    # Pad the batch to a sublane multiple so every per-step recurrence
    # load/store and the h @ W_hh matmul are full-tile, unmasked.
    B_pad = ((B + 7) // 8) * 8
    pad_b = B_pad - B
    inputs_p = jnp.pad(inputs, ((0, pad_b), (0, 0)))          # pad token id 0
    h0_p = jnp.pad(h0[0], ((0, pad_b), (0, 0)))
    c0_p = jnp.pad(c0[0], ((0, pad_b), (0, 0)))

    # Embedding lookup (gather) in time-major flattened order.
    # TODO(synk): fuse the gather into the projection kernel via a manual DMA
    # row gather so the (T*B, E) activation never round-trips through HBM.
    ids_tm = jnp.transpose(inputs_p).reshape(-1)                    # (T*B_pad,)
    x_flat = jnp.take(params["embedding_bf16"], ids_tm, axis=0)     # (T*B_pad, E) bf16

    # Hoisted input projection (one batched matmul for the whole sequence).
    gates_x = input_projection(x_flat, params["wih_t"], params["bias"])
    gates_x = gates_x.reshape(T, B_pad, 4 * H)                      # (T, B_pad, 4H)

    out_tbh, h_T, c_T = lstm_recurrence(
        gates_x, params["whh_t"], h0_p, c0_p)                       # (T, B_pad, H) bf16

    # Batch-major rows for the classifier: one SMALL (T,B,H) bf16 transpose so
    # the big (B,T,V) log-prob tensor is produced directly in its final layout
    # (the previous full-size (T,B,V) transpose is gone).
    h_rows = jnp.transpose(out_tbh[:, :B, :], (1, 0, 2)).reshape(B * T, H)

    logits, lse = classifier_logits(
        h_rows, params["w1_t"], params["b1"], params["w2_t"])       # (B*T, V), (B*T, 1)
    logp_rows = normalize_logits(logits, lse)                       # (B*T, V)
    log_probas = logp_rows.reshape(B, T, V)

    return log_probas, (h_T[:B][None], c_T[:B][None])


# ----------------------------------------------------------------------------
# Pure-JAX reference (f32 master weights) for validation
# ----------------------------------------------------------------------------
def reference_forward(inputs, h0, c0, params):
    emb_w = params["embedding"]
    x = jnp.take(emb_w, inputs, axis=0)       # (B, T, E)
    B, T, E = x.shape
    H = h0.shape[-1]
    h, c = h0[0], c0[0]
    outs = []
    for t in range(T):
        gates = (x[:, t] @ params["wih_t_f32"] + h @ params["whh_t_f32"]
                 + params["bias"][0])
        i = jax.nn.sigmoid(gates[:, 0 * H:1 * H])
        f = jax.nn.sigmoid(gates[:, 1 * H:2 * H])
        g = jnp.tanh(gates[:, 2 * H:3 * H])
        o = jax.nn.sigmoid(gates[:, 3 * H:4 * H])
        c = f * c + i * g
        h = o * jnp.tanh(c)
        outs.append(h)
    hs = jnp.stack(outs, axis=1)               # (B, T, H)
    z = jnp.maximum(hs @ params["w1_t_f32"] + params["b1"][0], 0.0)
    logits = z @ jnp.transpose(emb_w)          # tied weight
    return jax.nn.log_softmax(logits, axis=-1), (h[None], c[None])


# ----------------------------------------------------------------------------
# Deterministic parameter construction
# ----------------------------------------------------------------------------
def make_params(key, vocab_size, embedding_size, hidden_size):
    k_emb, k_ih, k_hh, k_bih, k_bhh, k_w1, k_b1 = jax.random.split(key, 7)
    scale = 0.08

    emb = jax.random.normal(k_emb, (vocab_size, embedding_size), jnp.float32) * 0.1
    emb = emb.at[0].set(0.0)   # nn.Embedding padding_idx=0 -> zero row

    w_ih = jax.random.uniform(k_ih, (4 * hidden_size, embedding_size),
                              jnp.float32, -scale, scale)
    w_hh = jax.random.uniform(k_hh, (4 * hidden_size, hidden_size),
                              jnp.float32, -scale, scale)
    b_ih = jax.random.uniform(k_bih, (4 * hidden_size,), jnp.float32, -scale, scale)
    b_hh = jax.random.uniform(k_bhh, (4 * hidden_size,), jnp.float32, -scale, scale)

    w1 = jax.random.uniform(k_w1, (embedding_size, hidden_size),
                            jnp.float32, -scale, scale)
    b1 = jax.random.uniform(k_b1, (embedding_size,), jnp.float32, -scale, scale)

    wih_t = jnp.transpose(w_ih)    # (E, 4H)
    whh_t = jnp.transpose(w_hh)    # (H, 4H)
    w1_t = jnp.transpose(w1)       # (H, E)

    return {
        # f32 masters (reference path / tie source)
        "embedding": emb,
        "wih_t_f32": wih_t,
        "whh_t_f32": whh_t,
        "w1_t_f32": w1_t,
        # bf16 copies fed to the MXU (f32 accumulate inside the kernels)
        "embedding_bf16": emb.astype(jnp.bfloat16),
        "wih_t": wih_t.astype(jnp.bfloat16),
        "whh_t": whh_t.astype(jnp.bfloat16),
        "w1_t": w1_t.astype(jnp.bfloat16),
        "w2_t": jnp.transpose(emb).astype(jnp.bfloat16),   # tied classifier weight (E, V)
        # f32 bias terms
        "bias": (b_ih + b_hh)[None, :],                    # (1, 4H)
        "b1": b1[None, :],                                 # (1, E)
    }


if __name__ == "__main__":
    # Small, TPU-friendly synthetic shapes.
    VOCAB, EMB, HID = 256, 128, 128
    BATCH, SEQ, NUM_LAYERS = 2, 8, 1

    key = jax.random.PRNGKey(0)
    k_params, k_inputs = jax.random.split(key)

    params = make_params(k_params, VOCAB, EMB, HID)
    inputs = jax.random.randint(k_inputs, (BATCH, SEQ), 0, VOCAB, dtype=jnp.int32)
    h0 = jnp.zeros((NUM_LAYERS, BATCH, HID), jnp.float32)
    c0 = jnp.zeros((NUM_LAYERS, BATCH, HID), jnp.float32)

    log_probas, (h_T, c_T) = lstm_lm_forward(inputs, h0, c0, params)
    jax.block_until_ready((log_probas, h_T, c_T))

    ref_lp, (ref_h, ref_c) = reference_forward(inputs, h0, c0, params)
    np.testing.assert_allclose(np.asarray(log_probas), np.asarray(ref_lp),
                               rtol=1e-2, atol=1e-2)
    np.testing.assert_allclose(np.asarray(h_T), np.asarray(ref_h),
                               rtol=1e-2, atol=1e-2)
    np.testing.assert_allclose(np.asarray(c_T), np.asarray(ref_c),
                               rtol=1e-2, atol=1e-2)

    assert log_probas.shape == (BATCH, SEQ, VOCAB)
    assert h_T.shape == (NUM_LAYERS, BATCH, HID) and c_T.shape == (NUM_LAYERS, BATCH, HID)
    print("KERNEL_OK")
</pallas_src>

<mosaic_0001>
module attributes {stable_mosaic.version = 11 : i64} {
  func.func @_classifier_logits_kernel(%arg0: i32, %arg1: i32, %arg2: memref<16x128xbf16, #tpu.memory_space<vmem>>, %arg3: memref<128x128xbf16, #tpu.memory_space<vmem>>, %arg4: memref<1x128xf32, #tpu.memory_space<vmem>>, %arg5: memref<128x256xbf16, #tpu.memory_space<vmem>>, %arg6: memref<16x256xf32, #tpu.memory_space<vmem>>, %arg7: memref<16x1xf32, #tpu.memory_space<vmem>>, %arg8: memref<16x128xbf16, #tpu.memory_space<vmem>>, %arg9: memref<16x1xf32, #tpu.memory_space<vmem>>, %arg10: memref<16x1xf32, #tpu.memory_space<vmem>>) attributes {dimension_semantics = [#tpu.dimension_semantics<parallel>, #tpu.dimension_semantics<arbitrary>], iteration_bounds = array<i64: 1, 1>, scalar_prefetch = 0 : i64, scratch_operands = 3 : i64, tpu.core_type = #tpu.core_type<tc>, window_params = [{transform_indices = @transform_0, window_bounds = array<i64: 16, 128>}, {pipeline_mode = #tpu.pipeline_mode<synchronous>, transform_indices = @transform_1, window_bounds = array<i64: 128, 128>}, {pipeline_mode = #tpu.pipeline_mode<synchronous>, transform_indices = @transform_2, window_bounds = array<i64: 1, 128>}, {transform_indices = @transform_3, window_bounds = array<i64: 128, 256>}, {transform_indices = @transform_4, window_bounds = array<i64: 16, 256>}, {transform_indices = @transform_5, window_bounds = array<i64: 16, 1>}]} {
    %c0_i32 = arith.constant 0 : i32
    %0 = arith.cmpi eq, %arg1, %c0_i32 : i32
    %1 = arith.extui %0 : i1 to i32
    %c0_i32_0 = arith.constant 0 : i32
    %2 = arith.cmpi ne, %1, %c0_i32_0 : i32
    scf.if %2 {
      %c0_18 = arith.constant 0 : index
      %c0_19 = arith.constant 0 : index
      %26 = vector.load %arg2[%c0_18, %c0_19] : memref<16x128xbf16, #tpu.memory_space<vmem>>, vector<16x128xbf16>
      %c0_20 = arith.constant 0 : index
      %c0_21 = arith.constant 0 : index
      %27 = vector.load %arg3[%c0_20, %c0_21] : memref<128x128xbf16, #tpu.memory_space<vmem>>, vector<128x128xbf16>
      %cst_22 = arith.constant dense<0.000000e+00> : vector<16x128xf32>
      %28 = tpu.matmul %26, %27, %cst_22 {dimension_numbers = #tpu.dot_dimension_numbers<[1], [0], [0], [1], [0, 0, 1, 1], [], []>} : vector<16x128xbf16>, vector<128x128xbf16>, vector<16x128xf32> -> vector<16x128xf32>
      %c0_23 = arith.constant 0 : index
      %c0_24 = arith.constant 0 : index
      %29 = vector.load %arg4[%c0_23, %c0_24] : memref<1x128xf32, #tpu.memory_space<vmem>>, vector<1x128xf32>
      %30 = vector.broadcast %29 : vector<1x128xf32> to vector<16x128xf32>
      %31 = arith.addf %28, %30 : vector<16x128xf32>
      %cst_25 = arith.constant 0.000000e+00 : f32
      %32 = vector.broadcast %cst_25 : f32 to vector<16x128xf32>
      %33 = arith.maximumf %31, %32 : vector<16x128xf32>
      %34 = arith.truncf %33 : vector<16x128xf32> to vector<16x128xbf16>
      %c0_26 = arith.constant 0 : index
      %c0_27 = arith.constant 0 : index
      %35 = vector.load %arg8[%c0_26, %c0_27] : memref<16x128xbf16, #tpu.memory_space<vmem>>, vector<16x128xbf16>
      tpu.vector_store %arg8[%c0_26, %c0_27], %34 {strides = array<i32>} : memref<16x128xbf16, #tpu.memory_space<vmem>>, vector<16x128xbf16>,
      %cst_28 = arith.constant 0xFF800000 : f32
      %36 = vector.broadcast %cst_28 : f32 to vector<16x1xf32>
      %c0_29 = arith.constant 0 : index
      %c0_30 = arith.constant 0 : index
      %37 = vector.load %arg9[%c0_29, %c0_30] : memref<16x1xf32, #tpu.memory_space<vmem>>, vector<16x1xf32>
      tpu.vector_store %arg9[%c0_29, %c0_30], %36 {strides = array<i32>} : memref<16x1xf32, #tpu.memory_space<vmem>>, vector<16x1xf32>,
      %cst_31 = arith.constant 0.000000e+00 : f32
      %38 = vector.broadcast %cst_31 : f32 to vector<16x1xf32>
      %c0_32 = arith.constant 0 : index
      %c0_33 = arith.constant 0 : index
      %39 = vector.load %arg10[%c0_32, %c0_33] : memref<16x1xf32, #tpu.memory_space<vmem>>, vector<16x1xf32>
      tpu.vector_store %arg10[%c0_32, %c0_33], %38 {strides = array<i32>} : memref<16x1xf32, #tpu.memory_space<vmem>>, vector<16x1xf32>,
    } else {
    }
    %c0 = arith.constant 0 : index
    %c0_1 = arith.constant 0 : index
    %3 = vector.load %arg8[%c0, %c0_1] : memref<16x128xbf16, #tpu.memory_space<vmem>>, vector<16x128xbf16>
    %c0_2 = arith.constant 0 : index
    %c0_3 = arith.constant 0 : index
    %4 = vector.load %arg5[%c0_2, %c0_3] : memref<128x256xbf16, #tpu.memory_space<vmem>>, vector<128x256xbf16>
    %cst = arith.constant dense<0.000000e+00> : vector<16x256xf32>
    %5 = tpu.matmul %3, %4, %cst {dimension_numbers = #tpu.dot_dimension_numbers<[1], [0], [0], [1], [0, 0, 1, 1], [], []>} : vector<16x128xbf16>, vector<128x256xbf16>, vector<16x256xf32> -> vector<16x256xf32>
    %c0_4 = arith.constant 0 : index
    %c0_5 = arith.constant 0 : index
    %6 = vector.load %arg6[%c0_4, %c0_5] : memref<16x256xf32, #tpu.memory_space<vmem>>, vector<16x256xf32>
    tpu.vector_store %arg6[%c0_4, %c0_5], %5 {strides = array<i32>} : memref<16x256xf32, #tpu.memory_space<vmem>>, vector<16x256xf32>,
    %c0_6 = arith.constant 0 : index
    %c0_7 = arith.constant 0 : index
    %7 = vector.load %arg9[%c0_6, %c0_7] : memref<16x1xf32, #tpu.memory_space<vmem>>, vector<16x1xf32>
    %cst_8 = arith.constant dense<0xFF800000> : vector<16xf32>
    %8 = vector.multi_reduction <maximumf>, %5, %cst_8 [1] : vector<16x256xf32> to vector<16xf32>
    %9 = vector.shape_cast %8 : vector<16xf32> to vector<16x1xf32>
    %10 = arith.maximumf %7, %9 : vector<16x1xf32>
    %c0_9 = arith.constant 0 : index
    %c0_10 = arith.constant 0 : index
    %11 = vector.load %arg10[%c0_9, %c0_10] : memref<16x1xf32, #tpu.memory_space<vmem>>, vector<16x1xf32>
    %12 = arith.subf %7, %10 : vector<16x1xf32>
    %13 = math.exp %12 : vector<16x1xf32>
    %14 = arith.mulf %11, %13 : vector<16x1xf32>
    %15 = vector.broadcast %10 : vector<16x1xf32> to vector<16x256xf32>
    %16 = arith.subf %5, %15 : vector<16x256xf32>
    %17 = math.exp %16 : vector<16x256xf32>
    %cst_11 = arith.constant dense<0.000000e+00> : vector<16xf32>
    %18 = vector.multi_reduction <add>, %17, %cst_11 [1] : vector<16x256xf32> to vector<16xf32>
    %19 = vector.shape_cast %18 : vector<16xf32> to vector<16x1xf32>
    %20 = arith.addf %14, %19 : vector<16x1xf32>
    %c0_12 = arith.constant 0 : index
    %c0_13 = arith.constant 0 : index
    %21 = vector.load %arg10[%c0_12, %c0_13] : memref<16x1xf32, #tpu.memory_space<vmem>>, vector<16x1xf32>
    tpu.vector_store %arg10[%c0_12, %c0_13], %20 {strides = array<i32>} : memref<16x1xf32, #tpu.memory_space<vmem>>, vector<16x1xf32>,
    %c0_14 = arith.constant 0 : index
    %c0_15 = arith.constant 0 : index
    %22 = vector.load %arg9[%c0_14, %c0_15] : memref<16x1xf32, #tpu.memory_space<vmem>>, vector<16x1xf32>
    tpu.vector_store %arg9[%c0_14, %c0_15], %10 {strides = array<i32>} : memref<16x1xf32, #tpu.memory_space<vmem>>, vector<16x1xf32>,
    %c0_i32_16 = arith.constant 0 : i32
    %23 = arith.cmpi eq, %arg1, %c0_i32_16 : i32
    %24 = arith.extui %23 : i1 to i32
    %c0_i32_17 = arith.constant 0 : i32
    %25 = arith.cmpi ne, %24, %c0_i32_17 : i32
    scf.if %25 {
      %c0_18 = arith.constant 0 : index
      %c0_19 = arith.constant 0 : index
      %26 = vector.load %arg9[%c0_18, %c0_19] : memref<16x1xf32, #tpu.memory_space<vmem>>, vector<16x1xf32>
      %c0_20 = arith.constant 0 : index
      %c0_21 = arith.constant 0 : index
      %27 = vector.load %arg10[%c0_20, %c0_21] : memref<16x1xf32, #tpu.memory_space<vmem>>, vector<16x1xf32>
      %28 = math.log %27 : vector<16x1xf32>
      %29 = arith.addf %26, %28 : vector<16x1xf32>
      %c0_22 = arith.constant 0 : index
      %c0_23 = arith.constant 0 : index
      %30 = vector.load %arg7[%c0_22, %c0_23] : memref<16x1xf32, #tpu.memory_space<vmem>>, vector<16x1xf32>
      tpu.vector_store %arg7[%c0_22, %c0_23], %29 {strides = array<i32>} : memref<16x1xf32, #tpu.memory_space<vmem>>, vector<16x1xf32>,
    } else {
    }
    return
  }
  func.func @transform_0(%arg0: i32, %arg1: i32) -> (i32, i32) {
    %c0_i32 = arith.constant 0 : i32
    %c0_i32_0 = arith.constant 0 : i32
    return %arg0, %c0_i32 : i32, i32
  }
  func.func @transform_1(%arg0: i32, %arg1: i32) -> (i32, i32) {
    %c0_i32 = arith.constant 0 : i32
    %c0_i32_0 = arith.constant 0 : i32
    %c0_i32_1 = arith.constant 0 : i32
    return %c0_i32, %c0_i32_0 : i32, i32
  }
  func.func @transform_2(%arg0: i32, %arg1: i32) -> (i32, i32) {
    %c0_i32 = arith.constant 0 : i32
    %c0_i32_0 = arith.constant 0 : i32
    %c0_i32_1 = arith.constant 0 : i32
    return %c0_i32, %c0_i32_0 : i32, i32
  }
  func.func @transform_3(%arg0: i32, %arg1: i32) -> (i32, i32) {
    %c0_i32 = arith.constant 0 : i32
    %c0_i32_0 = arith.constant 0 : i32
    return %c0_i32, %arg1 : i32, i32
  }
  func.func @transform_4(%arg0: i32, %arg1: i32) -> (i32, i32) {
    %c0_i32 = arith.constant 0 : i32
    return %arg0, %arg1 : i32, i32
  }
  func.func @transform_5(%arg0: i32, %arg1: i32) -> (i32, i32) {
    %c0_i32 = arith.constant 0 : i32
    %c0_i32_0 = arith.constant 0 : i32
    return %arg0, %c0_i32 : i32, i32
  }
}

module attributes {stable_mosaic.version = 11 : i64} {
  func.func @_input_proj_kernel(%arg0: i32, %arg1: memref<64x128xbf16, #tpu.memory_space<vmem>>, %arg2: memref<128x512xbf16, #tpu.memory_space<vmem>>, %arg3: memref<1x512xf32, #tpu.memory_space<vmem>>, %arg4: memref<64x512xf32, #tpu.memory_space<vmem>>) attributes {dimension_semantics = [#tpu.dimension_semantics<parallel>], iteration_bounds = array<i64: 1>, scalar_prefetch = 0 : i64, scratch_operands = 0 : i64, tpu.core_type = #tpu.core_type<tc>, window_params = [{transform_indices = @transform_0, window_bounds = array<i64: 64, 128>}, {pipeline_mode = #tpu.pipeline_mode<synchronous>, transform_indices = @transform_1, window_bounds = array<i64: 128, 512>}, {pipeline_mode = #tpu.pipeline_mode<synchronous>, transform_indices = @transform_2, window_bounds = array<i64: 1, 512>}, {transform_indices = @transform_3, window_bounds = array<i64: 64, 512>}]} {
    %c0 = arith.constant 0 : index
    %c0_0 = arith.constant 0 : index
    %0 = vector.load %arg1[%c0, %c0_0] : memref<64x128xbf16, #tpu.memory_space<vmem>>, vector<64x128xbf16>
    %c0_1 = arith.constant 0 : index
    %c0_2 = arith.constant 0 : index
    %1 = vector.load %arg2[%c0_1, %c0_2] : memref<128x512xbf16, #tpu.memory_space<vmem>>, vector<128x512xbf16>
    %cst = arith.constant dense<0.000000e+00> : vector<64x512xf32>
    %2 = tpu.matmul %0, %1, %cst {dimension_numbers = #tpu.dot_dimension_numbers<[1], [0], [0], [1], [0, 0, 1, 1], [], []>} : vector<64x128xbf16>, vector<128x512xbf16>, vector<64x512xf32> -> vector<64x512xf32>
    %c0_3 = arith.constant 0 : index
    %c0_4 = arith.constant 0 : index
    %3 = vector.load %arg3[%c0_3, %c0_4] : memref<1x512xf32, #tpu.memory_space<vmem>>, vector<1x512xf32>
    %4 = vector.broadcast %3 : vector<1x512xf32> to vector<64x512xf32>
    %5 = arith.addf %2, %4 : vector<64x512xf32>
    %c0_5 = arith.constant 0 : index
    %c0_6 = arith.constant 0 : index
    %6 = vector.load %arg4[%c0_5, %c0_6] : memref<64x512xf32, #tpu.memory_space<vmem>>, vector<64x512xf32>
    tpu.vector_store %arg4[%c0_5, %c0_6], %5 {strides = array<i32>} : memref<64x512xf32, #tpu.memory_space<vmem>>, vector<64x512xf32>,
    return
  }
  func.func @transform_0(%arg0: i32) -> (i32, i32) {
    %c0_i32 = arith.constant 0 : i32
    %c0_i32_0 = arith.constant 0 : i32
    return %arg0, %c0_i32 : i32, i32
  }
  func.func @transform_1(%arg0: i32) -> (i32, i32) {
    %c0_i32 = arith.constant 0 : i32
    %c0_i32_0 = arith.constant 0 : i32
    %c0_i32_1 = arith.constant 0 : i32
    return %c0_i32, %c0_i32_0 : i32, i32
  }
  func.func @transform_2(%arg0: i32) -> (i32, i32) {
    %c0_i32 = arith.constant 0 : i32
    %c0_i32_0 = arith.constant 0 : i32
    %c0_i32_1 = arith.constant 0 : i32
    return %c0_i32, %c0_i32_0 : i32, i32
  }
  func.func @transform_3(%arg0: i32) -> (i32, i32) {
    %c0_i32 = arith.constant 0 : i32
    %c0_i32_0 = arith.constant 0 : i32
    return %arg0, %c0_i32 : i32, i32
  }
}

module attributes {stable_mosaic.version = 11 : i64} {
  func.func @_normalize_kernel(%arg0: i32, %arg1: i32, %arg2: memref<16x256xf32, #tpu.memory_space<vmem>>, %arg3: memref<16x1xf32, #tpu.memory_space<vmem>>, %arg4: memref<16x256xf32, #tpu.memory_space<vmem>>) attributes {dimension_semantics = [#tpu.dimension_semantics<parallel>, #tpu.dimension_semantics<parallel>], iteration_bounds = array<i64: 1, 1>, scalar_prefetch = 0 : i64, scratch_operands = 0 : i64, tpu.core_type = #tpu.core_type<tc>, window_params = [{transform_indices = @transform_0, window_bounds = array<i64: 16, 256>}, {transform_indices = @transform_1, window_bounds = array<i64: 16, 1>}, {transform_indices = @transform_2, window_bounds = array<i64: 16, 256>}]} {
    %c0 = arith.constant 0 : index
    %c0_0 = arith.constant 0 : index
    %0 = vector.load %arg2[%c0, %c0_0] : memref<16x256xf32, #tpu.memory_space<vmem>>, vector<16x256xf32>
    %c0_1 = arith.constant 0 : index
    %c0_2 = arith.constant 0 : index
    %1 = vector.load %arg3[%c0_1, %c0_2] : memref<16x1xf32, #tpu.memory_space<vmem>>, vector<16x1xf32>
    %2 = vector.broadcast %1 : vector<16x1xf32> to vector<16x256xf32>
    %3 = arith.subf %0, %2 : vector<16x256xf32>
    %c0_3 = arith.constant 0 : index
    %c0_4 = arith.constant 0 : index
    %4 = vector.load %arg4[%c0_3, %c0_4] : memref<16x256xf32, #tpu.memory_space<vmem>>, vector<16x256xf32>
    tpu.vector_store %arg4[%c0_3, %c0_4], %3 {strides = array<i32>} : memref<16x256xf32, #tpu.memory_space<vmem>>, vector<16x256xf32>,
    return
  }
  func.func @transform_0(%arg0: i32, %arg1: i32) -> (i32, i32) {
    %c0_i32 = arith.constant 0 : i32
    return %arg0, %arg1 : i32, i32
  }
  func.func @transform_1(%arg0: i32, %arg1: i32) -> (i32, i32) {
    %c0_i32 = arith.constant 0 : i32
    %c0_i32_0 = arith.constant 0 : i32
    return %arg0, %c0_i32 : i32, i32
  }
  func.func @transform_2(%arg0: i32, %arg1: i32) -> (i32, i32) {
    %c0_i32 = arith.constant 0 : i32
    return %arg0, %arg1 : i32, i32
  }
}

module attributes {stable_mosaic.version = 11 : i64} {
  func.func @_lstm_recurrence_kernel(%arg0: i32, %arg1: memref<8x8x512xf32, #tpu.memory_space<vmem>>, %arg2: memref<128x512xbf16, #tpu.memory_space<vmem>>, %arg3: memref<8x128xf32, #tpu.memory_space<vmem>>, %arg4: memref<8x128xf32, #tpu.memory_space<vmem>>, %arg5: memref<8x8x128xbf16, #tpu.memory_space<vmem>>, %arg6: memref<8x128xf32, #tpu.memory_space<vmem>>, %arg7: memref<8x128xf32, #tpu.memory_space<vmem>>, %arg8: memref<8x128xf32, #tpu.memory_space<vmem>>, %arg9: memref<8x128xf32, #tpu.memory_space<vmem>>) attributes {dimension_semantics = [#tpu.dimension_semantics<arbitrary>], iteration_bounds = array<i64: 1>, scalar_prefetch = 0 : i64, scratch_operands = 2 : i64, tpu.core_type = #tpu.core_type<tc>, window_params = [{transform_indices = @transform_0, window_bounds = array<i64: 8, 8, 512>}, {pipeline_mode = #tpu.pipeline_mode<synchronous>, transform_indices = @transform_1, window_bounds = array<i64: 128, 512>}, {pipeline_mode = #tpu.pipeline_mode<synchronous>, transform_indices = @transform_2, window_bounds = array<i64: 8, 128>}, {pipeline_mode = #tpu.pipeline_mode<synchronous>, transform_indices = @transform_3, window_bounds = array<i64: 8, 128>}, {transform_indices = @transform_4, window_bounds = array<i64: 8, 8, 128>}, {pipeline_mode = #tpu.pipeline_mode<synchronous>, transform_indices = @transform_5, window_bounds = array<i64: 8, 128>}, {pipeline_mode = #tpu.pipeline_mode<synchronous>, transform_indices = @transform_6, window_bounds = array<i64: 8, 128>}]} {
    %c0_i32 = arith.constant 0 : i32
    %0 = arith.cmpi eq, %arg0, %c0_i32 : i32
    %1 = arith.extui %0 : i1 to i32
    %c0_i32_0 = arith.constant 0 : i32
    %2 = arith.cmpi ne, %1, %c0_i32_0 : i32
    scf.if %2 {
      %c0_92 = arith.constant 0 : index
      %c0_93 = arith.constant 0 : index
      %305 = vector.load %arg3[%c0_92, %c0_93] : memref<8x128xf32, #tpu.memory_space<vmem>>, vector<8x128xf32>
      %c0_94 = arith.constant 0 : index
      %c0_95 = arith.constant 0 : index
      %306 = vector.load %arg8[%c0_94, %c0_95] : memref<8x128xf32, #tpu.memory_space<vmem>>, vector<8x128xf32>
      tpu.vector_store %arg8[%c0_94, %c0_95], %305 {strides = array<i32>} : memref<8x128xf32, #tpu.memory_space<vmem>>, vector<8x128xf32>,
      %c0_96 = arith.constant 0 : index
      %c0_97 = arith.constant 0 : index
      %307 = vector.load %arg4[%c0_96, %c0_97] : memref<8x128xf32, #tpu.memory_space<vmem>>, vector<8x128xf32>
      %c0_98 = arith.constant 0 : index
      %c0_99 = arith.constant 0 : index
      %308 = vector.load %arg9[%c0_98, %c0_99] : memref<8x128xf32, #tpu.memory_space<vmem>>, vector<8x128xf32>
      tpu.vector_store %arg9[%c0_98, %c0_99], %307 {strides = array<i32>} : memref<8x128xf32, #tpu.memory_space<vmem>>, vector<8x128xf32>,
    } else {
    }
    %c0 = arith.constant 0 : index
    %c0_1 = arith.constant 0 : index
    %3 = vector.load %arg8[%c0, %c0_1] : memref<8x128xf32, #tpu.memory_space<vmem>>, vector<8x128xf32>
    %c0_2 = arith.constant 0 : index
    %c0_3 = arith.constant 0 : index
    %4 = vector.load %arg9[%c0_2, %c0_3] : memref<8x128xf32, #tpu.memory_space<vmem>>, vector<8x128xf32>
    %c0_i32_4 = arith.constant 0 : i32
    %5 = arith.index_cast %c0_i32_4 : i32 to index
    %c0_5 = arith.constant 0 : index
    %c0_6 = arith.constant 0 : index
    %6 = vector.load %arg1[%5, %c0_5, %c0_6] : memref<8x8x512xf32, #tpu.memory_space<vmem>>, vector<1x8x512xf32>
    %7 = vector.shape_cast %6 : vector<1x8x512xf32> to vector<8x512xf32>
    %8 = arith.truncf %3 : vector<8x128xf32> to vector<8x128xbf16>
    %c0_7 = arith.constant 0 : index
    %c0_8 = arith.constant 0 : index
    %9 = vector.load %arg2[%c0_7, %c0_8] : memref<128x512xbf16, #tpu.memory_space<vmem>>, vector<128x512xbf16>
    %cst = arith.constant dense<0.000000e+00> : vector<8x512xf32>
    %10 = tpu.matmul %8, %9, %cst {dimension_numbers = #tpu.dot_dimension_numbers<[1], [0], [0], [1], [0, 0, 1, 1], [], []>} : vector<8x128xbf16>, vector<128x512xbf16>, vector<8x512xf32> -> vector<8x512xf32>
    %11 = arith.addf %7, %10 : vector<8x512xf32>
    %12 = vector.extract_strided_slice %11 {offsets = [0, 0], sizes = [8, 128], strides = [1, 1]} : vector<8x512xf32> to vector<8x128xf32>
    %13 = arith.negf %12 : vector<8x128xf32>
    %14 = math.exp %13 : vector<8x128xf32>
    %cst_9 = arith.constant 1.000000e+00 : f32
    %15 = vector.broadcast %cst_9 : f32 to vector<8x128xf32>
    %16 = arith.addf %15, %14 : vector<8x128xf32>
    %17 = arith.divf %15, %16 : vector<8x128xf32>
    %18 = vector.extract_strided_slice %11 {offsets = [0, 128], sizes = [8, 128], strides = [1, 1]} : vector<8x512xf32> to vector<8x128xf32>
    %19 = arith.negf %18 : vector<8x128xf32>
    %20 = math.exp %19 : vector<8x128xf32>
    %cst_10 = arith.constant 1.000000e+00 : f32
    %21 = vector.broadcast %cst_10 : f32 to vector<8x128xf32>
    %22 = arith.addf %21, %20 : vector<8x128xf32>
    %23 = arith.divf %21, %22 : vector<8x128xf32>
    %24 = vector.extract_strided_slice %11 {offsets = [0, 256], sizes = [8, 128], strides = [1, 1]} : vector<8x512xf32> to vector<8x128xf32>
    %25 = math.tanh %24 : vector<8x128xf32>
    %26 = vector.extract_strided_slice %11 {offsets = [0, 384], sizes = [8, 128], strides = [1, 1]} : vector<8x512xf32> to vector<8x128xf32>
    %27 = arith.negf %26 : vector<8x128xf32>
    %28 = math.exp %27 : vector<8x128xf32>
    %cst_11 = arith.constant 1.000000e+00 : f32
    %29 = vector.broadcast %cst_11 : f32 to vector<8x128xf32>
    %30 = arith.addf %29, %28 : vector<8x128xf32>
    %31 = arith.divf %29, %30 : vector<8x128xf32>
    %32 = arith.mulf %23, %4 : vector<8x128xf32>
    %33 = arith.mulf %17, %25 : vector<8x128xf32>
    %34 = arith.addf %32, %33 : vector<8x128xf32>
    %35 = math.tanh %34 : vector<8x128xf32>
    %36 = arith.mulf %31, %35 : vector<8x128xf32>
    %37 = arith.truncf %36 : vector<8x128xf32> to vector<8x128xbf16>
    %38 = arith.index_cast %c0_i32_4 : i32 to index
    %c0_12 = arith.constant 0 : index
    %c0_13 = arith.constant 0 : index
    %39 = vector.load %arg5[%38, %c0_12, %c0_13] : memref<8x8x128xbf16, #tpu.memory_space<vmem>>, vector<1x8x128xbf16>
    %40 = vector.shape_cast %39 : vector<1x8x128xbf16> to vector<8x128xbf16>
    %41 = vector.shape_cast %37 : vector<8x128xbf16> to vector<1x8x128xbf16>
    tpu.vector_store %arg5[%38, %c0_12, %c0_13], %41 {strides = array<i32>} : memref<8x8x128xbf16, #tpu.memory_space<vmem>>, vector<1x8x128xbf16>,
    %c1_i32 = arith.constant 1 : i32
    %42 = arith.index_cast %c1_i32 : i32 to index
    %c0_14 = arith.constant 0 : index
    %c0_15 = arith.constant 0 : index
    %43 = vector.load %arg1[%42, %c0_14, %c0_15] : memref<8x8x512xf32, #tpu.memory_space<vmem>>, vector<1x8x512xf32>
    %44 = vector.shape_cast %43 : vector<1x8x512xf32> to vector<8x512xf32>
    %45 = arith.truncf %36 : vector<8x128xf32> to vector<8x128xbf16>
    %c0_16 = arith.constant 0 : index
    %c0_17 = arith.constant 0 : index
    %46 = vector.load %arg2[%c0_16, %c0_17] : memref<128x512xbf16, #tpu.memory_space<vmem>>, vector<128x512xbf16>
    %cst_18 = arith.constant dense<0.000000e+00> : vector<8x512xf32>
    %47 = tpu.matmul %45, %46, %cst_18 {dimension_numbers = #tpu.dot_dimension_numbers<[1], [0], [0], [1], [0, 0, 1, 1], [], []>} : vector<8x128xbf16>, vector<128x512xbf16>, vector<8x512xf32> -> vector<8x512xf32>
    %48 = arith.addf %44, %47 : vector<8x512xf32>
    %49 = vector.extract_strided_slice %48 {offsets = [0, 0], sizes = [8, 128], strides = [1, 1]} : vector<8x512xf32> to vector<8x128xf32>
    %50 = arith.negf %49 : vector<8x128xf32>
    %51 = math.exp %50 : vector<8x128xf32>
    %cst_19 = arith.constant 1.000000e+00 : f32
    %52 = vector.broadcast %cst_19 : f32 to vector<8x128xf32>
    %53 = arith.addf %52, %51 : vector<8x128xf32>
    %54 = arith.divf %52, %53 : vector<8x128xf32>
    %55 = vector.extract_strided_slice %48 {offsets = [0, 128], sizes = [8, 128], strides = [1, 1]} : vector<8x512xf32> to vector<8x128xf32>
    %56 = arith.negf %55 : vector<8x128xf32>
    %57 = math.exp %56 : vector<8x128xf32>
    %cst_20 = arith.constant 1.000000e+00 : f32
    %58 = vector.broadcast %cst_20 : f32 to vector<8x128xf32>
    %59 = arith.addf %58, %57 : vector<8x128xf32>
    %60 = arith.divf %58, %59 : vector<8x128xf32>
    %61 = vector.extract_strided_slice %48 {offsets = [0, 256], sizes = [8, 128], strides = [1, 1]} : vector<8x512xf32> to vector<8x128xf32>
    %62 = math.tanh %61 : vector<8x128xf32>
    %63 = vector.extract_strided_slice %48 {offsets = [0, 384], sizes = [8, 128], strides = [1, 1]} : vector<8x512xf32> to vector<8x128xf32>
    %64 = arith.negf %63 : vector<8x128xf32>
    %65 = math.exp %64 : vector<8x128xf32>
    %cst_21 = arith.constant 1.000000e+00 : f32
    %66 = vector.broadcast %cst_21 : f32 to vector<8x128xf32>
    %67 = arith.addf %66, %65 : vector<8x128xf32>
    %68 = arith.divf %66, %67 : vector<8x128xf32>
    %69 = arith.mulf %60, %34 : vector<8x128xf32>
    %70 = arith.mulf %54, %62 : vector<8x128xf32>
    %71 = arith.addf %69, %70 : vector<8x128xf32>
    %72 = math.tanh %71 : vector<8x128xf32>
    %73 = arith.mulf %68, %72 : vector<8x128xf32>
    %74 = arith.truncf %73 : vector<8x128xf32> to vector<8x128xbf16>
    %75 = arith.index_cast %c1_i32 : i32 to index
    %c0_22 = arith.constant 0 : index
    %c0_23 = arith.constant 0 : index
    %76 = vector.load %arg5[%75, %c0_22, %c0_23] : memref<8x8x128xbf16, #tpu.memory_space<vmem>>, vector<1x8x128xbf16>
    %77 = vector.shape_cast %76 : vector<1x8x128xbf16> to vector<8x128xbf16>
    %78 = vector.shape_cast %74 : vector<8x128xbf16> to vector<1x8x128xbf16>
    tpu.vector_store %arg5[%75, %c0_22, %c0_23], %78 {strides = array<i32>} : memref<8x8x128xbf16, #tpu.memory_space<vmem>>, vector<1x8x128xbf16>,
    %c2_i32 = arith.constant 2 : i32
    %79 = arith.index_cast %c2_i32 : i32 to index
    %c0_24 = arith.constant 0 : index
    %c0_25 = arith.constant 0 : index
    %80 = vector.load %arg1[%79, %c0_24, %c0_25] : memref<8x8x512xf32, #tpu.memory_space<vmem>>, vector<1x8x512xf32>
    %81 = vector.shape_cast %80 : vector<1x8x512xf32> to vector<8x512xf32>
    %82 = arith.truncf %73 : vector<8x128xf32> to vector<8x128xbf16>
    %c0_26 = arith.constant 0 : index
    %c0_27 = arith.constant 0 : index
    %83 = vector.load %arg2[%c0_26, %c0_27] : memref<128x512xbf16, #tpu.memory_space<vmem>>, vector<128x512xbf16>
    %cst_28 = arith.constant dense<0.000000e+00> : vector<8x512xf32>
    %84 = tpu.matmul %82, %83, %cst_28 {dimension_numbers = #tpu.dot_dimension_numbers<[1], [0], [0], [1], [0, 0, 1, 1], [], []>} : vector<8x128xbf16>, vector<128x512xbf16>, vector<8x512xf32> -> vector<8x512xf32>
    %85 = arith.addf %81, %84 : vector<8x512xf32>
    %86 = vector.extract_strided_slice %85 {offsets = [0, 0], sizes = [8, 128], strides = [1, 1]} : vector<8x512xf32> to vector<8x128xf32>
    %87 = arith.negf %86 : vector<8x128xf32>
    %88 = math.exp %87 : vector<8x128xf32>
    %cst_29 = arith.constant 1.000000e+00 : f32
    %89 = vector.broadcast %cst_29 : f32 to vector<8x128xf32>
    %90 = arith.addf %89, %88 : vector<8x128xf32>
    %91 = arith.divf %89, %90 : vector<8x128xf32>
    %92 = vector.extract_strided_slice %85 {offsets = [0, 128], sizes = [8, 128], strides = [1, 1]} : vector<8x512xf32> to vector<8x128xf32>
    %93 = arith.negf %92 : vector<8x128xf32>
    %94 = math.exp %93 : vector<8x128xf32>
    %cst_30 = arith.constant 1.000000e+00 : f32
    %95 = vector.broadcast %cst_30 : f32 to vector<8x128xf32>
    %96 = arith.addf %95, %94 : vector<8x128xf32>
    %97 = arith.divf %95, %96 : vector<8x128xf32>
    %98 = vector.extract_strided_slice %85 {offsets = [0, 256], sizes = [8, 128], strides = [1, 1]} : vector<8x512xf32> to vector<8x128xf32>
    %99 = math.tanh %98 : vector<8x128xf32>
    %100 = vector.extract_strided_slice %85 {offsets = [0, 384], sizes = [8, 128], strides = [1, 1]} : vector<8x512xf32> to vector<8x128xf32>
    %101 = arith.negf %100 : vector<8x128xf32>
    %102 = math.exp %101 : vector<8x128xf32>
    %cst_31 = arith.constant 1.000000e+00 : f32
    %103 = vector.broadcast %cst_31 : f32 to vector<8x128xf32>
    %104 = arith.addf %103, %102 : vector<8x128xf32>
    %105 = arith.divf %103, %104 : vector<8x128xf32>
    %106 = arith.mulf %97, %71 : vector<8x128xf32>
    %107 = arith.mulf %91, %99 : vector<8x128xf32>
    %108 = arith.addf %106, %107 : vector<8x128xf32>
    %109 = math.tanh %108 : vector<8x128xf32>
    %110 = arith.mulf %105, %109 : vector<8x128xf32>
    %111 = arith.truncf %110 : vector<8x128xf32> to vector<8x128xbf16>
    %112 = arith.index_cast %c2_i32 : i32 to index
    %c0_32 = arith.constant 0 : index
    %c0_33 = arith.constant 0 : index
    %113 = vector.load %arg5[%112, %c0_32, %c0_33] : memref<8x8x128xbf16, #tpu.memory_space<vmem>>, vector<1x8x128xbf16>
    %114 = vector.shape_cast %113 : vector<1x8x128xbf16> to vector<8x128xbf16>
    %115 = vector.shape_cast %111 : vector<8x128xbf16> to vector<1x8x128xbf16>
    tpu.vector_store %arg5[%112, %c0_32, %c0_33], %115 {strides = array<i32>} : memref<8x8x128xbf16, #tpu.memory_space<vmem>>, vector<1x8x128xbf16>,
    %c3_i32 = arith.constant 3 : i32
    %116 = arith.index_cast %c3_i32 : i32 to index
    %c0_34 = arith.constant 0 : index
    %c0_35 = arith.constant 0 : index
    %117 = vector.load %arg1[%116, %c0_34, %c0_35] : memref<8x8x512xf32, #tpu.memory_space<vmem>>, vector<1x8x512xf32>
    %118 = vector.shape_cast %117 : vector<1x8x512xf32> to vector<8x512xf32>
    %119 = arith.truncf %110 : vector<8x128xf32> to vector<8x128xbf16>
    %c0_36 = arith.constant 0 : index
    %c0_37 = arith.constant 0 : index
    %120 = vector.load %arg2[%c0_36, %c0_37] : memref<128x512xbf16, #tpu.memory_space<vmem>>, vector<128x512xbf16>
    %cst_38 = arith.constant dense<0.000000e+00> : vector<8x512xf32>
    %121 = tpu.matmul %119, %120, %cst_38 {dimension_numbers = #tpu.dot_dimension_numbers<[1], [0], [0], [1], [0, 0, 1, 1], [], []>} : vector<8x128xbf16>, vector<128x512xbf16>, vector<8x512xf32> -> vector<8x512xf32>
    %122 = arith.addf %118, %121 : vector<8x512xf32>
    %123 = vector.extract_strided_slice %122 {offsets = [0, 0], sizes = [8, 128], strides = [1, 1]} : vector<8x512xf32> to vector<8x128xf32>
    %124 = arith.negf %123 : vector<8x128xf32>
    %125 = math.exp %124 : vector<8x128xf32>
    %cst_39 = arith.constant 1.000000e+00 : f32
    %126 = vector.broadcast %cst_39 : f32 to vector<8x128xf32>
    %127 = arith.addf %126, %125 : vector<8x128xf32>
    %128 = arith.divf %126, %127 : vector<8x128xf32>
    %129 = vector.extract_strided_slice %122 {offsets = [0, 128], sizes = [8, 128], strides = [1, 1]} : vector<8x512xf32> to vector<8x128xf32>
    %130 = arith.negf %129 : vector<8x128xf32>
    %131 = math.exp %130 : vector<8x128xf32>
    %cst_40 = arith.constant 1.000000e+00 : f32
    %132 = vector.broadcast %cst_40 : f32 to vector<8x128xf32>
    %133 = arith.addf %132, %131 : vector<8x128xf32>
    %134 = arith.divf %132, %133 : vector<8x128xf32>
    %135 = vector.extract_strided_slice %122 {offsets = [0, 256], sizes = [8, 128], strides = [1, 1]} : vector<8x512xf32> to vector<8x128xf32>
    %136 = math.tanh %135 : vector<8x128xf32>
    %137 = vector.extract_strided_slice %122 {offsets = [0, 384], sizes = [8, 128], strides = [1, 1]} : vector<8x512xf32> to vector<8x128xf32>
    %138 = arith.negf %137 : vector<8x128xf32>
    %139 = math.exp %138 : vector<8x128xf32>
    %cst_41 = arith.constant 1.000000e+00 : f32
    %140 = vector.broadcast %cst_41 : f32 to vector<8x128xf32>
    %141 = arith.addf %140, %139 : vector<8x128xf32>
    %142 = arith.divf %140, %141 : vector<8x128xf32>
    %143 = arith.mulf %134, %108 : vector<8x128xf32>
    %144 = arith.mulf %128, %136 : vector<8x128xf32>
    %145 = arith.addf %143, %144 : vector<8x128xf32>
    %146 = math.tanh %145 : vector<8x128xf32>
    %147 = arith.mulf %142, %146 : vector<8x128xf32>
    %148 = arith.truncf %147 : vector<8x128xf32> to vector<8x128xbf16>
    %149 = arith.index_cast %c3_i32 : i32 to index
    %c0_42 = arith.constant 0 : index
    %c0_43 = arith.constant 0 : index
    %150 = vector.load %arg5[%149, %c0_42, %c0_43] : memref<8x8x128xbf16, #tpu.memory_space<vmem>>, vector<1x8x128xbf16>
    %151 = vector.shape_cast %150 : vector<1x8x128xbf16> to vector<8x128xbf16>
    %152 = vector.shape_cast %148 : vector<8x128xbf16> to vector<1x8x128xbf16>
    tpu.vector_store %arg5[%149, %c0_42, %c0_43], %152 {strides = array<i32>} : memref<8x8x128xbf16, #tpu.memory_space<vmem>>, vector<1x8x128xbf16>,
    %c4_i32 = arith.constant 4 : i32
    %153 = arith.index_cast %c4_i32 : i32 to index
    %c0_44 = arith.constant 0 : index
    %c0_45 = arith.constant 0 : index
    %154 = vector.load %arg1[%153, %c0_44, %c0_45] : memref<8x8x512xf32, #tpu.memory_space<vmem>>, vector<1x8x512xf32>
    %155 = vector.shape_cast %154 : vector<1x8x512xf32> to vector<8x512xf32>
    %156 = arith.truncf %147 : vector<8x128xf32> to vector<8x128xbf16>
    %c0_46 = arith.constant 0 : index
    %c0_47 = arith.constant 0 : index
    %157 = vector.load %arg2[%c0_46, %c0_47] : memref<128x512xbf16, #tpu.memory_space<vmem>>, vector<128x512xbf16>
    %cst_48 = arith.constant dense<0.000000e+00> : vector<8x512xf32>
    %158 = tpu.matmul %156, %157, %cst_48 {dimension_numbers = #tpu.dot_dimension_numbers<[1], [0], [0], [1], [0, 0, 1, 1], [], []>} : vector<8x128xbf16>, vector<128x512xbf16>, vector<8x512xf32> -> vector<8x512xf32>
    %159 = arith.addf %155, %158 : vector<8x512xf32>
    %160 = vector.extract_strided_slice %159 {offsets = [0, 0], sizes = [8, 128], strides = [1, 1]} : vector<8x512xf32> to vector<8x128xf32>
    %161 = arith.negf %160 : vector<8x128xf32>
    %162 = math.exp %161 : vector<8x128xf32>
    %cst_49 = arith.constant 1.000000e+00 : f32
    %163 = vector.broadcast %cst_49 : f32 to vector<8x128xf32>
    %164 = arith.addf %163, %162 : vector<8x128xf32>
    %165 = arith.divf %163, %164 : vector<8x128xf32>
    %166 = vector.extract_strided_slice %159 {offsets = [0, 128], sizes = [8, 128], strides = [1, 1]} : vector<8x512xf32> to vector<8x128xf32>
    %167 = arith.negf %166 : vector<8x128xf32>
    %168 = math.exp %167 : vector<8x128xf32>
    %cst_50 = arith.constant 1.000000e+00 : f32
    %169 = vector.broadcast %cst_50 : f32 to vector<8x128xf32>
    %170 = arith.addf %169, %168 : vector<8x128xf32>
    %171 = arith.divf %169, %170 : vector<8x128xf32>
    %172 = vector.extract_strided_slice %159 {offsets = [0, 256], sizes = [8, 128], strides = [1, 1]} : vector<8x512xf32> to vector<8x128xf32>
    %173 = math.tanh %172 : vector<8x128xf32>
    %174 = vector.extract_strided_slice %159 {offsets = [0, 384], sizes = [8, 128], strides = [1, 1]} : vector<8x512xf32> to vector<8x128xf32>
    %175 = arith.negf %174 : vector<8x128xf32>
    %176 = math.exp %175 : vector<8x128xf32>
    %cst_51 = arith.constant 1.000000e+00 : f32
    %177 = vector.broadcast %cst_51 : f32 to vector<8x128xf32>
    %178 = arith.addf %177, %176 : vector<8x128xf32>
    %179 = arith.divf %177, %178 : vector<8x128xf32>
    %180 = arith.mulf %171, %145 : vector<8x128xf32>
    %181 = arith.mulf %165, %173 : vector<8x128xf32>
    %182 = arith.addf %180, %181 : vector<8x128xf32>
    %183 = math.tanh %182 : vector<8x128xf32>
    %184 = arith.mulf %179, %183 : vector<8x128xf32>
    %185 = arith.truncf %184 : vector<8x128xf32> to vector<8x128xbf16>
    %186 = arith.index_cast %c4_i32 : i32 to index
    %c0_52 = arith.constant 0 : index
    %c0_53 = arith.constant 0 : index
    %187 = vector.load %arg5[%186, %c0_52, %c0_53] : memref<8x8x128xbf16, #tpu.memory_space<vmem>>, vector<1x8x128xbf16>
    %188 = vector.shape_cast %187 : vector<1x8x128xbf16> to vector<8x128xbf16>
    %189 = vector.shape_cast %185 : vector<8x128xbf16> to vector<1x8x128xbf16>
    tpu.vector_store %arg5[%186, %c0_52, %c0_53], %189 {strides = array<i32>} : memref<8x8x128xbf16, #tpu.memory_space<vmem>>, vector<1x8x128xbf16>,
    %c5_i32 = arith.constant 5 : i32
    %190 = arith.index_cast %c5_i32 : i32 to index
    %c0_54 = arith.constant 0 : index
    %c0_55 = arith.constant 0 : index
    %191 = vector.load %arg1[%190, %c0_54, %c0_55] : memref<8x8x512xf32, #tpu.memory_space<vmem>>, vector<1x8x512xf32>
    %192 = vector.shape_cast %191 : vector<1x8x512xf32> to vector<8x512xf32>
    %193 = arith.truncf %184 : vector<8x128xf32> to vector<8x128xbf16>
    %c0_56 = arith.constant 0 : index
    %c0_57 = arith.constant 0 : index
    %194 = vector.load %arg2[%c0_56, %c0_57] : memref<128x512xbf16, #tpu.memory_space<vmem>>, vector<128x512xbf16>
    %cst_58 = arith.constant dense<0.000000e+00> : vector<8x512xf32>
    %195 = tpu.matmul %193, %194, %cst_58 {dimension_numbers = #tpu.dot_dimension_numbers<[1], [0], [0], [1], [0, 0, 1, 1], [], []>} : vector<8x128xbf16>, vector<128x512xbf16>, vector<8x512xf32> -> vector<8x512xf32>
    %196 = arith.addf %192, %195 : vector<8x512xf32>
    %197 = vector.extract_strided_slice %196 {offsets = [0, 0], sizes = [8, 128], strides = [1, 1]} : vector<8x512xf32> to vector<8x128xf32>
    %198 = arith.negf %197 : vector<8x128xf32>
    %199 = math.exp %198 : vector<8x128xf32>
    %cst_59 = arith.constant 1.000000e+00 : f32
    %200 = vector.broadcast %cst_59 : f32 to vector<8x128xf32>
    %201 = arith.addf %200, %199 : vector<8x128xf32>
    %202 = arith.divf %200, %201 : vector<8x128xf32>
    %203 = vector.extract_strided_slice %196 {offsets = [0, 128], sizes = [8, 128], strides = [1, 1]} : vector<8x512xf32> to vector<8x128xf32>
    %204 = arith.negf %203 : vector<8x128xf32>
    %205 = math.exp %204 : vector<8x128xf32>
    %cst_60 = arith.constant 1.000000e+00 : f32
    %206 = vector.broadcast %cst_60 : f32 to vector<8x128xf32>
    %207 = arith.addf %206, %205 : vector<8x128xf32>
    %208 = arith.divf %206, %207 : vector<8x128xf32>
    %209 = vector.extract_strided_slice %196 {offsets = [0, 256], sizes = [8, 128], strides = [1, 1]} : vector<8x512xf32> to vector<8x128xf32>
    %210 = math.tanh %209 : vector<8x128xf32>
    %211 = vector.extract_strided_slice %196 {offsets = [0, 384], sizes = [8, 128], strides = [1, 1]} : vector<8x512xf32> to vector<8x128xf32>
    %212 = arith.negf %211 : vector<8x128xf32>
    %213 = math.exp %212 : vector<8x128xf32>
    %cst_61 = arith.constant 1.000000e+00 : f32
    %214 = vector.broadcast %cst_61 : f32 to vector<8x128xf32>
    %215 = arith.addf %214, %213 : vector<8x128xf32>
    %216 = arith.divf %214, %215 : vector<8x128xf32>
    %217 = arith.mulf %208, %182 : vector<8x128xf32>
    %218 = arith.mulf %202, %210 : vector<8x128xf32>
    %219 = arith.addf %217, %218 : vector<8x128xf32>
    %220 = math.tanh %219 : vector<8x128xf32>
    %221 = arith.mulf %216, %220 : vector<8x128xf32>
    %222 = arith.truncf %221 : vector<8x128xf32> to vector<8x128xbf16>
    %223 = arith.index_cast %c5_i32 : i32 to index
    %c0_62 = arith.constant 0 : index
    %c0_63 = arith.constant 0 : index
    %224 = vector.load %arg5[%223, %c0_62, %c0_63] : memref<8x8x128xbf16, #tpu.memory_space<vmem>>, vector<1x8x128xbf16>
    %225 = vector.shape_cast %224 : vector<1x8x128xbf16> to vector<8x128xbf16>
    %226 = vector.shape_cast %222 : vector<8x128xbf16> to vector<1x8x128xbf16>
    tpu.vector_store %arg5[%223, %c0_62, %c0_63], %226 {strides = array<i32>} : memref<8x8x128xbf16, #tpu.memory_space<vmem>>, vector<1x8x128xbf16>,
    %c6_i32 = arith.constant 6 : i32
    %227 = arith.index_cast %c6_i32 : i32 to index
    %c0_64 = arith.constant 0 : index
    %c0_65 = arith.constant 0 : index
    %228 = vector.load %arg1[%227, %c0_64, %c0_65] : memref<8x8x512xf32, #tpu.memory_space<vmem>>, vector<1x8x512xf32>
    %229 = vector.shape_cast %228 : vector<1x8x512xf32> to vector<8x512xf32>
    %230 = arith.truncf %221 : vector<8x128xf32> to vector<8x128xbf16>
    %c0_66 = arith.constant 0 : index
    %c0_67 = arith.constant 0 : index
    %231 = vector.load %arg2[%c0_66, %c0_67] : memref<128x512xbf16, #tpu.memory_space<vmem>>, vector<128x512xbf16>
    %cst_68 = arith.constant dense<0.000000e+00> : vector<8x512xf32>
    %232 = tpu.matmul %230, %231, %cst_68 {dimension_numbers = #tpu.dot_dimension_numbers<[1], [0], [0], [1], [0, 0, 1, 1], [], []>} : vector<8x128xbf16>, vector<128x512xbf16>, vector<8x512xf32> -> vector<8x512xf32>
    %233 = arith.addf %229, %232 : vector<8x512xf32>
    %234 = vector.extract_strided_slice %233 {offsets = [0, 0], sizes = [8, 128], strides = [1, 1]} : vector<8x512xf32> to vector<8x128xf32>
    %235 = arith.negf %234 : vector<8x128xf32>
    %236 = math.exp %235 : vector<8x128xf32>
    %cst_69 = arith.constant 1.000000e+00 : f32
    %237 = vector.broadcast %cst_69 : f32 to vector<8x128xf32>
    %238 = arith.addf %237, %236 : vector<8x128xf32>
    %239 = arith.divf %237, %238 : vector<8x128xf32>
    %240 = vector.extract_strided_slice %233 {offsets = [0, 128], sizes = [8, 128], strides = [1, 1]} : vector<8x512xf32> to vector<8x128xf32>
    %241 = arith.negf %240 : vector<8x128xf32>
    %242 = math.exp %241 : vector<8x128xf32>
    %cst_70 = arith.constant 1.000000e+00 : f32
    %243 = vector.broadcast %cst_70 : f32 to vector<8x128xf32>
    %244 = arith.addf %243, %242 : vector<8x128xf32>
    %245 = arith.divf %243, %244 : vector<8x128xf32>
    %246 = vector.extract_strided_slice %233 {offsets = [0, 256], sizes = [8, 128], strides = [1, 1]} : vector<8x512xf32> to vector<8x128xf32>
    %247 = math.tanh %246 : vector<8x128xf32>
    %248 = vector.extract_strided_slice %233 {offsets = [0, 384], sizes = [8, 128], strides = [1, 1]} : vector<8x512xf32> to vector<8x128xf32>
    %249 = arith.negf %248 : vector<8x128xf32>
    %250 = math.exp %249 : vector<8x128xf32>
    %cst_71 = arith.constant 1.000000e+00 : f32
    %251 = vector.broadcast %cst_71 : f32 to vector<8x128xf32>
    %252 = arith.addf %251, %250 : vector<8x128xf32>
    %253 = arith.divf %251, %252 : vector<8x128xf32>
    %254 = arith.mulf %245, %219 : vector<8x128xf32>
    %255 = arith.mulf %239, %247 : vector<8x128xf32>
    %256 = arith.addf %254, %255 : vector<8x128xf32>
    %257 = math.tanh %256 : vector<8x128xf32>
    %258 = arith.mulf %253, %257 : vector<8x128xf32>
    %259 = arith.truncf %258 : vector<8x128xf32> to vector<8x128xbf16>
    %260 = arith.index_cast %c6_i32 : i32 to index
    %c0_72 = arith.constant 0 : index
    %c0_73 = arith.constant 0 : index
    %261 = vector.load %arg5[%260, %c0_72, %c0_73] : memref<8x8x128xbf16, #tpu.memory_space<vmem>>, vector<1x8x128xbf16>
    %262 = vector.shape_cast %261 : vector<1x8x128xbf16> to vector<8x128xbf16>
    %263 = vector.shape_cast %259 : vector<8x128xbf16> to vector<1x8x128xbf16>
    tpu.vector_store %arg5[%260, %c0_72, %c0_73], %263 {strides = array<i32>} : memref<8x8x128xbf16, #tpu.memory_space<vmem>>, vector<1x8x128xbf16>,
    %c7_i32 = arith.constant 7 : i32
    %264 = arith.index_cast %c7_i32 : i32 to index
    %c0_74 = arith.constant 0 : index
    %c0_75 = arith.constant 0 : index
    %265 = vector.load %arg1[%264, %c0_74, %c0_75] : memref<8x8x512xf32, #tpu.memory_space<vmem>>, vector<1x8x512xf32>
    %266 = vector.shape_cast %265 : vector<1x8x512xf32> to vector<8x512xf32>
    %267 = arith.truncf %258 : vector<8x128xf32> to vector<8x128xbf16>
    %c0_76 = arith.constant 0 : index
    %c0_77 = arith.constant 0 : index
    %268 = vector.load %arg2[%c0_76, %c0_77] : memref<128x512xbf16, #tpu.memory_space<vmem>>, vector<128x512xbf16>
    %cst_78 = arith.constant dense<0.000000e+00> : vector<8x512xf32>
    %269 = tpu.matmul %267, %268, %cst_78 {dimension_numbers = #tpu.dot_dimension_numbers<[1], [0], [0], [1], [0, 0, 1, 1], [], []>} : vector<8x128xbf16>, vector<128x512xbf16>, vector<8x512xf32> -> vector<8x512xf32>
    %270 = arith.addf %266, %269 : vector<8x512xf32>
    %271 = vector.extract_strided_slice %270 {offsets = [0, 0], sizes = [8, 128], strides = [1, 1]} : vector<8x512xf32> to vector<8x128xf32>
    %272 = arith.negf %271 : vector<8x128xf32>
    %273 = math.exp %272 : vector<8x128xf32>
    %cst_79 = arith.constant 1.000000e+00 : f32
    %274 = vector.broadcast %cst_79 : f32 to vector<8x128xf32>
    %275 = arith.addf %274, %273 : vector<8x128xf32>
    %276 = arith.divf %274, %275 : vector<8x128xf32>
    %277 = vector.extract_strided_slice %270 {offsets = [0, 128], sizes = [8, 128], strides = [1, 1]} : vector<8x512xf32> to vector<8x128xf32>
    %278 = arith.negf %277 : vector<8x128xf32>
    %279 = math.exp %278 : vector<8x128xf32>
    %cst_80 = arith.constant 1.000000e+00 : f32
    %280 = vector.broadcast %cst_80 : f32 to vector<8x128xf32>
    %281 = arith.addf %280, %279 : vector<8x128xf32>
    %282 = arith.divf %280, %281 : vector<8x128xf32>
    %283 = vector.extract_strided_slice %270 {offsets = [0, 256], sizes = [8, 128], strides = [1, 1]} : vector<8x512xf32> to vector<8x128xf32>
    %284 = math.tanh %283 : vector<8x128xf32>
    %285 = vector.extract_strided_slice %270 {offsets = [0, 384], sizes = [8, 128], strides = [1, 1]} : vector<8x512xf32> to vector<8x128xf32>
    %286 = arith.negf %285 : vector<8x128xf32>
    %287 = math.exp %286 : vector<8x128xf32>
    %cst_81 = arith.constant 1.000000e+00 : f32
    %288 = vector.broadcast %cst_81 : f32 to vector<8x128xf32>
    %289 = arith.addf %288, %287 : vector<8x128xf32>
    %290 = arith.divf %288, %289 : vector<8x128xf32>
    %291 = arith.mulf %282, %256 : vector<8x128xf32>
    %292 = arith.mulf %276, %284 : vector<8x128xf32>
    %293 = arith.addf %291, %292 : vector<8x128xf32>
    %294 = math.tanh %293 : vector<8x128xf32>
    %295 = arith.mulf %290, %294 : vector<8x128xf32>
    %296 = arith.truncf %295 : vector<8x128xf32> to vector<8x128xbf16>
    %297 = arith.index_cast %c7_i32 : i32 to index
    %c0_82 = arith.constant 0 : index
    %c0_83 = arith.constant 0 : index
    %298 = vector.load %arg5[%297, %c0_82, %c0_83] : memref<8x8x128xbf16, #tpu.memory_space<vmem>>, vector<1x8x128xbf16>
    %299 = vector.shape_cast %298 : vector<1x8x128xbf16> to vector<8x128xbf16>
    %300 = vector.shape_cast %296 : vector<8x128xbf16> to vector<1x8x128xbf16>
    tpu.vector_store %arg5[%297, %c0_82, %c0_83], %300 {strides = array<i32>} : memref<8x8x128xbf16, #tpu.memory_space<vmem>>, vector<1x8x128xbf16>,
    %c8_i32 = arith.constant 8 : i32
    %c0_84 = arith.constant 0 : index
    %c0_85 = arith.constant 0 : index
    %301 = vector.load %arg8[%c0_84, %c0_85] : memref<8x128xf32, #tpu.memory_space<vmem>>, vector<8x128xf32>
    tpu.vector_store %arg8[%c0_84, %c0_85], %295 {strides = array<i32>} : memref<8x128xf32, #tpu.memory_space<vmem>>, vector<8x128xf32>,
    %c0_86 = arith.constant 0 : index
    %c0_87 = arith.constant 0 : index
    %302 = vector.load %arg9[%c0_86, %c0_87] : memref<8x128xf32, #tpu.memory_space<vmem>>, vector<8x128xf32>
    tpu.vector_store %arg9[%c0_86, %c0_87], %293 {strides = array<i32>} : memref<8x128xf32, #tpu.memory_space<vmem>>, vector<8x128xf32>,
    %c0_88 = arith.constant 0 : index
    %c0_89 = arith.constant 0 : index
    %303 = vector.load %arg6[%c0_88, %c0_89] : memref<8x128xf32, #tpu.memory_space<vmem>>, vector<8x128xf32>
    tpu.vector_store %arg6[%c0_88, %c0_89], %295 {strides = array<i32>} : memref<8x128xf32, #tpu.memory_space<vmem>>, vector<8x128xf32>,
    %c0_90 = arith.constant 0 : index
    %c0_91 = arith.constant 0 : index
    %304 = vector.load %arg7[%c0_90, %c0_91] : memref<8x128xf32, #tpu.memory_space<vmem>>, vector<8x128xf32>
    tpu.vector_store %arg7[%c0_90, %c0_91], %293 {strides = array<i32>} : memref<8x128xf32, #tpu.memory_space<vmem>>, vector<8x128xf32>,
    return
  }
  func.func @transform_0(%arg0: i32) -> (i32, i32, i32) {
    %c0_i32 = arith.constant 0 : i32
    %c0_i32_0 = arith.constant 0 : i32
    %c0_i32_1 = arith.constant 0 : i32
    return %arg0, %c0_i32, %c0_i32_0 : i32, i32, i32
  }
  func.func @transform_1(%arg0: i32) -> (i32, i32) {
    %c0_i32 = arith.constant 0 : i32
    %c0_i32_0 = arith.constant 0 : i32
    %c0_i32_1 = arith.constant 0 : i32
    return %c0_i32, %c0_i32_0 : i32, i32
  }
  func.func @transform_2(%arg0: i32) -> (i32, i32) {
    %c0_i32 = arith.constant 0 : i32
    %c0_i32_0 = arith.constant 0 : i32
    %c0_i32_1 = arith.constant 0 : i32
    return %c0_i32, %c0_i32_0 : i32, i32
  }
  func.func @transform_3(%arg0: i32) -> (i32, i32) {
    %c0_i32 = arith.constant 0 : i32
    %c0_i32_0 = arith.constant 0 : i32
    %c0_i32_1 = arith.constant 0 : i32
    return %c0_i32, %c0_i32_0 : i32, i32
  }
  func.func @transform_4(%arg0: i32) -> (i32, i32, i32) {
    %c0_i32 = arith.constant 0 : i32
    %c0_i32_0 = arith.constant 0 : i32
    %c0_i32_1 = arith.constant 0 : i32
    return %arg0, %c0_i32, %c0_i32_0 : i32, i32, i32
  }
  func.func @transform_5(%arg0: i32) -> (i32, i32) {
    %c0_i32 = arith.constant 0 : i32
    %c0_i32_0 = arith.constant 0 : i32
    %c0_i32_1 = arith.constant 0 : i32
    return %c0_i32, %c0_i32_0 : i32, i32
  }
  func.func @transform_6(%arg0: i32) -> (i32, i32) {
    %c0_i32 = arith.constant 0 : i32
    %c0_i32_0 = arith.constant 0 : i32
    %c0_i32_1 = arith.constant 0 : i32
    return %c0_i32, %c0_i32_0 : i32, i32
  }
}

</mosaic_0001>

<llo_original>
// kernel: lstm_lm_forward.7
$region0: #{lstm_lm_forward.7}
  #allocation0 [shape = 'u32[]', space=smem, size = 0x4, offset = 0x4, fixed_abs, tag = 'smem constant byte address 0x4 - core index']
  #allocation1 [shape = 'u32[72,128]{1,0:T(1,128)}', space=vmem, size = 0x9000, scoped, tag = 'internal scratch']
  %s0 = inlined_call_operand.vmem [shape: f32[16,256], index: 0, kind: input, shape index: {}]
  %s1 = inlined_call_operand.vmem [shape: f32[16,1], index: 1, kind: input, shape index: {}]
  %s2 = inlined_call_operand.hbm [shape: f32[16,256], index: 2, kind: output, shape index: {}]
  %s3 = sld [smem:[#allocation0]]
  $region18: #{lstm_lm_forward.7} parent=0
    _
  %s5 = ssub.s32 1, %s3
  %s6 = scalar_select 0, %s5, %s3
  $region1: #{lstm_lm_forward.7} parent=0
    #allocation2 [shape = 'u8[16384]{0}', space=vmem, size = 0x4000, scoped, tag = 'output window, operand 0, single buffered']
    #allocation3 [shape = 's32[1]{0}', space=sflag, size = 0x4, scoped, tag = 'scoped memory for lstm_lm_forward.7']
    %7 = vsyncpa [#allocation3], 0
    // Predicated region
    $region2: #{lstm_lm_forward.7} parent=1 // pred_check
      _
    $region3: #{lstm_lm_forward.7} parent=1 // pred_check_branch
      %9 = sbr.rel (0) target = $region5
    $region4: #{lstm_lm_forward.7} parent=1 // pred_region
      _
    $region5: #{lstm_lm_forward.7} parent=1 // pred_fallthru
      _
    // Predicated region
    $region6: #{lstm_lm_forward.7} parent=1 // pred_check
      _
    $region7: #{lstm_lm_forward.7} parent=1 // pred_check_branch
      %11 = sbr.rel (0) target = $region9
    $region8: #{lstm_lm_forward.7} parent=1 // pred_region
      _
    $region9: #{lstm_lm_forward.7} parent=1 // pred_fallthru
      _
    %v12 = vld [vmem:[%s0] sm:$0xff]
    %v13 = vld [vmem:[%s0 + $0x8] sm:$0xff]
    %v14 = vld [vmem:[%s0 + $0x10] sm:$0xff]
    %v15 = vld [vmem:[%s0 + $0x18] sm:$0xff]
    %v16 = vld [vmem:[%s1] sm:$0xff]
    %v17 = vld [vmem:[%s1 + $0x8] sm:$0xff]
    %19 = vset.pattern.permute.xlu0 0
    %20 = vperm.xlu0 %19, %v16
    %v21 = vpop.permute.xlu0 %20
    %24 = vset.pattern.permute.xlu0 0
    %25 = vperm.xlu0 %24, %v17
    %v26 = vpop.permute.xlu0 %25
    %v28 = vsub.f32 %v12, %v21
    %v29 = vsub.f32 %v13, %v21
    %v30 = vsub.f32 %v14, %v26
    %v31 = vsub.f32 %v15, %v26
    %32 = vst [vmem:[#allocation2] sm:$0xff] %v28
    %33 = vst [vmem:[#allocation2 + $0x8] sm:$0xff] %v29
    %34 = vst [vmem:[#allocation2 + $0x10] sm:$0xff] %v30
    %35 = vst [vmem:[#allocation2 + $0x18] sm:$0xff] %v31
    // Predicated region
    $region10: #{lstm_lm_forward.7} parent=1 // pred_check
      _
    $region11: #{lstm_lm_forward.7} parent=1 // pred_check_branch
      %37 = sbr.rel (0) target = $region13
    $region12: #{lstm_lm_forward.7} parent=1 // pred_region
      %39 = vsyncadd [#allocation3], 0
      %s40 = sshll.u32 [#allocation2], 4
      %s41 = int_to_ptr.vmem [resolvable:$true] %s40
      %s42 = sshll.u32 %s2, 4
      %s43 = int_to_ptr.hbm [resolvable:$true] %s42
      %48 = dma.vmem_to_hbm [thread:$0]  %s41, 512, %s43, [#allocation3], 256, 256, 16
    $region13: #{lstm_lm_forward.7} parent=1 // pred_fallthru
      _
    // Predicated region
    $region14: #{lstm_lm_forward.7} parent=1 // pred_check
      _
    $region15: #{lstm_lm_forward.7} parent=1 // pred_check_branch
      %50 = sbr.rel (0) target = $region17
    $region16: #{lstm_lm_forward.7} parent=1 // pred_region
      %52 = dma.done [#allocation3], 512
    $region17: #{lstm_lm_forward.7} parent=1 // pred_fallthru
      _
    %53 = vsyncpa [#allocation3], 1

// kernel: lstm_lm_forward.4
$region0: #{lstm_lm_forward.4}
  #allocation0 [shape = 'u32[]', space=smem, size = 0x4, offset = 0x4, fixed_abs, tag = 'smem constant byte address 0x4 - core index']
  #allocation1 [shape = 'u32[72,128]{1,0:T(1,128)}', space=vmem, size = 0x9000, scoped, tag = 'internal scratch']
  %s0 = inlined_call_operand.vmem [shape: bf16[64,128], index: 0, kind: input, shape index: {}]
  %s1 = inlined_call_operand.vmem [shape: bf16[128,512], index: 1, kind: input, shape index: {}]
  %s2 = inlined_call_operand.vmem [shape: f32[1,512], index: 2, kind: input, shape index: {}]
  %s3 = inlined_call_operand.vmem [shape: f32[64,512], index: 3, kind: output, shape index: {}]
  %s4 = sld [smem:[#allocation0]]
  $region22: #{lstm_lm_forward.4} parent=0
    _
  %s6 = ssub.s32 1, %s4
  %s7 = scalar_select 0, %s6, %s4
  // Predicated region
  $region2: #{lstm_lm_forward.4} parent=0 // pred_check
    _
  $region3: #{lstm_lm_forward.4} parent=0 // pred_check_branch
    %9 = sbr.rel (0) target = $region5
  $region4: #{lstm_lm_forward.4} parent=0 // pred_region
    _
  $region5: #{lstm_lm_forward.4} parent=0 // pred_fallthru
    _
  // Predicated region
  $region6: #{lstm_lm_forward.4} parent=0 // pred_check
    _
  $region7: #{lstm_lm_forward.4} parent=0 // pred_check_branch
    %11 = sbr.rel (0) target = $region9
  $region8: #{lstm_lm_forward.4} parent=0 // pred_region
    _
  $region9: #{lstm_lm_forward.4} parent=0 // pred_fallthru
    _
  // Predicated region
  $region10: #{lstm_lm_forward.4} parent=0 // pred_check
    _
  $region11: #{lstm_lm_forward.4} parent=0 // pred_check_branch
    %13 = sbr.rel (0) target = $region13
  $region12: #{lstm_lm_forward.4} parent=0 // pred_region
    _
  $region13: #{lstm_lm_forward.4} parent=0 // pred_fallthru
    _
  %v14 = vld [vmem:[%s0] sm:$0xf]
  %v15 = vld [vmem:[%s0 + $0x4] sm:$0xf]
  %v16 = vld [vmem:[%s0 + $0x8] sm:$0xf]
  %v17 = vld [vmem:[%s0 + $0xc] sm:$0xf]
  %v18 = vld [vmem:[%s0 + $0x10] sm:$0xf]
  %v19 = vld [vmem:[%s0 + $0x14] sm:$0xf]
  %v20 = vld [vmem:[%s0 + $0x18] sm:$0xf]
  %v21 = vld [vmem:[%s0 + $0x1c] sm:$0xf]
  %v22 = vld [vmem:[%s1] sm:$0xff]
  %v23 = vld [vmem:[%s1 + $0x8] sm:$0xff]
  %v24 = vld [vmem:[%s1 + $0x10] sm:$0xff]
  %v25 = vld [vmem:[%s1 + $0x18] sm:$0xff]
  %v26 = vld [vmem:[%s1 + $0x20] sm:$0xff]
  %v27 = vld [vmem:[%s1 + $0x28] sm:$0xff]
  %v28 = vld [vmem:[%s1 + $0x30] sm:$0xff]
  %v29 = vld [vmem:[%s1 + $0x38] sm:$0xff]
  %v30 = vld [vmem:[%s1 + $0x40] sm:$0xff]
  %v31 = vld [vmem:[%s1 + $0x48] sm:$0xff]
  %v32 = vld [vmem:[%s1 + $0x50] sm:$0xff]
  %v33 = vld [vmem:[%s1 + $0x58] sm:$0xff]
  %v34 = vld [vmem:[%s1 + $0x60] sm:$0xff]
  %v35 = vld [vmem:[%s1 + $0x68] sm:$0xff]
  %v36 = vld [vmem:[%s1 + $0x70] sm:$0xff]
  %v37 = vld [vmem:[%s1 + $0x78] sm:$0xff]
  %v38 = vld [vmem:[%s1 + $0x80] sm:$0xff]
  %v39 = vld [vmem:[%s1 + $0x88] sm:$0xff]
  %v40 = vld [vmem:[%s1 + $0x90] sm:$0xff]
  %v41 = vld [vmem:[%s1 + $0x98] sm:$0xff]
  %v42 = vld [vmem:[%s1 + $0xa0] sm:$0xff]
  %v43 = vld [vmem:[%s1 + $0xa8] sm:$0xff]
  %v44 = vld [vmem:[%s1 + $0xb0] sm:$0xff]
  %v45 = vld [vmem:[%s1 + $0xb8] sm:$0xff]
  %v46 = vld [vmem:[%s1 + $0xc0] sm:$0xff]
  %v47 = vld [vmem:[%s1 + $0xc8] sm:$0xff]
  %v48 = vld [vmem:[%s1 + $0xd0] sm:$0xff]
  %v49 = vld [vmem:[%s1 + $0xd8] sm:$0xff]
  %v50 = vld [vmem:[%s1 + $0xe0] sm:$0xff]
  %v51 = vld [vmem:[%s1 + $0xe8] sm:$0xff]
  %v52 = vld [vmem:[%s1 + $0xf0] sm:$0xff]
  %v53 = vld [vmem:[%s1 + $0xf8] sm:$0xff]
  %v54 = vld [vmem:[%s2] sm:$0xf]
  %v56 = vperm.slane %v54, 0
  %v57 = vperm.slane %v54, 1
  %v58 = vperm.slane %v54, 2
  %v59 = vperm.slane %v54, 3
  %v72 = vunpack.c.l.b16 %v14
  %v73 = vunpack.c.l.b16 %v15
  %v74 = vunpack.c.l.b16 %v16
  %v75 = vunpack.c.l.b16 %v17
  %v76 = vunpack.c.l.b16 %v18
  %v77 = vunpack.c.l.b16 %v19
  %v78 = vunpack.c.l.b16 %v20
  %v79 = vunpack.c.l.b16 %v21
  %v80 = vpack.c.b16 %v73, %v72
  %v81 = vpack.c.b16 %v75, %v74
  %v82 = vpack.c.b16 %v77, %v76
  %v83 = vpack.c.b16 %v79, %v78
  %v120 = vunpack.c.l.b16 %v22
  %v121 = vunpack.c.h.b16 %v22
  %v122 = vunpack.c.l.b16 %v23
  %v123 = vunpack.c.h.b16 %v23
  %v124 = vunpack.c.l.b16 %v24
  %v125 = vunpack.c.h.b16 %v24
  %v126 = vunpack.c.l.b16 %v25
  %v127 = vunpack.c.h.b16 %v25
  %v128 = vunpack.c.l.b16 %v26
  %v129 = vunpack.c.h.b16 %v26
  %v130 = vunpack.c.l.b16 %v27
  %v131 = vunpack.c.h.b16 %v27
  %v132 = vunpack.c.l.b16 %v28
  %v133 = vunpack.c.h.b16 %v28
  %v134 = vunpack.c.l.b16 %v29
  %v135 = vunpack.c.h.b16 %v29
  %v136 = vunpack.c.l.b16 %v30
  %v137 = vunpack.c.h.b16 %v30
  %v138 = vunpack.c.l.b16 %v31
  %v139 = vunpack.c.h.b16 %v31
  %v140 = vunpack.c.l.b16 %v32
  %v141 = vunpack.c.h.b16 %v32
  %v142 = vunpack.c.l.b16 %v33
  %v143 = vunpack.c.h.b16 %v33
  %v144 = vunpack.c.l.b16 %v34
  %v145 = vunpack.c.h.b16 %v34
  %v146 = vunpack.c.l.b16 %v35
  %v147 = vunpack.c.h.b16 %v35
  %v148 = vunpack.c.l.b16 %v36
  %v149 = vunpack.c.h.b16 %v36
  %v150 = vunpack.c.l.b16 %v37
  %v151 = vunpack.c.h.b16 %v37
  %v152 = vunpack.c.l.b16 %v38
  %v153 = vunpack.c.h.b16 %v38
  %v154 = vunpack.c.l.b16 %v39
  %v155 = vunpack.c.h.b16 %v39
  %v156 = vunpack.c.l.b16 %v40
  %v157 = vunpack.c.h.b16 %v40
  %v158 = vunpack.c.l.b16 %v41
  %v159 = vunpack.c.h.b16 %v41
  %v160 = vunpack.c.l.b16 %v42
  %v161 = vunpack.c.h.b16 %v42
  %v162 = vunpack.c.l.b16 %v43
  %v163 = vunpack.c.h.b16 %v43
  %v164 = vunpack.c.l.b16 %v44
  %v165 = vunpack.c.h.b16 %v44
  %v166 = vunpack.c.l.b16 %v45
  %v167 = vunpack.c.h.b16 %v45
  %v168 = vunpack.c.l.b16 %v46
  %v169 = vunpack.c.h.b16 %v46
  %v170 = vunpack.c.l.b16 %v47
  %v171 = vunpack.c.h.b16 %v47
  %v172 = vunpack.c.l.b16 %v48
  %v173 = vunpack.c.h.b16 %v48
  %v174 = vunpack.c.l.b16 %v49
  %v175 = vunpack.c.h.b16 %v49
  %v176 = vunpack.c.l.b16 %v50
  %v177 = vunpack.c.h.b16 %v50
  %v178 = vunpack.c.l.b16 %v51
  %v179 = vunpack.c.h.b16 %v51
  %v180 = vunpack.c.l.b16 %v52
  %v181 = vunpack.c.h.b16 %v52
  %v182 = vunpack.c.l.b16 %v53
  %v183 = vunpack.c.h.b16 %v53
  %v184 = vpack.c.b16 %v124, %v120
  %v185 = vpack.c.b16 %v125, %v121
  %v186 = vpack.c.b16 %v126, %v122
  %v187 = vpack.c.b16 %v127, %v123
  %v188 = vpack.c.b16 %v132, %v128
  %v189 = vpack.c.b16 %v133, %v129
  %v190 = vpack.c.b16 %v134, %v130
  %v191 = vpack.c.b16 %v135, %v131
  %v192 = vpack.c.b16 %v140, %v136
  %v193 = vpack.c.b16 %v141, %v137
  %v194 = vpack.c.b16 %v142, %v138
  %v195 = vpack.c.b16 %v143, %v139
  %v196 = vpack.c.b16 %v148, %v144
  %v197 = vpack.c.b16 %v149, %v145
  %v198 = vpack.c.b16 %v150, %v146
  %v199 = vpack.c.b16 %v151, %v147
  %v200 = vpack.c.b16 %v156, %v152
  %v201 = vpack.c.b16 %v157, %v153
  %v202 = vpack.c.b16 %v158, %v154
  %v203 = vpack.c.b16 %v159, %v155
  %v204 = vpack.c.b16 %v164, %v160
  %v205 = vpack.c.b16 %v165, %v161
  %v206 = vpack.c.b16 %v166, %v162
  %v207 = vpack.c.b16 %v167, %v163
  %v208 = vpack.c.b16 %v172, %v168
  %v209 = vpack.c.b16 %v173, %v169
  %v210 = vpack.c.b16 %v174, %v170
  %v211 = vpack.c.b16 %v175, %v171
  %v212 = vpack.c.b16 %v180, %v176
  %v213 = vpack.c.b16 %v181, %v177
  %v214 = vpack.c.b16 %v182, %v178
  %v215 = vpack.c.b16 %v183, %v179
  %248 = vmatpush.bf16.msra.mxu0 %v212
  %249 = vmatpush.bf16.msra.mxu0 %v208
  %250 = vmatpush.bf16.msra.mxu0 %v204
  %251 = vmatpush.bf16.msra.mxu0 %v200
  %252 = vmatpush.bf16.msra.mxu0 %v196
  %253 = vmatpush.bf16.msra.mxu0 %v192
  %254 = vmatpush.bf16.msra.mxu0 %v188
  %255 = vmatpush.bf16.msra.mxu0 %v184
  %256 = vmatmul.bf16.gmra.mxu0 %v80
  %v257 = vpop.f32.mrf.mxu0
  %v258 = vadd.f32 %v56, %v257
  %v259 = vpop.f32.mrf.mxu0
  %v260 = vadd.f32 %v56, %v259
  %261 = vmatmul.bf16.gmra.mxu0 %v81
  %v262 = vpop.f32.mrf.mxu0
  %v263 = vadd.f32 %v56, %v262
  %v264 = vpop.f32.mrf.mxu0
  %v265 = vadd.f32 %v56, %v264
  %266 = vmatmul.bf16.gmra.mxu0 %v82
  %v267 = vpop.f32.mrf.mxu0
  %v268 = vadd.f32 %v56, %v267
  %v269 = vpop.f32.mrf.mxu0
  %v270 = vadd.f32 %v56, %v269
  %271 = vmatmul.bf16.gmra.mxu0 %v83
  %v272 = vpop.f32.mrf.mxu0
  %v273 = vadd.f32 %v56, %v272
  %v274 = vpop.f32.mrf.mxu0
  %v275 = vadd.f32 %v56, %v274
  %276 = vdwg.mxu0
  %277 = vmatpush.bf16.msra.mxu0 %v213
  %278 = vmatpush.bf16.msra.mxu0 %v209
  %279 = vmatpush.bf16.msra.mxu0 %v205
  %280 = vmatpush.bf16.msra.mxu0 %v201
  %281 = vmatpush.bf16.msra.mxu0 %v197
  %282 = vmatpush.bf16.msra.mxu0 %v193
  %283 = vmatpush.bf16.msra.mxu0 %v189
  %284 = vmatpush.bf16.msra.mxu0 %v185
  %285 = vmatmul.bf16.gmra.mxu0 %v80
  %v286 = vpop.f32.mrf.mxu0
  %v287 = vadd.f32 %v57, %v286
  %v288 = vpop.f32.mrf.mxu0
  %v289 = vadd.f32 %v57, %v288
  %290 = vmatmul.bf16.gmra.mxu0 %v81
  %v291 = vpop.f32.mrf.mxu0
  %v292 = vadd.f32 %v57, %v291
  %v293 = vpop.f32.mrf.mxu0
  %v294 = vadd.f32 %v57, %v293
  %295 = vmatmul.bf16.gmra.mxu0 %v82
  %v296 = vpop.f32.mrf.mxu0
  %v297 = vadd.f32 %v57, %v296
  %v298 = vpop.f32.mrf.mxu0
  %v299 = vadd.f32 %v57, %v298
  %300 = vmatmul.bf16.gmra.mxu0 %v83
  %v301 = vpop.f32.mrf.mxu0
  %v302 = vadd.f32 %v57, %v301
  %v303 = vpop.f32.mrf.mxu0
  %v304 = vadd.f32 %v57, %v303
  %305 = vdwg.mxu0
  %306 = vmatpush.bf16.msra.mxu0 %v214
  %307 = vmatpush.bf16.msra.mxu0 %v210
  %308 = vmatpush.bf16.msra.mxu0 %v206
  %309 = vmatpush.bf16.msra.mxu0 %v202
  %310 = vmatpush.bf16.msra.mxu0 %v198
  %311 = vmatpush.bf16.msra.mxu0 %v194
  %312 = vmatpush.bf16.msra.mxu0 %v190
  %313 = vmatpush.bf16.msra.mxu0 %v186
  %314 = vmatmul.bf16.gmra.mxu0 %v80
  %v315 = vpop.f32.mrf.mxu0
  %v316 = vadd.f32 %v58, %v315
  %v317 = vpop.f32.mrf.mxu0
  %v318 = vadd.f32 %v58, %v317
  %319 = vmatmul.bf16.gmra.mxu0 %v81
  %v320 = vpop.f32.mrf.mxu0
  %v321 = vadd.f32 %v58, %v320
  %v322 = vpop.f32.mrf.mxu0
  %v323 = vadd.f32 %v58, %v322
  %324 = vmatmul.bf16.gmra.mxu0 %v82
  %v325 = vpop.f32.mrf.mxu0
  %v326 = vadd.f32 %v58, %v325
  %v327 = vpop.f32.mrf.mxu0
  %v328 = vadd.f32 %v58, %v327
  %329 = vmatmul.bf16.gmra.mxu0 %v83
  %v330 = vpop.f32.mrf.mxu0
  %v331 = vadd.f32 %v58, %v330
  %v332 = vpop.f32.mrf.mxu0
  %v333 = vadd.f32 %v58, %v332
  %334 = vdwg.mxu0
  %335 = vmatpush.bf16.msra.mxu0 %v215
  %336 = vmatpush.bf16.msra.mxu0 %v211
  %337 = vmatpush.bf16.msra.mxu0 %v207
  %338 = vmatpush.bf16.msra.mxu0 %v203
  %339 = vmatpush.bf16.msra.mxu0 %v199
  %340 = vmatpush.bf16.msra.mxu0 %v195
  %341 = vmatpush.bf16.msra.mxu0 %v191
  %342 = vmatpush.bf16.msra.mxu0 %v187
  %343 = vmatmul.bf16.gmra.mxu0 %v80
  %v344 = vpop.f32.mrf.mxu0
  %v345 = vadd.f32 %v59, %v344
  %v346 = vpop.f32.mrf.mxu0
  %v347 = vadd.f32 %v59, %v346
  %348 = vmatmul.bf16.gmra.mxu0 %v81
  %v349 = vpop.f32.mrf.mxu0
  %v350 = vadd.f32 %v59, %v349
  %v351 = vpop.f32.mrf.mxu0
  %v352 = vadd.f32 %v59, %v351
  %353 = vmatmul.bf16.gmra.mxu0 %v82
  %v354 = vpop.f32.mrf.mxu0
  %v355 = vadd.f32 %v59, %v354
  %v356 = vpop.f32.mrf.mxu0
  %v357 = vadd.f32 %v59, %v356
  %358 = vmatmul.bf16.gmra.mxu0 %v83
  %v359 = vpop.f32.mrf.mxu0
  %v360 = vadd.f32 %v59, %v359
  %v361 = vpop.f32.mrf.mxu0
  %v362 = vadd.f32 %v59, %v361
  %363 = vdwg.mxu0
  %364 = vst [vmem:[%s3] sm:$0xff] %v258
  %365 = vst [vmem:[%s3 + $0x8] sm:$0xff] %v287
  %366 = vst [vmem:[%s3 + $0x10] sm:$0xff] %v316
  %367 = vst [vmem:[%s3 + $0x18] sm:$0xff] %v345
  %368 = vst [vmem:[%s3 + $0x20] sm:$0xff] %v260
  %369 = vst [vmem:[%s3 + $0x28] sm:$0xff] %v289
  %370 = vst [vmem:[%s3 + $0x30] sm:$0xff] %v318
  %371 = vst [vmem:[%s3 + $0x38] sm:$0xff] %v347
  %372 = vst [vmem:[%s3 + $0x40] sm:$0xff] %v263
  %373 = vst [vmem:[%s3 + $0x48] sm:$0xff] %v292
  %374 = vst [vmem:[%s3 + $0x50] sm:$0xff] %v321
  %375 = vst [vmem:[%s3 + $0x58] sm:$0xff] %v350
  %376 = vst [vmem:[%s3 + $0x60] sm:$0xff] %v265
  %377 = vst [vmem:[%s3 + $0x68] sm:$0xff] %v294
  %378 = vst [vmem:[%s3 + $0x70] sm:$0xff] %v323
  %379 = vst [vmem:[%s3 + $0x78] sm:$0xff] %v352
  %380 = vst [vmem:[%s3 + $0x80] sm:$0xff] %v268
  %381 = vst [vmem:[%s3 + $0x88] sm:$0xff] %v297
  %382 = vst [vmem:[%s3 + $0x90] sm:$0xff] %v326
  %383 = vst [vmem:[%s3 + $0x98] sm:$0xff] %v355
  %384 = vst [vmem:[%s3 + $0xa0] sm:$0xff] %v270
  %385 = vst [vmem:[%s3 + $0xa8] sm:$0xff] %v299
  %386 = vst [vmem:[%s3 + $0xb0] sm:$0xff] %v328
  %387 = vst [vmem:[%s3 + $0xb8] sm:$0xff] %v357
  %388 = vst [vmem:[%s3 + $0xc0] sm:$0xff] %v273
  %389 = vst [vmem:[%s3 + $0xc8] sm:$0xff] %v302
  %390 = vst [vmem:[%s3 + $0xd0] sm:$0xff] %v331
  %391 = vst [vmem:[%s3 + $0xd8] sm:$0xff] %v360
  %392 = vst [vmem:[%s3 + $0xe0] sm:$0xff] %v275
  %393 = vst [vmem:[%s3 + $0xe8] sm:$0xff] %v304
  %394 = vst [vmem:[%s3 + $0xf0] sm:$0xff] %v333
  %395 = vst [vmem:[%s3 + $0xf8] sm:$0xff] %v362
  // Predicated region
  $region14: #{lstm_lm_forward.4} parent=0 // pred_check
    _
  $region15: #{lstm_lm_forward.4} parent=0 // pred_check_branch
    %397 = sbr.rel (0) target = $region17
  $region16: #{lstm_lm_forward.4} parent=0 // pred_region
    _
  $region17: #{lstm_lm_forward.4} parent=0 // pred_fallthru
    _
  // Predicated region
  $region18: #{lstm_lm_forward.4} parent=0 // pred_check
    _
  $region19: #{lstm_lm_forward.4} parent=0 // pred_check_branch
    %399 = sbr.rel (0) target = $region21
  $region20: #{lstm_lm_forward.4} parent=0 // pred_region
    _
  $region21: #{lstm_lm_forward.4} parent=0 // pred_fallthru
    _

// kernel: lstm_lm_forward.6
$region0: #{lstm_lm_forward.6}
  #allocation0 [shape = 'u32[]', space=smem, size = 0x4, offset = 0x4, fixed_abs, tag = 'smem constant byte address 0x4 - core index']
  #allocation1 [shape = 'u32[72,128]{1,0:T(1,128)}', space=vmem, size = 0x9000, scoped, tag = 'internal scratch']
  #allocation2 [shape = 'bf16[16,128]{1,0:T(8,128)(2,1)}', space=vmem, size = 0x1000, scoped, tag = 'scratch operand']
  #allocation3 [shape = 'f32[16,1]{1,0:T(8,128)}', space=vmem, size = 0x2000, scoped, tag = 'scratch operand']
  #allocation4 [shape = 'f32[16,1]{1,0:T(8,128)}', space=vmem, size = 0x2000, scoped, tag = 'scratch operand']
  %s0 = inlined_call_operand.vmem [shape: bf16[16,128], index: 0, kind: input, shape index: {}]
  %s1 = inlined_call_operand.vmem [shape: bf16[128,128], index: 1, kind: input, shape index: {}]
  %s2 = inlined_call_operand.vmem [shape: f32[1,128], index: 2, kind: input, shape index: {}]
  %s3 = inlined_call_operand.vmem [shape: bf16[128,256], index: 3, kind: input, shape index: {}]
  %s4 = inlined_call_operand.vmem [shape: f32[16,256], index: 4, kind: output, shape index: {0}]
  %s5 = inlined_call_operand.vmem [shape: f32[16,1], index: 5, kind: output, shape index: {1}]
  %6 = xla_tuple %s4, %s5
  %s7 = sld [smem:[#allocation0]]
  $region42: #{lstm_lm_forward.6} parent=0
    _
  %s9 = ssub.s32 1, %s7
  %s10 = scalar_select 0, %s9, %s7
  // Predicated region
  $region2: #{lstm_lm_forward.6} parent=0 // pred_check
    _
  $region3: #{lstm_lm_forward.6} parent=0 // pred_check_branch
    %12 = sbr.rel (0) target = $region5
  $region4: #{lstm_lm_forward.6} parent=0 // pred_region
    _
  $region5: #{lstm_lm_forward.6} parent=0 // pred_fallthru
    _
  // Predicated region
  $region6: #{lstm_lm_forward.6} parent=0 // pred_check
    _
  $region7: #{lstm_lm_forward.6} parent=0 // pred_check_branch
    %14 = sbr.rel (0) target = $region9
  $region8: #{lstm_lm_forward.6} parent=0 // pred_region
    _
  $region9: #{lstm_lm_forward.6} parent=0 // pred_fallthru
    _
  // Predicated region
  $region10: #{lstm_lm_forward.6} parent=0 // pred_check
    _
  $region11: #{lstm_lm_forward.6} parent=0 // pred_check_branch
    %16 = sbr.rel (0) target = $region13
  $region12: #{lstm_lm_forward.6} parent=0 // pred_region
    _
  $region13: #{lstm_lm_forward.6} parent=0 // pred_fallthru
    _
  // Predicated region
  $region14: #{lstm_lm_forward.6} parent=0 // pred_check
    _
  $region15: #{lstm_lm_forward.6} parent=0 // pred_check_branch
    %18 = sbr.rel (0) target = $region17
  $region16: #{lstm_lm_forward.6} parent=0 // pred_region
    _
  $region17: #{lstm_lm_forward.6} parent=0 // pred_fallthru
    _
  %p19 = scmp.eq.s32.totalorder 0, 0
  // Predicated region
  $region18: #{lstm_lm_forward.6} parent=0 // pred_check
    %p20 = pneg %p19
  $region19: #{lstm_lm_forward.6} parent=0 // pred_check_branch
    %22 = sbr.rel (%p20) target = $region21
  $region20: #{lstm_lm_forward.6} parent=0 // pred_region
    %v23 = vld [vmem:[%s0] sm:$0xf]
    %v24 = vld [vmem:[%s0 + $0x4] sm:$0xf]
    %v25 = vld [vmem:[%s1] sm:$0xf]
    %v26 = vld [vmem:[%s1 + $0x4] sm:$0xf]
    %v27 = vld [vmem:[%s1 + $0x8] sm:$0xf]
    %v28 = vld [vmem:[%s1 + $0xc] sm:$0xf]
    %v29 = vld [vmem:[%s1 + $0x10] sm:$0xf]
    %v30 = vld [vmem:[%s1 + $0x14] sm:$0xf]
    %v31 = vld [vmem:[%s1 + $0x18] sm:$0xf]
    %v32 = vld [vmem:[%s1 + $0x1c] sm:$0xf]
    %v33 = vld [vmem:[%s1 + $0x20] sm:$0xf]
    %v34 = vld [vmem:[%s1 + $0x24] sm:$0xf]
    %v35 = vld [vmem:[%s1 + $0x28] sm:$0xf]
    %v36 = vld [vmem:[%s1 + $0x2c] sm:$0xf]
    %v37 = vld [vmem:[%s1 + $0x30] sm:$0xf]
    %v38 = vld [vmem:[%s1 + $0x34] sm:$0xf]
    %v39 = vld [vmem:[%s1 + $0x38] sm:$0xf]
    %v40 = vld [vmem:[%s1 + $0x3c] sm:$0xf]
    %v41 = vld [vmem:[%s2] sm:$0x1]
    %v43 = vperm.slane %v41, 0
    %v47 = vunpack.c.l.b16 %v23
    %v48 = vunpack.c.l.b16 %v24
    %v49 = vpack.c.b16 %v48, %v47
    %v67 = vunpack.c.l.b16 %v25
    %v68 = vunpack.c.l.b16 %v26
    %v69 = vunpack.c.l.b16 %v27
    %v70 = vunpack.c.l.b16 %v28
    %v71 = vunpack.c.l.b16 %v29
    %v72 = vunpack.c.l.b16 %v30
    %v73 = vunpack.c.l.b16 %v31
    %v74 = vunpack.c.l.b16 %v32
    %v75 = vunpack.c.l.b16 %v33
    %v76 = vunpack.c.l.b16 %v34
    %v77 = vunpack.c.l.b16 %v35
    %v78 = vunpack.c.l.b16 %v36
    %v79 = vunpack.c.l.b16 %v37
    %v80 = vunpack.c.l.b16 %v38
    %v81 = vunpack.c.l.b16 %v39
    %v82 = vunpack.c.l.b16 %v40
    %v83 = vpack.c.b16 %v68, %v67
    %v84 = vpack.c.b16 %v70, %v69
    %v85 = vpack.c.b16 %v72, %v71
    %v86 = vpack.c.b16 %v74, %v73
    %v87 = vpack.c.b16 %v76, %v75
    %v88 = vpack.c.b16 %v78, %v77
    %v89 = vpack.c.b16 %v80, %v79
    %v90 = vpack.c.b16 %v82, %v81
    %99 = vmatpush.bf16.msra.mxu0 %v90
    %100 = vmatpush.bf16.msra.mxu0 %v89
    %101 = vmatpush.bf16.msra.mxu0 %v88
    %102 = vmatpush.bf16.msra.mxu0 %v87
    %103 = vmatpush.bf16.msra.mxu0 %v86
    %104 = vmatpush.bf16.msra.mxu0 %v85
    %105 = vmatpush.bf16.msra.mxu0 %v84
    %106 = vmatpush.bf16.msra.mxu0 %v83
    %107 = vmatmul.bf16.gmra.mxu0 %v49
    %v108 = vpop.f32.mrf.mxu0
    %v109 = vadd.f32 %v43, %v108
    %v110 = vpop.f32.mrf.mxu0
    %v111 = vadd.f32 %v43, %v110
    %112 = vdwg.mxu0
    %v113 = vmax.f32 %v109, 0.0
    %v114 = vmax.f32 %v111, 0.0
    %v115 = vpack.c.bf16 %v113, %v113
    %v116 = vpack.c.bf16 %v114, %v114
    %117 = vst [vmem:[#allocation2] sm:$0xf] %v115
    %118 = vst [vmem:[#allocation2 + $0x4] sm:$0xf] %v116
    %vm119 = vcmask 7168
    %120 = vst.msk [vmem:[#allocation3] sm:$0xff] %vm119, -inf
    %121 = vst.msk [vmem:[#allocation3 + $0x8] sm:$0xff] %vm119, -inf
    %122 = vst.msk [vmem:[#allocation4] sm:$0xff] %vm119, 0.0
    %123 = vst.msk [vmem:[#allocation4 + $0x8] sm:$0xff] %vm119, 0.0
  $region21: #{lstm_lm_forward.6} parent=0 // pred_fallthru
    _
  %v124 = vld [vmem:[#allocation2] sm:$0xf]
  %v125 = vld [vmem:[#allocation2 + $0x4] sm:$0xf]
  %v126 = vld [vmem:[%s3] sm:$0xff]
  %v127 = vld [vmem:[%s3 + $0x8] sm:$0xff]
  %v128 = vld [vmem:[%s3 + $0x10] sm:$0xff]
  %v129 = vld [vmem:[%s3 + $0x18] sm:$0xff]
  %v130 = vld [vmem:[%s3 + $0x20] sm:$0xff]
  %v131 = vld [vmem:[%s3 + $0x28] sm:$0xff]
  %v132 = vld [vmem:[%s3 + $0x30] sm:$0xff]
  %v133 = vld [vmem:[%s3 + $0x38] sm:$0xff]
  %v134 = vld [vmem:[%s3 + $0x40] sm:$0xff]
  %v135 = vld [vmem:[%s3 + $0x48] sm:$0xff]
  %v136 = vld [vmem:[%s3 + $0x50] sm:$0xff]
  %v137 = vld [vmem:[%s3 + $0x58] sm:$0xff]
  %v138 = vld [vmem:[%s3 + $0x60] sm:$0xff]
  %v139 = vld [vmem:[%s3 + $0x68] sm:$0xff]
  %v140 = vld [vmem:[%s3 + $0x70] sm:$0xff]
  %v141 = vld [vmem:[%s3 + $0x78] sm:$0xff]
  %v144 = vunpack.c.l.b16 %v124
  %v145 = vunpack.c.l.b16 %v125
  %v146 = vpack.c.b16 %v145, %v144
  %v164 = vunpack.c.l.b16 %v126
  %v165 = vunpack.c.h.b16 %v126
  %v166 = vunpack.c.l.b16 %v127
  %v167 = vunpack.c.h.b16 %v127
  %v168 = vunpack.c.l.b16 %v128
  %v169 = vunpack.c.h.b16 %v128
  %v170 = vunpack.c.l.b16 %v129
  %v171 = vunpack.c.h.b16 %v129
  %v172 = vunpack.c.l.b16 %v130
  %v173 = vunpack.c.h.b16 %v130
  %v174 = vunpack.c.l.b16 %v131
  %v175 = vunpack.c.h.b16 %v131
  %v176 = vunpack.c.l.b16 %v132
  %v177 = vunpack.c.h.b16 %v132
  %v178 = vunpack.c.l.b16 %v133
  %v179 = vunpack.c.h.b16 %v133
  %v180 = vunpack.c.l.b16 %v134
  %v181 = vunpack.c.h.b16 %v134
  %v182 = vunpack.c.l.b16 %v135
  %v183 = vunpack.c.h.b16 %v135
  %v184 = vunpack.c.l.b16 %v136
  %v185 = vunpack.c.h.b16 %v136
  %v186 = vunpack.c.l.b16 %v137
  %v187 = vunpack.c.h.b16 %v137
  %v188 = vunpack.c.l.b16 %v138
  %v189 = vunpack.c.h.b16 %v138
  %v190 = vunpack.c.l.b16 %v139
  %v191 = vunpack.c.h.b16 %v139
  %v192 = vunpack.c.l.b16 %v140
  %v193 = vunpack.c.h.b16 %v140
  %v194 = vunpack.c.l.b16 %v141
  %v195 = vunpack.c.h.b16 %v141
  %v196 = vpack.c.b16 %v166, %v164
  %v197 = vpack.c.b16 %v167, %v165
  %v198 = vpack.c.b16 %v170, %v168
  %v199 = vpack.c.b16 %v171, %v169
  %v200 = vpack.c.b16 %v174, %v172
  %v201 = vpack.c.b16 %v175, %v173
  %v202 = vpack.c.b16 %v178, %v176
  %v203 = vpack.c.b16 %v179, %v177
  %v204 = vpack.c.b16 %v182, %v180
  %v205 = vpack.c.b16 %v183, %v181
  %v206 = vpack.c.b16 %v186, %v184
  %v207 = vpack.c.b16 %v187, %v185
  %v208 = vpack.c.b16 %v190, %v188
  %v209 = vpack.c.b16 %v191, %v189
  %v210 = vpack.c.b16 %v194, %v192
  %v211 = vpack.c.b16 %v195, %v193
  %228 = vmatpush.bf16.msra.mxu0 %v210
  %229 = vmatpush.bf16.msra.mxu0 %v208
  %230 = vmatpush.bf16.msra.mxu0 %v206
  %231 = vmatpush.bf16.msra.mxu0 %v204
  %232 = vmatpush.bf16.msra.mxu0 %v202
  %233 = vmatpush.bf16.msra.mxu0 %v200
  %234 = vmatpush.bf16.msra.mxu0 %v198
  %235 = vmatpush.bf16.msra.mxu0 %v196
  %236 = vmatmul.bf16.gmra.mxu0 %v146
  %v237 = vpop.f32.mrf.mxu0
  %v238 = vadd.f32 0.0, %v237
  %v239 = vpop.f32.mrf.mxu0
  %v240 = vadd.f32 0.0, %v239
  %241 = vdwg.mxu0
  %242 = vmatpush.bf16.msra.mxu0 %v211
  %243 = vmatpush.bf16.msra.mxu0 %v209
  %244 = vmatpush.bf16.msra.mxu0 %v207
  %245 = vmatpush.bf16.msra.mxu0 %v205
  %246 = vmatpush.bf16.msra.mxu0 %v203
  %247 = vmatpush.bf16.msra.mxu0 %v201
  %248 = vmatpush.bf16.msra.mxu0 %v199
  %249 = vmatpush.bf16.msra.mxu0 %v197
  %250 = vmatmul.bf16.gmra.mxu0 %v146
  %v251 = vpop.f32.mrf.mxu0
  %v252 = vadd.f32 0.0, %v251
  %v253 = vpop.f32.mrf.mxu0
  %v254 = vadd.f32 0.0, %v253
  %255 = vdwg.mxu0
  %256 = vst [vmem:[%s4] sm:$0xff] %v238
  %257 = vst [vmem:[%s4 + $0x8] sm:$0xff] %v252
  %258 = vst [vmem:[%s4 + $0x10] sm:$0xff] %v240
  %259 = vst [vmem:[%s4 + $0x18] sm:$0xff] %v254
  %v260 = vld [vmem:[#allocation3] sm:$0xff]
  %v261 = vld [vmem:[#allocation3 + $0x8] sm:$0xff]
  %v262 = vmax.f32 %v238, %v252
  %263 = vmax.xlane.f32.xlu0 %v262
  %v264 = vpop.xlane.xlu0 %263
  %v265 = vmax.f32 %v240, %v254
  %266 = vmax.xlane.f32.xlu0 %v265
  %v267 = vpop.xlane.xlu0 %266
  %v268 = vmax.f32 %v260, %v264
  %v269 = vmax.f32 %v261, %v267
  %v270 = vld [vmem:[#allocation4] sm:$0xff]
  %v271 = vld [vmem:[#allocation4 + $0x8] sm:$0xff]
  %v272 = vsub.f32 %v260, %v268
  %v273 = vsub.f32 %v261, %v269
  %v274 = vmul.f32 %v272, 1.442695
  %v275 = vpow.pop %v274
  %v276 = vmul.f32 %v273, 1.442695
  %v277 = vpow.pop %v276
  %v278 = vmul.f32 %v270, %v275
  %v279 = vmul.f32 %v271, %v277
  %281 = vset.pattern.permute.xlu0 0
  %282 = vperm.xlu0 %281, %v268
  %v283 = vpop.permute.xlu0 %282
  %286 = vset.pattern.permute.xlu0 0
  %287 = vperm.xlu0 %286, %v269
  %v288 = vpop.permute.xlu0 %287
  %v290 = vsub.f32 %v238, %v283
  %v291 = vsub.f32 %v252, %v283
  %v292 = vsub.f32 %v240, %v288
  %v293 = vsub.f32 %v254, %v288
  %v294 = vmul.f32 %v290, 1.442695
  %v295 = vpow.pop %v294
  %v296 = vmul.f32 %v291, 1.442695
  %v297 = vpow.pop %v296
  %v298 = vmul.f32 %v292, 1.442695
  %v299 = vpow.pop %v298
  %v300 = vmul.f32 %v293, 1.442695
  %v301 = vpow.pop %v300
  %v302 = vadd.f32 %v295, %v297
  %303 = vadd.xlane.f32.xlu0 %v302
  %v304 = vpop.xlane.xlu0 %303
  %v305 = vadd.f32 %v299, %v301
  %306 = vadd.xlane.f32.xlu0 %v305
  %v307 = vpop.xlane.xlu0 %306
  %v308 = vadd.f32 %v278, %v304
  %v309 = vadd.f32 %v279, %v307
  %vm310 = vcmask 7168
  %311 = vst.msk [vmem:[#allocation4] sm:$0xff] %vm310, %v308
  %312 = vst.msk [vmem:[#allocation4 + $0x8] sm:$0xff] %vm310, %v309
  %313 = vst.msk [vmem:[#allocation3] sm:$0xff] %vm310, %v268
  %314 = vst.msk [vmem:[#allocation3 + $0x8] sm:$0xff] %vm310, %v269
  // Predicated region
  $region22: #{lstm_lm_forward.6} parent=0 // pred_check
    %p315 = pneg %p19
  $region23: #{lstm_lm_forward.6} parent=0 // pred_check_branch
    %317 = sbr.rel (%p315) target = $region25
  $region24: #{lstm_lm_forward.6} parent=0 // pred_region
    %v318 = vld [vmem:[#allocation3] sm:$0xff]
    %v319 = vld [vmem:[#allocation3 + $0x8] sm:$0xff]
    %v320 = vld [vmem:[#allocation4] sm:$0xff]
    %v321 = vld [vmem:[#allocation4 + $0x8] sm:$0xff]
    %v322 = vlog2.pop %v320
    %v323 = vmul.f32 %v322, 0.6931472
    %v324 = vlog2.pop %v321
    %v325 = vmul.f32 %v324, 0.6931472
    %v326 = vadd.f32 %v318, %v323
    %v327 = vadd.f32 %v319, %v325
    %328 = vst.msk [vmem:[%s5] sm:$0xff] %vm310, %v326
    %329 = vst.msk [vmem:[%s5 + $0x8] sm:$0xff] %vm310, %v327
  $region25: #{lstm_lm_forward.6} parent=0 // pred_fallthru
    _
  // Predicated region
  $region26: #{lstm_lm_forward.6} parent=0 // pred_check
    _
  $region27: #{lstm_lm_forward.6} parent=0 // pred_check_branch
    %331 = sbr.rel (0) target = $region29
  $region28: #{lstm_lm_forward.6} parent=0 // pred_region
    _
  $region29: #{lstm_lm_forward.6} parent=0 // pred_fallthru
    _
  // Predicated region
  $region30: #{lstm_lm_forward.6} parent=0 // pred_check
    _
  $region31: #{lstm_lm_forward.6} parent=0 // pred_check_branch
    %333 = sbr.rel (0) target = $region33
  $region32: #{lstm_lm_forward.6} parent=0 // pred_region
    _
  $region33: #{lstm_lm_forward.6} parent=0 // pred_fallthru
    _
  // Predicated region
  $region34: #{lstm_lm_forward.6} parent=0 // pred_check
    _
  $region35: #{lstm_lm_forward.6} parent=0 // pred_check_branch
    %335 = sbr.rel (0) target = $region37
  $region36: #{lstm_lm_forward.6} parent=0 // pred_region
    _
  $region37: #{lstm_lm_forward.6} parent=0 // pred_fallthru
    _
  // Predicated region
  $region38: #{lstm_lm_forward.6} parent=0 // pred_check
    _
  $region39: #{lstm_lm_forward.6} parent=0 // pred_check_branch
    %337 = sbr.rel (0) target = $region41
  $region40: #{lstm_lm_forward.6} parent=0 // pred_region
    _
  $region41: #{lstm_lm_forward.6} parent=0 // pred_fallthru
    _

// kernel: lstm_lm_forward.5
$region0: #{lstm_lm_forward.5}
  #allocation0 [shape = 'u32[]', space=smem, size = 0x4, offset = 0x4, fixed_abs, tag = 'smem constant byte address 0x4 - core index']
  #allocation1 [shape = 'u32[72,128]{1,0:T(1,128)}', space=vmem, size = 0x9000, scoped, tag = 'internal scratch']
  #allocation2 [shape = 'f32[8,128]{1,0:T(8,128)}', space=vmem, size = 0x1000, scoped, tag = 'scratch operand']
  #allocation3 [shape = 'f32[8,128]{1,0:T(8,128)}', space=vmem, size = 0x1000, scoped, tag = 'scratch operand']
  %s0 = inlined_call_operand.vmem [shape: f32[8,8,512], index: 0, kind: input, shape index: {}]
  %s1 = inlined_call_operand.vmem [shape: bf16[128,512], index: 1, kind: input, shape index: {}]
  %s2 = inlined_call_operand.vmem [shape: f32[8,128], index: 2, kind: input, shape index: {}]
  %s3 = inlined_call_operand.vmem [shape: f32[8,128], index: 3, kind: input, shape index: {}]
  %s4 = inlined_call_operand.vmem [shape: bf16[8,8,128], index: 4, kind: output, shape index: {0}]
  %s5 = inlined_call_operand.vmem [shape: f32[8,128], index: 5, kind: output, shape index: {1}]
  %s6 = inlined_call_operand.vmem [shape: f32[8,128], index: 6, kind: output, shape index: {2}]
  %7 = xla_tuple %s4, %s5, %s6
  %s8 = sld [smem:[#allocation0]]
  $region46: #{lstm_lm_forward.5} parent=0
    _
  %s10 = ssub.s32 1, %s8
  %s11 = scalar_select 0, %s10, %s8
  // Predicated region
  $region2: #{lstm_lm_forward.5} parent=0 // pred_check
    _
  $region3: #{lstm_lm_forward.5} parent=0 // pred_check_branch
    %13 = sbr.rel (0) target = $region5
  $region4: #{lstm_lm_forward.5} parent=0 // pred_region
    _
  $region5: #{lstm_lm_forward.5} parent=0 // pred_fallthru
    _
  // Predicated region
  $region6: #{lstm_lm_forward.5} parent=0 // pred_check
    _
  $region7: #{lstm_lm_forward.5} parent=0 // pred_check_branch
    %15 = sbr.rel (0) target = $region9
  $region8: #{lstm_lm_forward.5} parent=0 // pred_region
    _
  $region9: #{lstm_lm_forward.5} parent=0 // pred_fallthru
    _
  // Predicated region
  $region10: #{lstm_lm_forward.5} parent=0 // pred_check
    _
  $region11: #{lstm_lm_forward.5} parent=0 // pred_check_branch
    %17 = sbr.rel (0) target = $region13
  $region12: #{lstm_lm_forward.5} parent=0 // pred_region
    _
  $region13: #{lstm_lm_forward.5} parent=0 // pred_fallthru
    _
  // Predicated region
  $region14: #{lstm_lm_forward.5} parent=0 // pred_check
    _
  $region15: #{lstm_lm_forward.5} parent=0 // pred_check_branch
    %19 = sbr.rel (0) target = $region17
  $region16: #{lstm_lm_forward.5} parent=0 // pred_region
    _
  $region17: #{lstm_lm_forward.5} parent=0 // pred_fallthru
    _
  %p20 = scmp.eq.s32.totalorder 0, 0
  // Predicated region
  $region18: #{lstm_lm_forward.5} parent=0 // pred_check
    %p21 = pneg %p20
  $region19: #{lstm_lm_forward.5} parent=0 // pred_check_branch
    %23 = sbr.rel (%p21) target = $region21
  $region20: #{lstm_lm_forward.5} parent=0 // pred_region
    %v24 = vld [vmem:[%s2] sm:$0xff]
    %25 = vst [vmem:[#allocation2] sm:$0xff] %v24
    %v26 = vld [vmem:[%s3] sm:$0xff]
    %27 = vst [vmem:[#allocation3] sm:$0xff] %v26
  $region21: #{lstm_lm_forward.5} parent=0 // pred_fallthru
    _
  %v28 = vld [vmem:[#allocation2] sm:$0xff]
  %v29 = vld [vmem:[#allocation3] sm:$0xff]
  %v30 = vld [vmem:[%s0] sm:$0xff]
  %v31 = vld [vmem:[%s0 + $0x8] sm:$0xff]
  %v32 = vld [vmem:[%s0 + $0x10] sm:$0xff]
  %v33 = vld [vmem:[%s0 + $0x18] sm:$0xff]
  %v34 = vpack.c.bf16 %v28, %v28
  %v35 = vld [vmem:[%s1] sm:$0xff]
  %v36 = vld [vmem:[%s1 + $0x8] sm:$0xff]
  %v37 = vld [vmem:[%s1 + $0x10] sm:$0xff]
  %v38 = vld [vmem:[%s1 + $0x18] sm:$0xff]
  %v39 = vld [vmem:[%s1 + $0x20] sm:$0xff]
  %v40 = vld [vmem:[%s1 + $0x28] sm:$0xff]
  %v41 = vld [vmem:[%s1 + $0x30] sm:$0xff]
  %v42 = vld [vmem:[%s1 + $0x38] sm:$0xff]
  %v43 = vld [vmem:[%s1 + $0x40] sm:$0xff]
  %v44 = vld [vmem:[%s1 + $0x48] sm:$0xff]
  %v45 = vld [vmem:[%s1 + $0x50] sm:$0xff]
  %v46 = vld [vmem:[%s1 + $0x58] sm:$0xff]
  %v47 = vld [vmem:[%s1 + $0x60] sm:$0xff]
  %v48 = vld [vmem:[%s1 + $0x68] sm:$0xff]
  %v49 = vld [vmem:[%s1 + $0x70] sm:$0xff]
  %v50 = vld [vmem:[%s1 + $0x78] sm:$0xff]
  %v51 = vld [vmem:[%s1 + $0x80] sm:$0xff]
  %v52 = vld [vmem:[%s1 + $0x88] sm:$0xff]
  %v53 = vld [vmem:[%s1 + $0x90] sm:$0xff]
  %v54 = vld [vmem:[%s1 + $0x98] sm:$0xff]
  %v55 = vld [vmem:[%s1 + $0xa0] sm:$0xff]
  %v56 = vld [vmem:[%s1 + $0xa8] sm:$0xff]
  %v57 = vld [vmem:[%s1 + $0xb0] sm:$0xff]
  %v58 = vld [vmem:[%s1 + $0xb8] sm:$0xff]
  %v59 = vld [vmem:[%s1 + $0xc0] sm:$0xff]
  %v60 = vld [vmem:[%s1 + $0xc8] sm:$0xff]
  %v61 = vld [vmem:[%s1 + $0xd0] sm:$0xff]
  %v62 = vld [vmem:[%s1 + $0xd8] sm:$0xff]
  %v63 = vld [vmem:[%s1 + $0xe0] sm:$0xff]
  %v64 = vld [vmem:[%s1 + $0xe8] sm:$0xff]
  %v65 = vld [vmem:[%s1 + $0xf0] sm:$0xff]
  %v66 = vld [vmem:[%s1 + $0xf8] sm:$0xff]
  %v99 = vunpack.c.l.b16 %v35
  %v100 = vunpack.c.h.b16 %v35
  %v101 = vunpack.c.l.b16 %v36
  %v102 = vunpack.c.h.b16 %v36
  %v103 = vunpack.c.l.b16 %v37
  %v104 = vunpack.c.h.b16 %v37
  %v105 = vunpack.c.l.b16 %v38
  %v106 = vunpack.c.h.b16 %v38
  %v107 = vunpack.c.l.b16 %v39
  %v108 = vunpack.c.h.b16 %v39
  %v109 = vunpack.c.l.b16 %v40
  %v110 = vunpack.c.h.b16 %v40
  %v111 = vunpack.c.l.b16 %v41
  %v112 = vunpack.c.h.b16 %v41
  %v113 = vunpack.c.l.b16 %v42
  %v114 = vunpack.c.h.b16 %v42
  %v115 = vunpack.c.l.b16 %v43
  %v116 = vunpack.c.h.b16 %v43
  %v117 = vunpack.c.l.b16 %v44
  %v118 = vunpack.c.h.b16 %v44
  %v119 = vunpack.c.l.b16 %v45
  %v120 = vunpack.c.h.b16 %v45
  %v121 = vunpack.c.l.b16 %v46
  %v122 = vunpack.c.h.b16 %v46
  %v123 = vunpack.c.l.b16 %v47
  %v124 = vunpack.c.h.b16 %v47
  %v125 = vunpack.c.l.b16 %v48
  %v126 = vunpack.c.h.b16 %v48
  %v127 = vunpack.c.l.b16 %v49
  %v128 = vunpack.c.h.b16 %v49
  %v129 = vunpack.c.l.b16 %v50
  %v130 = vunpack.c.h.b16 %v50
  %v131 = vunpack.c.l.b16 %v51
  %v132 = vunpack.c.h.b16 %v51
  %v133 = vunpack.c.l.b16 %v52
  %v134 = vunpack.c.h.b16 %v52
  %v135 = vunpack.c.l.b16 %v53
  %v136 = vunpack.c.h.b16 %v53
  %v137 = vunpack.c.l.b16 %v54
  %v138 = vunpack.c.h.b16 %v54
  %v139 = vunpack.c.l.b16 %v55
  %v140 = vunpack.c.h.b16 %v55
  %v141 = vunpack.c.l.b16 %v56
  %v142 = vunpack.c.h.b16 %v56
  %v143 = vunpack.c.l.b16 %v57
  %v144 = vunpack.c.h.b16 %v57
  %v145 = vunpack.c.l.b16 %v58
  %v146 = vunpack.c.h.b16 %v58
  %v147 = vunpack.c.l.b16 %v59
  %v148 = vunpack.c.h.b16 %v59
  %v149 = vunpack.c.l.b16 %v60
  %v150 = vunpack.c.h.b16 %v60
  %v151 = vunpack.c.l.b16 %v61
  %v152 = vunpack.c.h.b16 %v61
  %v153 = vunpack.c.l.b16 %v62
  %v154 = vunpack.c.h.b16 %v62
  %v155 = vunpack.c.l.b16 %v63
  %v156 = vunpack.c.h.b16 %v63
  %v157 = vunpack.c.l.b16 %v64
  %v158 = vunpack.c.h.b16 %v64
  %v159 = vunpack.c.l.b16 %v65
  %v160 = vunpack.c.h.b16 %v65
  %v161 = vunpack.c.l.b16 %v66
  %v162 = vunpack.c.h.b16 %v66
  %v163 = vpack.c.b16 %v103, %v99
  %v164 = vpack.c.b16 %v104, %v100
  %v165 = vpack.c.b16 %v105, %v101
  %v166 = vpack.c.b16 %v106, %v102
  %v167 = vpack.c.b16 %v111, %v107
  %v168 = vpack.c.b16 %v112, %v108
  %v169 = vpack.c.b16 %v113, %v109
  %v170 = vpack.c.b16 %v114, %v110
  %v171 = vpack.c.b16 %v119, %v115
  %v172 = vpack.c.b16 %v120, %v116
  %v173 = vpack.c.b16 %v121, %v117
  %v174 = vpack.c.b16 %v122, %v118
  %v175 = vpack.c.b16 %v127, %v123
  %v176 = vpack.c.b16 %v128, %v124
  %v177 = vpack.c.b16 %v129, %v125
  %v178 = vpack.c.b16 %v130, %v126
  %v179 = vpack.c.b16 %v135, %v131
  %v180 = vpack.c.b16 %v136, %v132
  %v181 = vpack.c.b16 %v137, %v133
  %v182 = vpack.c.b16 %v138, %v134
  %v183 = vpack.c.b16 %v143, %v139
  %v184 = vpack.c.b16 %v144, %v140
  %v185 = vpack.c.b16 %v145, %v141
  %v186 = vpack.c.b16 %v146, %v142
  %v187 = vpack.c.b16 %v151, %v147
  %v188 = vpack.c.b16 %v152, %v148
  %v189 = vpack.c.b16 %v153, %v149
  %v190 = vpack.c.b16 %v154, %v150
  %v191 = vpack.c.b16 %v159, %v155
  %v192 = vpack.c.b16 %v160, %v156
  %v193 = vpack.c.b16 %v161, %v157
  %v194 = vpack.c.b16 %v162, %v158
  %227 = vmatpush.bf16.msra.mxu0 %v191
  %228 = vmatpush.bf16.msra.mxu0 %v187
  %229 = vmatpush.bf16.msra.mxu0 %v183
  %230 = vmatpush.bf16.msra.mxu0 %v179
  %231 = vmatpush.bf16.msra.mxu0 %v175
  %232 = vmatpush.bf16.msra.mxu0 %v171
  %233 = vmatpush.bf16.msra.mxu0 %v167
  %234 = vmatpush.bf16.msra.mxu0 %v163
  %235 = vmatmul.bf16.gmra.mxu0 %v34
  %v236 = vpop.f32.mrf.mxu0
  %v237 = vadd.f32 0.0, %v236
  %v238 = vpop.f32.mrf.mxu0
  %239 = vdwg.mxu0
  %240 = vmatpush.bf16.msra.mxu0 %v192
  %241 = vmatpush.bf16.msra.mxu0 %v188
  %242 = vmatpush.bf16.msra.mxu0 %v184
  %243 = vmatpush.bf16.msra.mxu0 %v180
  %244 = vmatpush.bf16.msra.mxu0 %v176
  %245 = vmatpush.bf16.msra.mxu0 %v172
  %246 = vmatpush.bf16.msra.mxu0 %v168
  %247 = vmatpush.bf16.msra.mxu0 %v164
  %248 = vmatmul.bf16.gmra.mxu0 %v34
  %v249 = vpop.f32.mrf.mxu0
  %v250 = vadd.f32 0.0, %v249
  %v251 = vpop.f32.mrf.mxu0
  %252 = vdwg.mxu0
  %253 = vmatpush.bf16.msra.mxu0 %v193
  %254 = vmatpush.bf16.msra.mxu0 %v189
  %255 = vmatpush.bf16.msra.mxu0 %v185
  %256 = vmatpush.bf16.msra.mxu0 %v181
  %257 = vmatpush.bf16.msra.mxu0 %v177
  %258 = vmatpush.bf16.msra.mxu0 %v173
  %259 = vmatpush.bf16.msra.mxu0 %v169
  %260 = vmatpush.bf16.msra.mxu0 %v165
  %261 = vmatmul.bf16.gmra.mxu0 %v34
  %v262 = vpop.f32.mrf.mxu0
  %v263 = vadd.f32 0.0, %v262
  %v264 = vpop.f32.mrf.mxu0
  %265 = vdwg.mxu0
  %266 = vmatpush.bf16.msra.mxu0 %v194
  %267 = vmatpush.bf16.msra.mxu0 %v190
  %268 = vmatpush.bf16.msra.mxu0 %v186
  %269 = vmatpush.bf16.msra.mxu0 %v182
  %270 = vmatpush.bf16.msra.mxu0 %v178
  %271 = vmatpush.bf16.msra.mxu0 %v174
  %272 = vmatpush.bf16.msra.mxu0 %v170
  %273 = vmatpush.bf16.msra.mxu0 %v166
  %274 = vmatmul.bf16.gmra.mxu0 %v34
  %v275 = vpop.f32.mrf.mxu0
  %v276 = vadd.f32 0.0, %v275
  %v277 = vpop.f32.mrf.mxu0
  %278 = vdwg.mxu0
  %v279 = vadd.f32 %v30, %v237
  %v280 = vadd.f32 %v31, %v250
  %v281 = vadd.f32 %v32, %v263
  %v282 = vadd.f32 %v33, %v276
  %v283 = vxor.u32 %v279, 2147483648
  %v284 = vmul.f32 %v283, 1.442695
  %v285 = vpow.pop %v284
  %v286 = vadd.f32 %v285, 1.0
  %v287 = vrcp.pop %v286
  %v288 = vmul.f32 %v286, %v287
  %v289 = vsub.f32 1.0, %v288
  %v290 = vmul.f32 %v287, %v289
  %v291 = vadd.f32 %v287, %v290
  %vm292 = vweird.f32 %v286
  %vm293 = vweird.f32 %v287
  %vm294 = vmor %vm292, %vm293
  %v295 = vsel %vm294, %v287, %v291
  %v296 = vand.u32 2147483647, %v286
  %vm297 = vcmp.eq.f32.partialorder %v296, 8.507059e+37
  %v298 = vand.u32 %v286, 2147483648
  %v299 = vor.u32 1.1754944e-38, %v298
  %v300 = vsel %vm297, %v299, %v295
  %v301 = vmul.f32 1.0, %v300
  %v302 = vxor.u32 %v280, 2147483648
  %v303 = vmul.f32 %v302, 1.442695
  %v304 = vpow.pop %v303
  %v305 = vadd.f32 %v304, 1.0
  %v306 = vrcp.pop %v305
  %v307 = vmul.f32 %v305, %v306
  %v308 = vsub.f32 1.0, %v307
  %v309 = vmul.f32 %v306, %v308
  %v310 = vadd.f32 %v306, %v309
  %vm311 = vweird.f32 %v305
  %vm312 = vweird.f32 %v306
  %vm313 = vmor %vm311, %vm312
  %v314 = vsel %vm313, %v306, %v310
  %v315 = vand.u32 2147483647, %v305
  %vm316 = vcmp.eq.f32.partialorder %v315, 8.507059e+37
  %v317 = vand.u32 %v305, 2147483648
  %v318 = vor.u32 1.1754944e-38, %v317
  %v319 = vsel %vm316, %v318, %v314
  %v320 = vmul.f32 1.0, %v319
  %v321 = vtanh.pop %v281
  %v322 = vxor.u32 %v282, 2147483648
  %v323 = vmul.f32 %v322, 1.442695
  %v324 = vpow.pop %v323
  %v325 = vadd.f32 %v324, 1.0
  %v326 = vrcp.pop %v325
  %v327 = vmul.f32 %v325, %v326
  %v328 = vsub.f32 1.0, %v327
  %v329 = vmul.f32 %v326, %v328
  %v330 = vadd.f32 %v326, %v329
  %vm331 = vweird.f32 %v325
  %vm332 = vweird.f32 %v326
  %vm333 = vmor %vm331, %vm332
  %v334 = vsel %vm333, %v326, %v330
  %v335 = vand.u32 2147483647, %v325
  %vm336 = vcmp.eq.f32.partialorder %v335, 8.507059e+37
  %v337 = vand.u32 %v325, 2147483648
  %v338 = vor.u32 1.1754944e-38, %v337
  %v339 = vsel %vm336, %v338, %v334
  %v340 = vmul.f32 1.0, %v339
  %v341 = vmul.f32 %v320, %v29
  %v342 = vmul.f32 %v301, %v321
  %v343 = vadd.f32 %v341, %v342
  %v344 = vtanh.pop %v343
  %v345 = vmul.f32 %v340, %v344
  %v346 = vpack.c.bf16 %v345, %v345
  %347 = vst [vmem:[%s4] sm:$0xf] %v346
  %s348 = scalar_lea.vmem %s0, 32
  %v349 = vld [vmem:[%s348] sm:$0xff]
  %v350 = vld [vmem:[%s348 + $0x8] sm:$0xff]
  %v351 = vld [vmem:[%s348 + $0x10] sm:$0xff]
  %v352 = vld [vmem:[%s348 + $0x18] sm:$0xff]
  %v353 = vld [vmem:[%s1] sm:$0xff]
  %v354 = vld [vmem:[%s1 + $0x8] sm:$0xff]
  %v355 = vld [vmem:[%s1 + $0x10] sm:$0xff]
  %v356 = vld [vmem:[%s1 + $0x18] sm:$0xff]
  %v357 = vld [vmem:[%s1 + $0x20] sm:$0xff]
  %v358 = vld [vmem:[%s1 + $0x28] sm:$0xff]
  %v359 = vld [vmem:[%s1 + $0x30] sm:$0xff]
  %v360 = vld [vmem:[%s1 + $0x38] sm:$0xff]
  %v361 = vld [vmem:[%s1 + $0x40] sm:$0xff]
  %v362 = vld [vmem:[%s1 + $0x48] sm:$0xff]
  %v363 = vld [vmem:[%s1 + $0x50] sm:$0xff]
  %v364 = vld [vmem:[%s1 + $0x58] sm:$0xff]
  %v365 = vld [vmem:[%s1 + $0x60] sm:$0xff]
  %v366 = vld [vmem:[%s1 + $0x68] sm:$0xff]
  %v367 = vld [vmem:[%s1 + $0x70] sm:$0xff]
  %v368 = vld [vmem:[%s1 + $0x78] sm:$0xff]
  %v369 = vld [vmem:[%s1 + $0x80] sm:$0xff]
  %v370 = vld [vmem:[%s1 + $0x88] sm:$0xff]
  %v371 = vld [vmem:[%s1 + $0x90] sm:$0xff]
  %v372 = vld [vmem:[%s1 + $0x98] sm:$0xff]
  %v373 = vld [vmem:[%s1 + $0xa0] sm:$0xff]
  %v374 = vld [vmem:[%s1 + $0xa8] sm:$0xff]
  %v375 = vld [vmem:[%s1 + $0xb0] sm:$0xff]
  %v376 = vld [vmem:[%s1 + $0xb8] sm:$0xff]
  %v377 = vld [vmem:[%s1 + $0xc0] sm:$0xff]
  %v378 = vld [vmem:[%s1 + $0xc8] sm:$0xff]
  %v379 = vld [vmem:[%s1 + $0xd0] sm:$0xff]
  %v380 = vld [vmem:[%s1 + $0xd8] sm:$0xff]
  %v381 = vld [vmem:[%s1 + $0xe0] sm:$0xff]
  %v382 = vld [vmem:[%s1 + $0xe8] sm:$0xff]
  %v383 = vld [vmem:[%s1 + $0xf0] sm:$0xff]
  %v384 = vld [vmem:[%s1 + $0xf8] sm:$0xff]
  %v417 = vunpack.c.l.b16 %v353
  %v418 = vunpack.c.h.b16 %v353
  %v419 = vunpack.c.l.b16 %v354
  %v420 = vunpack.c.h.b16 %v354
  %v421 = vunpack.c.l.b16 %v355
  %v422 = vunpack.c.h.b16 %v355
  %v423 = vunpack.c.l.b16 %v356
  %v424 = vunpack.c.h.b16 %v356
  %v425 = vunpack.c.l.b16 %v357
  %v426 = vunpack.c.h.b16 %v357
  %v427 = vunpack.c.l.b16 %v358
  %v428 = vunpack.c.h.b16 %v358
  %v429 = vunpack.c.l.b16 %v359
  %v430 = vunpack.c.h.b16 %v359
  %v431 = vunpack.c.l.b16 %v360
  %v432 = vunpack.c.h.b16 %v360
  %v433 = vunpack.c.l.b16 %v361
  %v434 = vunpack.c.h.b16 %v361
  %v435 = vunpack.c.l.b16 %v362
  %v436 = vunpack.c.h.b16 %v362
  %v437 = vunpack.c.l.b16 %v363
  %v438 = vunpack.c.h.b16 %v363
  %v439 = vunpack.c.l.b16 %v364
  %v440 = vunpack.c.h.b16 %v364
  %v441 = vunpack.c.l.b16 %v365
  %v442 = vunpack.c.h.b16 %v365
  %v443 = vunpack.c.l.b16 %v366
  %v444 = vunpack.c.h.b16 %v366
  %v445 = vunpack.c.l.b16 %v367
  %v446 = vunpack.c.h.b16 %v367
  %v447 = vunpack.c.l.b16 %v368
  %v448 = vunpack.c.h.b16 %v368
  %v449 = vunpack.c.l.b16 %v369
  %v450 = vunpack.c.h.b16 %v369
  %v451 = vunpack.c.l.b16 %v370
  %v452 = vunpack.c.h.b16 %v370
  %v453 = vunpack.c.l.b16 %v371
  %v454 = vunpack.c.h.b16 %v371
  %v455 = vunpack.c.l.b16 %v372
  %v456 = vunpack.c.h.b16 %v372
  %v457 = vunpack.c.l.b16 %v373
  %v458 = vunpack.c.h.b16 %v373
  %v459 = vunpack.c.l.b16 %v374
  %v460 = vunpack.c.h.b16 %v374
  %v461 = vunpack.c.l.b16 %v375
  %v462 = vunpack.c.h.b16 %v375
  %v463 = vunpack.c.l.b16 %v376
  %v464 = vunpack.c.h.b16 %v376
  %v465 = vunpack.c.l.b16 %v377
  %v466 = vunpack.c.h.b16 %v377
  %v467 = vunpack.c.l.b16 %v378
  %v468 = vunpack.c.h.b16 %v378
  %v469 = vunpack.c.l.b16 %v379
  %v470 = vunpack.c.h.b16 %v379
  %v471 = vunpack.c.l.b16 %v380
  %v472 = vunpack.c.h.b16 %v380
  %v473 = vunpack.c.l.b16 %v381
  %v474 = vunpack.c.h.b16 %v381
  %v475 = vunpack.c.l.b16 %v382
  %v476 = vunpack.c.h.b16 %v382
  %v477 = vunpack.c.l.b16 %v383
  %v478 = vunpack.c.h.b16 %v383
  %v479 = vunpack.c.l.b16 %v384
  %v480 = vunpack.c.h.b16 %v384
  %v481 = vpack.c.b16 %v421, %v417
  %v482 = vpack.c.b16 %v422, %v418
  %v483 = vpack.c.b16 %v423, %v419
  %v484 = vpack.c.b16 %v424, %v420
  %v485 = vpack.c.b16 %v429, %v425
  %v486 = vpack.c.b16 %v430, %v426
  %v487 = vpack.c.b16 %v431, %v427
  %v488 = vpack.c.b16 %v432, %v428
  %v489 = vpack.c.b16 %v437, %v433
  %v490 = vpack.c.b16 %v438, %v434
  %v491 = vpack.c.b16 %v439, %v435
  %v492 = vpack.c.b16 %v440, %v436
  %v493 = vpack.c.b16 %v445, %v441
  %v494 = vpack.c.b16 %v446, %v442
  %v495 = vpack.c.b16 %v447, %v443
  %v496 = vpack.c.b16 %v448, %v444
  %v497 = vpack.c.b16 %v453, %v449
  %v498 = vpack.c.b16 %v454, %v450
  %v499 = vpack.c.b16 %v455, %v451
  %v500 = vpack.c.b16 %v456, %v452
  %v501 = vpack.c.b16 %v461, %v457
  %v502 = vpack.c.b16 %v462, %v458
  %v503 = vpack.c.b16 %v463, %v459
  %v504 = vpack.c.b16 %v464, %v460
  %v505 = vpack.c.b16 %v469, %v465
  %v506 = vpack.c.b16 %v470, %v466
  %v507 = vpack.c.b16 %v471, %v467
  %v508 = vpack.c.b16 %v472, %v468
  %v509 = vpack.c.b16 %v477, %v473
  %v510 = vpack.c.b16 %v478, %v474
  %v511 = vpack.c.b16 %v479, %v475
  %v512 = vpack.c.b16 %v480, %v476
  %545 = vmatpush.bf16.msra.mxu0 %v509
  %546 = vmatpush.bf16.msra.mxu0 %v505
  %547 = vmatpush.bf16.msra.mxu0 %v501
  %548 = vmatpush.bf16.msra.mxu0 %v497
  %549 = vmatpush.bf16.msra.mxu0 %v493
  %550 = vmatpush.bf16.msra.mxu0 %v489
  %551 = vmatpush.bf16.msra.mxu0 %v485
  %552 = vmatpush.bf16.msra.mxu0 %v481
  %553 = vmatmul.bf16.gmra.mxu0 %v346
  %v554 = vpop.f32.mrf.mxu0
  %v555 = vadd.f32 0.0, %v554
  %v556 = vpop.f32.mrf.mxu0
  %557 = vdwg.mxu0
  %558 = vmatpush.bf16.msra.mxu0 %v510
  %559 = vmatpush.bf16.msra.mxu0 %v506
  %560 = vmatpush.bf16.msra.mxu0 %v502
  %561 = vmatpush.bf16.msra.mxu0 %v498
  %562 = vmatpush.bf16.msra.mxu0 %v494
  %563 = vmatpush.bf16.msra.mxu0 %v490
  %564 = vmatpush.bf16.msra.mxu0 %v486
  %565 = vmatpush.bf16.msra.mxu0 %v482
  %566 = vmatmul.bf16.gmra.mxu0 %v346
  %v567 = vpop.f32.mrf.mxu0
  %v568 = vadd.f32 0.0, %v567
  %v569 = vpop.f32.mrf.mxu0
  %570 = vdwg.mxu0
  %571 = vmatpush.bf16.msra.mxu0 %v511
  %572 = vmatpush.bf16.msra.mxu0 %v507
  %573 = vmatpush.bf16.msra.mxu0 %v503
  %574 = vmatpush.bf16.msra.mxu0 %v499
  %575 = vmatpush.bf16.msra.mxu0 %v495
  %576 = vmatpush.bf16.msra.mxu0 %v491
  %577 = vmatpush.bf16.msra.mxu0 %v487
  %578 = vmatpush.bf16.msra.mxu0 %v483
  %579 = vmatmul.bf16.gmra.mxu0 %v346
  %v580 = vpop.f32.mrf.mxu0
  %v581 = vadd.f32 0.0, %v580
  %v582 = vpop.f32.mrf.mxu0
  %583 = vdwg.mxu0
  %584 = vmatpush.bf16.msra.mxu0 %v512
  %585 = vmatpush.bf16.msra.mxu0 %v508
  %586 = vmatpush.bf16.msra.mxu0 %v504
  %587 = vmatpush.bf16.msra.mxu0 %v500
  %588 = vmatpush.bf16.msra.mxu0 %v496
  %589 = vmatpush.bf16.msra.mxu0 %v492
  %590 = vmatpush.bf16.msra.mxu0 %v488
  %591 = vmatpush.bf16.msra.mxu0 %v484
  %592 = vmatmul.bf16.gmra.mxu0 %v346
  %v593 = vpop.f32.mrf.mxu0
  %v594 = vadd.f32 0.0, %v593
  %v595 = vpop.f32.mrf.mxu0
  %596 = vdwg.mxu0
  %v597 = vadd.f32 %v349, %v555
  %v598 = vadd.f32 %v350, %v568
  %v599 = vadd.f32 %v351, %v581
  %v600 = vadd.f32 %v352, %v594
  %v601 = vxor.u32 %v597, 2147483648
  %v602 = vmul.f32 %v601, 1.442695
  %v603 = vpow.pop %v602
  %v604 = vadd.f32 %v603, 1.0
  %v605 = vrcp.pop %v604
  %v606 = vmul.f32 %v604, %v605
  %v607 = vsub.f32 1.0, %v606
  %v608 = vmul.f32 %v605, %v607
  %v609 = vadd.f32 %v605, %v608
  %vm610 = vweird.f32 %v604
  %vm611 = vweird.f32 %v605
  %vm612 = vmor %vm610, %vm611
  %v613 = vsel %vm612, %v605, %v609
  %v614 = vand.u32 2147483647, %v604
  %vm615 = vcmp.eq.f32.partialorder %v614, 8.507059e+37
  %v616 = vand.u32 %v604, 2147483648
  %v617 = vor.u32 1.1754944e-38, %v616
  %v618 = vsel %vm615, %v617, %v613
  %v619 = vmul.f32 1.0, %v618
  %v620 = vxor.u32 %v598, 2147483648
  %v621 = vmul.f32 %v620, 1.442695
  %v622 = vpow.pop %v621
  %v623 = vadd.f32 %v622, 1.0
  %v624 = vrcp.pop %v623
  %v625 = vmul.f32 %v623, %v624
  %v626 = vsub.f32 1.0, %v625
  %v627 = vmul.f32 %v624, %v626
  %v628 = vadd.f32 %v624, %v627
  %vm629 = vweird.f32 %v623
  %vm630 = vweird.f32 %v624
  %vm631 = vmor %vm629, %vm630
  %v632 = vsel %vm631, %v624, %v628
  %v633 = vand.u32 2147483647, %v623
  %vm634 = vcmp.eq.f32.partialorder %v633, 8.507059e+37
  %v635 = vand.u32 %v623, 2147483648
  %v636 = vor.u32 1.1754944e-38, %v635
  %v637 = vsel %vm634, %v636, %v632
  %v638 = vmul.f32 1.0, %v637
  %v639 = vtanh.pop %v599
  %v640 = vxor.u32 %v600, 2147483648
  %v641 = vmul.f32 %v640, 1.442695
  %v642 = vpow.pop %v641
  %v643 = vadd.f32 %v642, 1.0
  %v644 = vrcp.pop %v643
  %v645 = vmul.f32 %v643, %v644
  %v646 = vsub.f32 1.0, %v645
  %v647 = vmul.f32 %v644, %v646
  %v648 = vadd.f32 %v644, %v647
  %vm649 = vweird.f32 %v643
  %vm650 = vweird.f32 %v644
  %vm651 = vmor %vm649, %vm650
  %v652 = vsel %vm651, %v644, %v648
  %v653 = vand.u32 2147483647, %v643
  %vm654 = vcmp.eq.f32.partialorder %v653, 8.507059e+37
  %v655 = vand.u32 %v643, 2147483648
  %v656 = vor.u32 1.1754944e-38, %v655
  %v657 = vsel %vm654, %v656, %v652
  %v658 = vmul.f32 1.0, %v657
  %v659 = vmul.f32 %v638, %v343
  %v660 = vmul.f32 %v619, %v639
  %v661 = vadd.f32 %v659, %v660
  %v662 = vtanh.pop %v661
  %v663 = vmul.f32 %v658, %v662
  %v664 = vpack.c.bf16 %v663, %v663
  %s665 = scalar_lea.vmem %s4, 4
  %666 = vst [vmem:[%s665] sm:$0xf] %v664
  %s667 = scalar_lea.vmem %s0, 64
  %v668 = vld [vmem:[%s667] sm:$0xff]
  %v669 = vld [vmem:[%s667 + $0x8] sm:$0xff]
  %v670 = vld [vmem:[%s667 + $0x10] sm:$0xff]
  %v671 = vld [vmem:[%s667 + $0x18] sm:$0xff]
  %v672 = vld [vmem:[%s1] sm:$0xff]
  %v673 = vld [vmem:[%s1 + $0x8] sm:$0xff]
  %v674 = vld [vmem:[%s1 + $0x10] sm:$0xff]
  %v675 = vld [vmem:[%s1 + $0x18] sm:$0xff]
  %v676 = vld [vmem:[%s1 + $0x20] sm:$0xff]
  %v677 = vld [vmem:[%s1 + $0x28] sm:$0xff]
  %v678 = vld [vmem:[%s1 + $0x30] sm:$0xff]
  %v679 = vld [vmem:[%s1 + $0x38] sm:$0xff]
  %v680 = vld [vmem:[%s1 + $0x40] sm:$0xff]
  %v681 = vld [vmem:[%s1 + $0x48] sm:$0xff]
  %v682 = vld [vmem:[%s1 + $0x50] sm:$0xff]
  %v683 = vld [vmem:[%s1 + $0x58] sm:$0xff]
  %v684 = vld [vmem:[%s1 + $0x60] sm:$0xff]
  %v685 = vld [vmem:[%s1 + $0x68] sm:$0xff]
  %v686 = vld [vmem:[%s1 + $0x70] sm:$0xff]
  %v687 = vld [vmem:[%s1 + $0x78] sm:$0xff]
  %v688 = vld [vmem:[%s1 + $0x80] sm:$0xff]
  %v689 = vld [vmem:[%s1 + $0x88] sm:$0xff]
  %v690 = vld [vmem:[%s1 + $0x90] sm:$0xff]
  %v691 = vld [vmem:[%s1 + $0x98] sm:$0xff]
  %v692 = vld [vmem:[%s1 + $0xa0] sm:$0xff]
  %v693 = vld [vmem:[%s1 + $0xa8] sm:$0xff]
  %v694 = vld [vmem:[%s1 + $0xb0] sm:$0xff]
  %v695 = vld [vmem:[%s1 + $0xb8] sm:$0xff]
  %v696 = vld [vmem:[%s1 + $0xc0] sm:$0xff]
  %v697 = vld [vmem:[%s1 + $0xc8] sm:$0xff]
  %v698 = vld [vmem:[%s1 + $0xd0] sm:$0xff]
  %v699 = vld [vmem:[%s1 + $0xd8] sm:$0xff]
  %v700 = vld [vmem:[%s1 + $0xe0] sm:$0xff]
  %v701 = vld [vmem:[%s1 + $0xe8] sm:$0xff]
  %v702 = vld [vmem:[%s1 + $0xf0] sm:$0xff]
  %v703 = vld [vmem:[%s1 + $0xf8] sm:$0xff]
  %v736 = vunpack.c.l.b16 %v672
  %v737 = vunpack.c.h.b16 %v672
  %v738 = vunpack.c.l.b16 %v673
  %v739 = vunpack.c.h.b16 %v673
  %v740 = vunpack.c.l.b16 %v674
  %v741 = vunpack.c.h.b16 %v674
  %v742 = vunpack.c.l.b16 %v675
  %v743 = vunpack.c.h.b16 %v675
  %v744 = vunpack.c.l.b16 %v676
  %v745 = vunpack.c.h.b16 %v676
  %v746 = vunpack.c.l.b16 %v677
  %v747 = vunpack.c.h.b16 %v677
  %v748 = vunpack.c.l.b16 %v678
  %v749 = vunpack.c.h.b16 %v678
  %v750 = vunpack.c.l.b16 %v679
  %v751 = vunpack.c.h.b16 %v679
  %v752 = vunpack.c.l.b16 %v680
  %v753 = vunpack.c.h.b16 %v680
  %v754 = vunpack.c.l.b16 %v681
  %v755 = vunpack.c.h.b16 %v681
  %v756 = vunpack.c.l.b16 %v682
  %v757 = vunpack.c.h.b16 %v682
  %v758 = vunpack.c.l.b16 %v683
  %v759 = vunpack.c.h.b16 %v683
  %v760 = vunpack.c.l.b16 %v684
  %v761 = vunpack.c.h.b16 %v684
  %v762 = vunpack.c.l.b16 %v685
  %v763 = vunpack.c.h.b16 %v685
  %v764 = vunpack.c.l.b16 %v686
  %v765 = vunpack.c.h.b16 %v686
  %v766 = vunpack.c.l.b16 %v687
  %v767 = vunpack.c.h.b16 %v687
  %v768 = vunpack.c.l.b16 %v688
  %v769 = vunpack.c.h.b16 %v688
  %v770 = vunpack.c.l.b16 %v689
  %v771 = vunpack.c.h.b16 %v689
  %v772 = vunpack.c.l.b16 %v690
  %v773 = vunpack.c.h.b16 %v690
  %v774 = vunpack.c.l.b16 %v691
  %v775 = vunpack.c.h.b16 %v691
  %v776 = vunpack.c.l.b16 %v692
  %v777 = vunpack.c.h.b16 %v692
  %v778 = vunpack.c.l.b16 %v693
  %v779 = vunpack.c.h.b16 %v693
  %v780 = vunpack.c.l.b16 %v694
  %v781 = vunpack.c.h.b16 %v694
  %v782 = vunpack.c.l.b16 %v695
  %v783 = vunpack.c.h.b16 %v695
  %v784 = vunpack.c.l.b16 %v696
  %v785 = vunpack.c.h.b16 %v696
  %v786 = vunpack.c.l.b16 %v697
  %v787 = vunpack.c.h.b16 %v697
  %v788 = vunpack.c.l.b16 %v698
  %v789 = vunpack.c.h.b16 %v698
  %v790 = vunpack.c.l.b16 %v699
  %v791 = vunpack.c.h.b16 %v699
  %v792 = vunpack.c.l.b16 %v700
  %v793 = vunpack.c.h.b16 %v700
  %v794 = vunpack.c.l.b16 %v701
  %v795 = vunpack.c.h.b16 %v701
  %v796 = vunpack.c.l.b16 %v702
  %v797 = vunpack.c.h.b16 %v702
  %v798 = vunpack.c.l.b16 %v703
  %v799 = vunpack.c.h.b16 %v703
  %v800 = vpack.c.b16 %v740, %v736
  %v801 = vpack.c.b16 %v741, %v737
  %v802 = vpack.c.b16 %v742, %v738
  %v803 = vpack.c.b16 %v743, %v739
  %v804 = vpack.c.b16 %v748, %v744
  %v805 = vpack.c.b16 %v749, %v745
  %v806 = vpack.c.b16 %v750, %v746
  %v807 = vpack.c.b16 %v751, %v747
  %v808 = vpack.c.b16 %v756, %v752
  %v809 = vpack.c.b16 %v757, %v753
  %v810 = vpack.c.b16 %v758, %v754
  %v811 = vpack.c.b16 %v759, %v755
  %v812 = vpack.c.b16 %v764, %v760
  %v813 = vpack.c.b16 %v765, %v761
  %v814 = vpack.c.b16 %v766, %v762
  %v815 = vpack.c.b16 %v767, %v763
  %v816 = vpack.c.b16 %v772, %v768
  %v817 = vpack.c.b16 %v773, %v769
  %v818 = vpack.c.b16 %v774, %v770
  %v819 = vpack.c.b16 %v775, %v771
  %v820 = vpack.c.b16 %v780, %v776
  %v821 = vpack.c.b16 %v781, %v777
  %v822 = vpack.c.b16 %v782, %v778
  %v823 = vpack.c.b16 %v783, %v779
  %v824 = vpack.c.b16 %v788, %v784
  %v825 = vpack.c.b16 %v789, %v785
  %v826 = vpack.c.b16 %v790, %v786
  %v827 = vpack.c.b16 %v791, %v787
  %v828 = vpack.c.b16 %v796, %v792
  %v829 = vpack.c.b16 %v797, %v793
  %v830 = vpack.c.b16 %v798, %v794
  %v831 = vpack.c.b16 %v799, %v795
  %864 = vmatpush.bf16.msra.mxu0 %v828
  %865 = vmatpush.bf16.msra.mxu0 %v824
  %866 = vmatpush.bf16.msra.mxu0 %v820
  %867 = vmatpush.bf16.msra.mxu0 %v816
  %868 = vmatpush.bf16.msra.mxu0 %v812
  %869 = vmatpush.bf16.msra.mxu0 %v808
  %870 = vmatpush.bf16.msra.mxu0 %v804
  %871 = vmatpush.bf16.msra.mxu0 %v800
  %872 = vmatmul.bf16.gmra.mxu0 %v664
  %v873 = vpop.f32.mrf.mxu0
  %v874 = vadd.f32 0.0, %v873
  %v875 = vpop.f32.mrf.mxu0
  %876 = vdwg.mxu0
  %877 = vmatpush.bf16.msra.mxu0 %v829
  %878 = vmatpush.bf16.msra.mxu0 %v825
  %879 = vmatpush.bf16.msra.mxu0 %v821
  %880 = vmatpush.bf16.msra.mxu0 %v817
  %881 = vmatpush.bf16.msra.mxu0 %v813
  %882 = vmatpush.bf16.msra.mxu0 %v809
  %883 = vmatpush.bf16.msra.mxu0 %v805
  %884 = vmatpush.bf16.msra.mxu0 %v801
  %885 = vmatmul.bf16.gmra.mxu0 %v664
  %v886 = vpop.f32.mrf.mxu0
  %v887 = vadd.f32 0.0, %v886
  %v888 = vpop.f32.mrf.mxu0
  %889 = vdwg.mxu0
  %890 = vmatpush.bf16.msra.mxu0 %v830
  %891 = vmatpush.bf16.msra.mxu0 %v826
  %892 = vmatpush.bf16.msra.mxu0 %v822
  %893 = vmatpush.bf16.msra.mxu0 %v818
  %894 = vmatpush.bf16.msra.mxu0 %v814
  %895 = vmatpush.bf16.msra.mxu0 %v810
  %896 = vmatpush.bf16.msra.mxu0 %v806
  %897 = vmatpush.bf16.msra.mxu0 %v802
  %898 = vmatmul.bf16.gmra.mxu0 %v664
  %v899 = vpop.f32.mrf.mxu0
  %v900 = vadd.f32 0.0, %v899
  %v901 = vpop.f32.mrf.mxu0
  %902 = vdwg.mxu0
  %903 = vmatpush.bf16.msra.mxu0 %v831
  %904 = vmatpush.bf16.msra.mxu0 %v827
  %905 = vmatpush.bf16.msra.mxu0 %v823
  %906 = vmatpush.bf16.msra.mxu0 %v819
  %907 = vmatpush.bf16.msra.mxu0 %v815
  %908 = vmatpush.bf16.msra.mxu0 %v811
  %909 = vmatpush.bf16.msra.mxu0 %v807
  %910 = vmatpush.bf16.msra.mxu0 %v803
  %911 = vmatmul.bf16.gmra.mxu0 %v664
  %v912 = vpop.f32.mrf.mxu0
  %v913 = vadd.f32 0.0, %v912
  %v914 = vpop.f32.mrf.mxu0
  %915 = vdwg.mxu0
  %v916 = vadd.f32 %v668, %v874
  %v917 = vadd.f32 %v669, %v887
  %v918 = vadd.f32 %v670, %v900
  %v919 = vadd.f32 %v671, %v913
  %v920 = vxor.u32 %v916, 2147483648
  %v921 = vmul.f32 %v920, 1.442695
  %v922 = vpow.pop %v921
  %v923 = vadd.f32 %v922, 1.0
  %v924 = vrcp.pop %v923
  %v925 = vmul.f32 %v923, %v924
  %v926 = vsub.f32 1.0, %v925
  %v927 = vmul.f32 %v924, %v926
  %v928 = vadd.f32 %v924, %v927
  %vm929 = vweird.f32 %v923
  %vm930 = vweird.f32 %v924
  %vm931 = vmor %vm929, %vm930
  %v932 = vsel %vm931, %v924, %v928
  %v933 = vand.u32 2147483647, %v923
  %vm934 = vcmp.eq.f32.partialorder %v933, 8.507059e+37
  %v935 = vand.u32 %v923, 2147483648
  %v936 = vor.u32 1.1754944e-38, %v935
  %v937 = vsel %vm934, %v936, %v932
  %v938 = vmul.f32 1.0, %v937
  %v939 = vxor.u32 %v917, 2147483648
  %v940 = vmul.f32 %v939, 1.442695
  %v941 = vpow.pop %v940
  %v942 = vadd.f32 %v941, 1.0
  %v943 = vrcp.pop %v942
  %v944 = vmul.f32 %v942, %v943
  %v945 = vsub.f32 1.0, %v944
  %v946 = vmul.f32 %v943, %v945
  %v947 = vadd.f32 %v943, %v946
  %vm948 = vweird.f32 %v942
  %vm949 = vweird.f32 %v943
  %vm950 = vmor %vm948, %vm949
  %v951 = vsel %vm950, %v943, %v947
  %v952 = vand.u32 2147483647, %v942
  %vm953 = vcmp.eq.f32.partialorder %v952, 8.507059e+37
  %v954 = vand.u32 %v942, 2147483648
  %v955 = vor.u32 1.1754944e-38, %v954
  %v956 = vsel %vm953, %v955, %v951
  %v957 = vmul.f32 1.0, %v956
  %v958 = vtanh.pop %v918
  %v959 = vxor.u32 %v919, 2147483648
  %v960 = vmul.f32 %v959, 1.442695
  %v961 = vpow.pop %v960
  %v962 = vadd.f32 %v961, 1.0
  %v963 = vrcp.pop %v962
  %v964 = vmul.f32 %v962, %v963
  %v965 = vsub.f32 1.0, %v964
  %v966 = vmul.f32 %v963, %v965
  %v967 = vadd.f32 %v963, %v966
  %vm968 = vweird.f32 %v962
  %vm969 = vweird.f32 %v963
  %vm970 = vmor %vm968, %vm969
  %v971 = vsel %vm970, %v963, %v967
  %v972 = vand.u32 2147483647, %v962
  %vm973 = vcmp.eq.f32.partialorder %v972, 8.507059e+37
  %v974 = vand.u32 %v962, 2147483648
  %v975 = vor.u32 1.1754944e-38, %v974
  %v976 = vsel %vm973, %v975, %v971
  %v977 = vmul.f32 1.0, %v976
  %v978 = vmul.f32 %v957, %v661
  %v979 = vmul.f32 %v938, %v958
  %v980 = vadd.f32 %v978, %v979
  %v981 = vtanh.pop %v980
  %v982 = vmul.f32 %v977, %v981
  %v983 = vpack.c.bf16 %v982, %v982
  %s984 = scalar_lea.vmem %s4, 8
  %985 = vst [vmem:[%s984] sm:$0xf] %v983
  %s986 = scalar_lea.vmem %s0, 96
  %v987 = vld [vmem:[%s986] sm:$0xff]
  %v988 = vld [vmem:[%s986 + $0x8] sm:$0xff]
  %v989 = vld [vmem:[%s986 + $0x10] sm:$0xff]
  %v990 = vld [vmem:[%s986 + $0x18] sm:$0xff]
  %v991 = vld [vmem:[%s1] sm:$0xff]
  %v992 = vld [vmem:[%s1 + $0x8] sm:$0xff]
  %v993 = vld [vmem:[%s1 + $0x10] sm:$0xff]
  %v994 = vld [vmem:[%s1 + $0x18] sm:$0xff]
  %v995 = vld [vmem:[%s1 + $0x20] sm:$0xff]
  %v996 = vld [vmem:[%s1 + $0x28] sm:$0xff]
  %v997 = vld [vmem:[%s1 + $0x30] sm:$0xff]
  %v998 = vld [vmem:[%s1 + $0x38] sm:$0xff]
  %v999 = vld [vmem:[%s1 + $0x40] sm:$0xff]
  %v1000 = vld [vmem:[%s1 + $0x48] sm:$0xff]
  %v1001 = vld [vmem:[%s1 + $0x50] sm:$0xff]
  %v1002 = vld [vmem:[%s1 + $0x58] sm:$0xff]
  %v1003 = vld [vmem:[%s1 + $0x60] sm:$0xff]
  %v1004 = vld [vmem:[%s1 + $0x68] sm:$0xff]
  %v1005 = vld [vmem:[%s1 + $0x70] sm:$0xff]
  %v1006 = vld [vmem:[%s1 + $0x78] sm:$0xff]
  %v1007 = vld [vmem:[%s1 + $0x80] sm:$0xff]
  %v1008 = vld [vmem:[%s1 + $0x88] sm:$0xff]
  %v1009 = vld [vmem:[%s1 + $0x90] sm:$0xff]
  %v1010 = vld [vmem:[%s1 + $0x98] sm:$0xff]
  %v1011 = vld [vmem:[%s1 + $0xa0] sm:$0xff]
  %v1012 = vld [vmem:[%s1 + $0xa8] sm:$0xff]
  %v1013 = vld [vmem:[%s1 + $0xb0] sm:$0xff]
  %v1014 = vld [vmem:[%s1 + $0xb8] sm:$0xff]
  %v1015 = vld [vmem:[%s1 + $0xc0] sm:$0xff]
  %v1016 = vld [vmem:[%s1 + $0xc8] sm:$0xff]
  %v1017 = vld [vmem:[%s1 + $0xd0] sm:$0xff]
  %v1018 = vld [vmem:[%s1 + $0xd8] sm:$0xff]
  %v1019 = vld [vmem:[%s1 + $0xe0] sm:$0xff]
  %v1020 = vld [vmem:[%s1 + $0xe8] sm:$0xff]
  %v1021 = vld [vmem:[%s1 + $0xf0] sm:$0xff]
  %v1022 = vld [vmem:[%s1 + $0xf8] sm:$0xff]
  %v1055 = vunpack.c.l.b16 %v991
  %v1056 = vunpack.c.h.b16 %v991
  %v1057 = vunpack.c.l.b16 %v992
  %v1058 = vunpack.c.h.b16 %v992
  %v1059 = vunpack.c.l.b16 %v993
  %v1060 = vunpack.c.h.b16 %v993
  %v1061 = vunpack.c.l.b16 %v994
  %v1062 = vunpack.c.h.b16 %v994
  %v1063 = vunpack.c.l.b16 %v995
  %v1064 = vunpack.c.h.b16 %v995
  %v1065 = vunpack.c.l.b16 %v996
  %v1066 = vunpack.c.h.b16 %v996
  %v1067 = vunpack.c.l.b16 %v997
  %v1068 = vunpack.c.h.b16 %v997
  %v1069 = vunpack.c.l.b16 %v998
  %v1070 = vunpack.c.h.b16 %v998
  %v1071 = vunpack.c.l.b16 %v999
  %v1072 = vunpack.c.h.b16 %v999
  %v1073 = vunpack.c.l.b16 %v1000
  %v1074 = vunpack.c.h.b16 %v1000
  %v1075 = vunpack.c.l.b16 %v1001
  %v1076 = vunpack.c.h.b16 %v1001
  %v1077 = vunpack.c.l.b16 %v1002
  %v1078 = vunpack.c.h.b16 %v1002
  %v1079 = vunpack.c.l.b16 %v1003
  %v1080 = vunpack.c.h.b16 %v1003
  %v1081 = vunpack.c.l.b16 %v1004
  %v1082 = vunpack.c.h.b16 %v1004
  %v1083 = vunpack.c.l.b16 %v1005
  %v1084 = vunpack.c.h.b16 %v1005
  %v1085 = vunpack.c.l.b16 %v1006
  %v1086 = vunpack.c.h.b16 %v1006
  %v1087 = vunpack.c.l.b16 %v1007
  %v1088 = vunpack.c.h.b16 %v1007
  %v1089 = vunpack.c.l.b16 %v1008
  %v1090 = vunpack.c.h.b16 %v1008
  %v1091 = vunpack.c.l.b16 %v1009
  %v1092 = vunpack.c.h.b16 %v1009
  %v1093 = vunpack.c.l.b16 %v1010
  %v1094 = vunpack.c.h.b16 %v1010
  %v1095 = vunpack.c.l.b16 %v1011
  %v1096 = vunpack.c.h.b16 %v1011
  %v1097 = vunpack.c.l.b16 %v1012
  %v1098 = vunpack.c.h.b16 %v1012
  %v1099 = vunpack.c.l.b16 %v1013
  %v1100 = vunpack.c.h.b16 %v1013
  %v1101 = vunpack.c.l.b16 %v1014
  %v1102 = vunpack.c.h.b16 %v1014
  %v1103 = vunpack.c.l.b16 %v1015
  %v1104 = vunpack.c.h.b16 %v1015
  %v1105 = vunpack.c.l.b16 %v1016
  %v1106 = vunpack.c.h.b16 %v1016
  %v1107 = vunpack.c.l.b16 %v1017
  %v1108 = vunpack.c.h.b16 %v1017
  %v1109 = vunpack.c.l.b16 %v1018
  %v1110 = vunpack.c.h.b16 %v1018
  %v1111 = vunpack.c.l.b16 %v1019
  %v1112 = vunpack.c.h.b16 %v1019
  %v1113 = vunpack.c.l.b16 %v1020
  %v1114 = vunpack.c.h.b16 %v1020
  %v1115 = vunpack.c.l.b16 %v1021
  %v1116 = vunpack.c.h.b16 %v1021
  %v1117 = vunpack.c.l.b16 %v1022
  %v1118 = vunpack.c.h.b16 %v1022
  %v1119 = vpack.c.b16 %v1059, %v1055
  %v1120 = vpack.c.b16 %v1060, %v1056
  %v1121 = vpack.c.b16 %v1061, %v1057
  %v1122 = vpack.c.b16 %v1062, %v1058
  %v1123 = vpack.c.b16 %v1067, %v1063
  %v1124 = vpack.c.b16 %v1068, %v1064
  %v1125 = vpack.c.b16 %v1069, %v1065
  %v1126 = vpack.c.b16 %v1070, %v1066
  %v1127 = vpack.c.b16 %v1075, %v1071
  %v1128 = vpack.c.b16 %v1076, %v1072
  %v1129 = vpack.c.b16 %v1077, %v1073
  %v1130 = vpack.c.b16 %v1078, %v1074
  %v1131 = vpack.c.b16 %v1083, %v1079
  %v1132 = vpack.c.b16 %v1084, %v1080
  %v1133 = vpack.c.b16 %v1085, %v1081
  %v1134 = vpack.c.b16 %v1086, %v1082
  %v1135 = vpack.c.b16 %v1091, %v1087
  %v1136 = vpack.c.b16 %v1092, %v1088
  %v1137 = vpack.c.b16 %v1093, %v1089
  %v1138 = vpack.c.b16 %v1094, %v1090
  %v1139 = vpack.c.b16 %v1099, %v1095
  %v1140 = vpack.c.b16 %v1100, %v1096
  %v1141 = vpack.c.b16 %v1101, %v1097
  %v1142 = vpack.c.b16 %v1102, %v1098
  %v1143 = vpack.c.b16 %v1107, %v1103
  %v1144 = vpack.c.b16 %v1108, %v1104
  %v1145 = vpack.c.b16 %v1109, %v1105
  %v1146 = vpack.c.b16 %v1110, %v1106
  %v1147 = vpack.c.b16 %v1115, %v1111
  %v1148 = vpack.c.b16 %v1116, %v1112
  %v1149 = vpack.c.b16 %v1117, %v1113
  %v1150 = vpack.c.b16 %v1118, %v1114
  %1183 = vmatpush.bf16.msra.mxu0 %v1147
  %1184 = vmatpush.bf16.msra.mxu0 %v1143
  %1185 = vmatpush.bf16.msra.mxu0 %v1139
  %1186 = vmatpush.bf16.msra.mxu0 %v1135
  %1187 = vmatpush.bf16.msra.mxu0 %v1131
  %1188 = vmatpush.bf16.msra.mxu0 %v1127
  %1189 = vmatpush.bf16.msra.mxu0 %v1123
  %1190 = vmatpush.bf16.msra.mxu0 %v1119
  %1191 = vmatmul.bf16.gmra.mxu0 %v983
  %v1192 = vpop.f32.mrf.mxu0
  %v1193 = vadd.f32 0.0, %v1192
  %v1194 = vpop.f32.mrf.mxu0
  %1195 = vdwg.mxu0
  %1196 = vmatpush.bf16.msra.mxu0 %v1148
  %1197 = vmatpush.bf16.msra.mxu0 %v1144
  %1198 = vmatpush.bf16.msra.mxu0 %v1140
  %1199 = vmatpush.bf16.msra.mxu0 %v1136
  %1200 = vmatpush.bf16.msra.mxu0 %v1132
  %1201 = vmatpush.bf16.msra.mxu0 %v1128
  %1202 = vmatpush.bf16.msra.mxu0 %v1124
  %1203 = vmatpush.bf16.msra.mxu0 %v1120
  %1204 = vmatmul.bf16.gmra.mxu0 %v983
  %v1205 = vpop.f32.mrf.mxu0
  %v1206 = vadd.f32 0.0, %v1205
  %v1207 = vpop.f32.mrf.mxu0
  %1208 = vdwg.mxu0
  %1209 = vmatpush.bf16.msra.mxu0 %v1149
  %1210 = vmatpush.bf16.msra.mxu0 %v1145
  %1211 = vmatpush.bf16.msra.mxu0 %v1141
  %1212 = vmatpush.bf16.msra.mxu0 %v1137
  %1213 = vmatpush.bf16.msra.mxu0 %v1133
  %1214 = vmatpush.bf16.msra.mxu0 %v1129
  %1215 = vmatpush.bf16.msra.mxu0 %v1125
  %1216 = vmatpush.bf16.msra.mxu0 %v1121
  %1217 = vmatmul.bf16.gmra.mxu0 %v983
  %v1218 = vpop.f32.mrf.mxu0
  %v1219 = vadd.f32 0.0, %v1218
  %v1220 = vpop.f32.mrf.mxu0
  %1221 = vdwg.mxu0
  %1222 = vmatpush.bf16.msra.mxu0 %v1150
  %1223 = vmatpush.bf16.msra.mxu0 %v1146
  %1224 = vmatpush.bf16.msra.mxu0 %v1142
  %1225 = vmatpush.bf16.msra.mxu0 %v1138
  %1226 = vmatpush.bf16.msra.mxu0 %v1134
  %1227 = vmatpush.bf16.msra.mxu0 %v1130
  %1228 = vmatpush.bf16.msra.mxu0 %v1126
  %1229 = vmatpush.bf16.msra.mxu0 %v1122
  %1230 = vmatmul.bf16.gmra.mxu0 %v983
  %v1231 = vpop.f32.mrf.mxu0
  %v1232 = vadd.f32 0.0, %v1231
  %v1233 = vpop.f32.mrf.mxu0
  %1234 = vdwg.mxu0
  %v1235 = vadd.f32 %v987, %v1193
  %v1236 = vadd.f32 %v988, %v1206
  %v1237 = vadd.f32 %v989, %v1219
  %v1238 = vadd.f32 %v990, %v1232
  %v1239 = vxor.u32 %v1235, 2147483648
  %v1240 = vmul.f32 %v1239, 1.442695
  %v1241 = vpow.pop %v1240
  %v1242 = vadd.f32 %v1241, 1.0
  %v1243 = vrcp.pop %v1242
  %v1244 = vmul.f32 %v1242, %v1243
  %v1245 = vsub.f32 1.0, %v1244
  %v1246 = vmul.f32 %v1243, %v1245
  %v1247 = vadd.f32 %v1243, %v1246
  %vm1248 = vweird.f32 %v1242
  %vm1249 = vweird.f32 %v1243
  %vm1250 = vmor %vm1248, %vm1249
  %v1251 = vsel %vm1250, %v1243, %v1247
  %v1252 = vand.u32 2147483647, %v1242
  %vm1253 = vcmp.eq.f32.partialorder %v1252, 8.507059e+37
  %v1254 = vand.u32 %v1242, 2147483648
  %v1255 = vor.u32 1.1754944e-38, %v1254
  %v1256 = vsel %vm1253, %v1255, %v1251
  %v1257 = vmul.f32 1.0, %v1256
  %v1258 = vxor.u32 %v1236, 2147483648
  %v1259 = vmul.f32 %v1258, 1.442695
  %v1260 = vpow.pop %v1259
  %v1261 = vadd.f32 %v1260, 1.0
  %v1262 = vrcp.pop %v1261
  %v1263 = vmul.f32 %v1261, %v1262
  %v1264 = vsub.f32 1.0, %v1263
  %v1265 = vmul.f32 %v1262, %v1264
  %v1266 = vadd.f32 %v1262, %v1265
  %vm1267 = vweird.f32 %v1261
  %vm1268 = vweird.f32 %v1262
  %vm1269 = vmor %vm1267, %vm1268
  %v1270 = vsel %vm1269, %v1262, %v1266
  %v1271 = vand.u32 2147483647, %v1261
  %vm1272 = vcmp.eq.f32.partialorder %v1271, 8.507059e+37
  %v1273 = vand.u32 %v1261, 2147483648
  %v1274 = vor.u32 1.1754944e-38, %v1273
  %v1275 = vsel %vm1272, %v1274, %v1270
  %v1276 = vmul.f32 1.0, %v1275
  %v1277 = vtanh.pop %v1237
  %v1278 = vxor.u32 %v1238, 2147483648
  %v1279 = vmul.f32 %v1278, 1.442695
  %v1280 = vpow.pop %v1279
  %v1281 = vadd.f32 %v1280, 1.0
  %v1282 = vrcp.pop %v1281
  %v1283 = vmul.f32 %v1281, %v1282
  %v1284 = vsub.f32 1.0, %v1283
  %v1285 = vmul.f32 %v1282, %v1284
  %v1286 = vadd.f32 %v1282, %v1285
  %vm1287 = vweird.f32 %v1281
  %vm1288 = vweird.f32 %v1282
  %vm1289 = vmor %vm1287, %vm1288
  %v1290 = vsel %vm1289, %v1282, %v1286
  %v1291 = vand.u32 2147483647, %v1281
  %vm1292 = vcmp.eq.f32.partialorder %v1291, 8.507059e+37
  %v1293 = vand.u32 %v1281, 2147483648
  %v1294 = vor.u32 1.1754944e-38, %v1293
  %v1295 = vsel %vm1292, %v1294, %v1290
  %v1296 = vmul.f32 1.0, %v1295
  %v1297 = vmul.f32 %v1276, %v980
  %v1298 = vmul.f32 %v1257, %v1277
  %v1299 = vadd.f32 %v1297, %v1298
  %v1300 = vtanh.pop %v1299
  %v1301 = vmul.f32 %v1296, %v1300
  %v1302 = vpack.c.bf16 %v1301, %v1301
  %s1303 = scalar_lea.vmem %s4, 12
  %1304 = vst [vmem:[%s1303] sm:$0xf] %v1302
  %s1305 = scalar_lea.vmem %s0, 128
  %v1306 = vld [vmem:[%s1305] sm:$0xff]
  %v1307 = vld [vmem:[%s1305 + $0x8] sm:$0xff]
  %v1308 = vld [vmem:[%s1305 + $0x10] sm:$0xff]
  %v1309 = vld [vmem:[%s1305 + $0x18] sm:$0xff]
  %v1310 = vld [vmem:[%s1] sm:$0xff]
  %v1311 = vld [vmem:[%s1 + $0x8] sm:$0xff]
  %v1312 = vld [vmem:[%s1 + $0x10] sm:$0xff]
  %v1313 = vld [vmem:[%s1 + $0x18] sm:$0xff]
  %v1314 = vld [vmem:[%s1 + $0x20] sm:$0xff]
  %v1315 = vld [vmem:[%s1 + $0x28] sm:$0xff]
  %v1316 = vld [vmem:[%s1 + $0x30] sm:$0xff]
  %v1317 = vld [vmem:[%s1 + $0x38] sm:$0xff]
  %v1318 = vld [vmem:[%s1 + $0x40] sm:$0xff]
  %v1319 = vld [vmem:[%s1 + $0x48] sm:$0xff]
  %v1320 = vld [vmem:[%s1 + $0x50] sm:$0xff]
  %v1321 = vld [vmem:[%s1 + $0x58] sm:$0xff]
  %v1322 = vld [vmem:[%s1 + $0x60] sm:$0xff]
  %v1323 = vld [vmem:[%s1 + $0x68] sm:$0xff]
  %v1324 = vld [vmem:[%s1 + $0x70] sm:$0xff]
  %v1325 = vld [vmem:[%s1 + $0x78] sm:$0xff]
  %v1326 = vld [vmem:[%s1 + $0x80] sm:$0xff]
  %v1327 = vld [vmem:[%s1 + $0x88] sm:$0xff]
  %v1328 = vld [vmem:[%s1 + $0x90] sm:$0xff]
  %v1329 = vld [vmem:[%s1 + $0x98] sm:$0xff]
  %v1330 = vld [vmem:[%s1 + $0xa0] sm:$0xff]
  %v1331 = vld [vmem:[%s1 + $0xa8] sm:$0xff]
  %v1332 = vld [vmem:[%s1 + $0xb0] sm:$0xff]
  %v1333 = vld [vmem:[%s1 + $0xb8] sm:$0xff]
  %v1334 = vld [vmem:[%s1 + $0xc0] sm:$0xff]
  %v1335 = vld [vmem:[%s1 + $0xc8] sm:$0xff]
  %v1336 = vld [vmem:[%s1 + $0xd0] sm:$0xff]
  %v1337 = vld [vmem:[%s1 + $0xd8] sm:$0xff]
  %v1338 = vld [vmem:[%s1 + $0xe0] sm:$0xff]
  %v1339 = vld [vmem:[%s1 + $0xe8] sm:$0xff]
  %v1340 = vld [vmem:[%s1 + $0xf0] sm:$0xff]
  %v1341 = vld [vmem:[%s1 + $0xf8] sm:$0xff]
  %v1374 = vunpack.c.l.b16 %v1310
  %v1375 = vunpack.c.h.b16 %v1310
  %v1376 = vunpack.c.l.b16 %v1311
  %v1377 = vunpack.c.h.b16 %v1311
  %v1378 = vunpack.c.l.b16 %v1312
  %v1379 = vunpack.c.h.b16 %v1312
  %v1380 = vunpack.c.l.b16 %v1313
  %v1381 = vunpack.c.h.b16 %v1313
  %v1382 = vunpack.c.l.b16 %v1314
  %v1383 = vunpack.c.h.b16 %v1314
  %v1384 = vunpack.c.l.b16 %v1315
  %v1385 = vunpack.c.h.b16 %v1315
  %v1386 = vunpack.c.l.b16 %v1316
  %v1387 = vunpack.c.h.b16 %v1316
  %v1388 = vunpack.c.l.b16 %v1317
  %v1389 = vunpack.c.h.b16 %v1317
  %v1390 = vunpack.c.l.b16 %v1318
  %v1391 = vunpack.c.h.b16 %v1318
  %v1392 = vunpack.c.l.b16 %v1319
  %v1393 = vunpack.c.h.b16 %v1319
  %v1394 = vunpack.c.l.b16 %v1320
  %v1395 = vunpack.c.h.b16 %v1320
  %v1396 = vunpack.c.l.b16 %v1321
  %v1397 = vunpack.c.h.b16 %v1321
  %v1398 = vunpack.c.l.b16 %v1322
  %v1399 = vunpack.c.h.b16 %v1322
  %v1400 = vunpack.c.l.b16 %v1323
  %v1401 = vunpack.c.h.b16 %v1323
  %v1402 = vunpack.c.l.b16 %v1324
  %v1403 = vunpack.c.h.b16 %v1324
  %v1404 = vunpack.c.l.b16 %v1325
  %v1405 = vunpack.c.h.b16 %v1325
  %v1406 = vunpack.c.l.b16 %v1326
  %v1407 = vunpack.c.h.b16 %v1326
  %v1408 = vunpack.c.l.b16 %v1327
  %v1409 = vunpack.c.h.b16 %v1327
  %v1410 = vunpack.c.l.b16 %v1328
  %v1411 = vunpack.c.h.b16 %v1328
  %v1412 = vunpack.c.l.b16 %v1329
  %v1413 = vunpack.c.h.b16 %v1329
  %v1414 = vunpack.c.l.b16 %v1330
  %v1415 = vunpack.c.h.b16 %v1330
  %v1416 = vunpack.c.l.b16 %v1331
  %v1417 = vunpack.c.h.b16 %v1331
  %v1418 = vunpack.c.l.b16 %v1332
  %v1419 = vunpack.c.h.b16 %v1332
  %v1420 = vunpack.c.l.b16 %v1333
  %v1421 = vunpack.c.h.b16 %v1333
  %v1422 = vunpack.c.l.b16 %v1334
  %v1423 = vunpack.c.h.b16 %v1334
  %v1424 = vunpack.c.l.b16 %v1335
  %v1425 = vunpack.c.h.b16 %v1335
  %v1426 = vunpack.c.l.b16 %v1336
  %v1427 = vunpack.c.h.b16 %v1336
  %v1428 = vunpack.c.l.b16 %v1337
  %v1429 = vunpack.c.h.b16 %v1337
  %v1430 = vunpack.c.l.b16 %v1338
  %v1431 = vunpack.c.h.b16 %v1338
  %v1432 = vunpack.c.l.b16 %v1339
  %v1433 = vunpack.c.h.b16 %v1339
  %v1434 = vunpack.c.l.b16 %v1340
  %v1435 = vunpack.c.h.b16 %v1340
  %v1436 = vunpack.c.l.b16 %v1341
  %v1437 = vunpack.c.h.b16 %v1341
  %v1438 = vpack.c.b16 %v1378, %v1374
  %v1439 = vpack.c.b16 %v1379, %v1375
  %v1440 = vpack.c.b16 %v1380, %v1376
  %v1441 = vpack.c.b16 %v1381, %v1377
  %v1442 = vpack.c.b16 %v1386, %v1382
  %v1443 = vpack.c.b16 %v1387, %v1383
  %v1444 = vpack.c.b16 %v1388, %v1384
  %v1445 = vpack.c.b16 %v1389, %v1385
  %v1446 = vpack.c.b16 %v1394, %v1390
  %v1447 = vpack.c.b16 %v1395, %v1391
  %v1448 = vpack.c.b16 %v1396, %v1392
  %v1449 = vpack.c.b16 %v1397, %v1393
  %v1450 = vpack.c.b16 %v1402, %v1398
  %v1451 = vpack.c.b16 %v1403, %v1399
  %v1452 = vpack.c.b16 %v1404, %v1400
  %v1453 = vpack.c.b16 %v1405, %v1401
  %v1454 = vpack.c.b16 %v1410, %v1406
  %v1455 = vpack.c.b16 %v1411, %v1407
  %v1456 = vpack.c.b16 %v1412, %v1408
  %v1457 = vpack.c.b16 %v1413, %v1409
  %v1458 = vpack.c.b16 %v1418, %v1414
  %v1459 = vpack.c.b16 %v1419, %v1415
  %v1460 = vpack.c.b16 %v1420, %v1416
  %v1461 = vpack.c.b16 %v1421, %v1417
  %v1462 = vpack.c.b16 %v1426, %v1422
  %v1463 = vpack.c.b16 %v1427, %v1423
  %v1464 = vpack.c.b16 %v1428, %v1424
  %v1465 = vpack.c.b16 %v1429, %v1425
  %v1466 = vpack.c.b16 %v1434, %v1430
  %v1467 = vpack.c.b16 %v1435, %v1431
  %v1468 = vpack.c.b16 %v1436, %v1432
  %v1469 = vpack.c.b16 %v1437, %v1433
  %1502 = vmatpush.bf16.msra.mxu0 %v1466
  %1503 = vmatpush.bf16.msra.mxu0 %v1462
  %1504 = vmatpush.bf16.msra.mxu0 %v1458
  %1505 = vmatpush.bf16.msra.mxu0 %v1454
  %1506 = vmatpush.bf16.msra.mxu0 %v1450
  %1507 = vmatpush.bf16.msra.mxu0 %v1446
  %1508 = vmatpush.bf16.msra.mxu0 %v1442
  %1509 = vmatpush.bf16.msra.mxu0 %v1438
  %1510 = vmatmul.bf16.gmra.mxu0 %v1302
  %v1511 = vpop.f32.mrf.mxu0
  %v1512 = vadd.f32 0.0, %v1511
  %v1513 = vpop.f32.mrf.mxu0
  %1514 = vdwg.mxu0
  %1515 = vmatpush.bf16.msra.mxu0 %v1467
  %1516 = vmatpush.bf16.msra.mxu0 %v1463
  %1517 = vmatpush.bf16.msra.mxu0 %v1459
  %1518 = vmatpush.bf16.msra.mxu0 %v1455
  %1519 = vmatpush.bf16.msra.mxu0 %v1451
  %1520 = vmatpush.bf16.msra.mxu0 %v1447
  %1521 = vmatpush.bf16.msra.mxu0 %v1443
  %1522 = vmatpush.bf16.msra.mxu0 %v1439
  %1523 = vmatmul.bf16.gmra.mxu0 %v1302
  %v1524 = vpop.f32.mrf.mxu0
  %v1525 = vadd.f32 0.0, %v1524
  %v1526 = vpop.f32.mrf.mxu0
  %1527 = vdwg.mxu0
  %1528 = vmatpush.bf16.msra.mxu0 %v1468
  %1529 = vmatpush.bf16.msra.mxu0 %v1464
  %1530 = vmatpush.bf16.msra.mxu0 %v1460
  %1531 = vmatpush.bf16.msra.mxu0 %v1456
  %1532 = vmatpush.bf16.msra.mxu0 %v1452
  %1533 = vmatpush.bf16.msra.mxu0 %v1448
  %1534 = vmatpush.bf16.msra.mxu0 %v1444
  %1535 = vmatpush.bf16.msra.mxu0 %v1440
  %1536 = vmatmul.bf16.gmra.mxu0 %v1302
  %v1537 = vpop.f32.mrf.mxu0
  %v1538 = vadd.f32 0.0, %v1537
  %v1539 = vpop.f32.mrf.mxu0
  %1540 = vdwg.mxu0
  %1541 = vmatpush.bf16.msra.mxu0 %v1469
  %1542 = vmatpush.bf16.msra.mxu0 %v1465
  %1543 = vmatpush.bf16.msra.mxu0 %v1461
  %1544 = vmatpush.bf16.msra.mxu0 %v1457
  %1545 = vmatpush.bf16.msra.mxu0 %v1453
  %1546 = vmatpush.bf16.msra.mxu0 %v1449
  %1547 = vmatpush.bf16.msra.mxu0 %v1445
  %1548 = vmatpush.bf16.msra.mxu0 %v1441
  %1549 = vmatmul.bf16.gmra.mxu0 %v1302
  %v1550 = vpop.f32.mrf.mxu0
  %v1551 = vadd.f32 0.0, %v1550
  %v1552 = vpop.f32.mrf.mxu0
  %1553 = vdwg.mxu0
  %v1554 = vadd.f32 %v1306, %v1512
  %v1555 = vadd.f32 %v1307, %v1525
  %v1556 = vadd.f32 %v1308, %v1538
  %v1557 = vadd.f32 %v1309, %v1551
  %v1558 = vxor.u32 %v1554, 2147483648
  %v1559 = vmul.f32 %v1558, 1.442695
  %v1560 = vpow.pop %v1559
  %v1561 = vadd.f32 %v1560, 1.0
  %v1562 = vrcp.pop %v1561
  %v1563 = vmul.f32 %v1561, %v1562
  %v1564 = vsub.f32 1.0, %v1563
  %v1565 = vmul.f32 %v1562, %v1564
  %v1566 = vadd.f32 %v1562, %v1565
  %vm1567 = vweird.f32 %v1561
  %vm1568 = vweird.f32 %v1562
  %vm1569 = vmor %vm1567, %vm1568
  %v1570 = vsel %vm1569, %v1562, %v1566
  %v1571 = vand.u32 2147483647, %v1561
  %vm1572 = vcmp.eq.f32.partialorder %v1571, 8.507059e+37
  %v1573 = vand.u32 %v1561, 2147483648
  %v1574 = vor.u32 1.1754944e-38, %v1573
  %v1575 = vsel %vm1572, %v1574, %v1570
  %v1576 = vmul.f32 1.0, %v1575
  %v1577 = vxor.u32 %v1555, 2147483648
  %v1578 = vmul.f32 %v1577, 1.442695
  %v1579 = vpow.pop %v1578
  %v1580 = vadd.f32 %v1579, 1.0
  %v1581 = vrcp.pop %v1580
  %v1582 = vmul.f32 %v1580, %v1581
  %v1583 = vsub.f32 1.0, %v1582
  %v1584 = vmul.f32 %v1581, %v1583
  %v1585 = vadd.f32 %v1581, %v1584
  %vm1586 = vweird.f32 %v1580
  %vm1587 = vweird.f32 %v1581
  %vm1588 = vmor %vm1586, %vm1587
  %v1589 = vsel %vm1588, %v1581, %v1585
  %v1590 = vand.u32 2147483647, %v1580
  %vm1591 = vcmp.eq.f32.partialorder %v1590, 8.507059e+37
  %v1592 = vand.u32 %v1580, 2147483648
  %v1593 = vor.u32 1.1754944e-38, %v1592
  %v1594 = vsel %vm1591, %v1593, %v1589
  %v1595 = vmul.f32 1.0, %v1594
  %v1596 = vtanh.pop %v1556
  %v1597 = vxor.u32 %v1557, 2147483648
  %v1598 = vmul.f32 %v1597, 1.442695
  %v1599 = vpow.pop %v1598
  %v1600 = vadd.f32 %v1599, 1.0
  %v1601 = vrcp.pop %v1600
  %v1602 = vmul.f32 %v1600, %v1601
  %v1603 = vsub.f32 1.0, %v1602
  %v1604 = vmul.f32 %v1601, %v1603
  %v1605 = vadd.f32 %v1601, %v1604
  %vm1606 = vweird.f32 %v1600
  %vm1607 = vweird.f32 %v1601
  %vm1608 = vmor %vm1606, %vm1607
  %v1609 = vsel %vm1608, %v1601, %v1605
  %v1610 = vand.u32 2147483647, %v1600
  %vm1611 = vcmp.eq.f32.partialorder %v1610, 8.507059e+37
  %v1612 = vand.u32 %v1600, 2147483648
  %v1613 = vor.u32 1.1754944e-38, %v1612
  %v1614 = vsel %vm1611, %v1613, %v1609
  %v1615 = vmul.f32 1.0, %v1614
  %v1616 = vmul.f32 %v1595, %v1299
  %v1617 = vmul.f32 %v1576, %v1596
  %v1618 = vadd.f32 %v1616, %v1617
  %v1619 = vtanh.pop %v1618
  %v1620 = vmul.f32 %v1615, %v1619
  %v1621 = vpack.c.bf16 %v1620, %v1620
  %s1622 = scalar_lea.vmem %s4, 16
  %1623 = vst [vmem:[%s1622] sm:$0xf] %v1621
  %s1624 = scalar_lea.vmem %s0, 160
  %v1625 = vld [vmem:[%s1624] sm:$0xff]
  %v1626 = vld [vmem:[%s1624 + $0x8] sm:$0xff]
  %v1627 = vld [vmem:[%s1624 + $0x10] sm:$0xff]
  %v1628 = vld [vmem:[%s1624 + $0x18] sm:$0xff]
  %v1629 = vld [vmem:[%s1] sm:$0xff]
  %v1630 = vld [vmem:[%s1 + $0x8] sm:$0xff]
  %v1631 = vld [vmem:[%s1 + $0x10] sm:$0xff]
  %v1632 = vld [vmem:[%s1 + $0x18] sm:$0xff]
  %v1633 = vld [vmem:[%s1 + $0x20] sm:$0xff]
  %v1634 = vld [vmem:[%s1 + $0x28] sm:$0xff]
  %v1635 = vld [vmem:[%s1 + $0x30] sm:$0xff]
  %v1636 = vld [vmem:[%s1 + $0x38] sm:$0xff]
  %v1637 = vld [vmem:[%s1 + $0x40] sm:$0xff]
  %v1638 = vld [vmem:[%s1 + $0x48] sm:$0xff]
  %v1639 = vld [vmem:[%s1 + $0x50] sm:$0xff]
  %v1640 = vld [vmem:[%s1 + $0x58] sm:$0xff]
  %v1641 = vld [vmem:[%s1 + $0x60] sm:$0xff]
  %v1642 = vld [vmem:[%s1 + $0x68] sm:$0xff]
  %v1643 = vld [vmem:[%s1 + $0x70] sm:$0xff]
  %v1644 = vld [vmem:[%s1 + $0x78] sm:$0xff]
  %v1645 = vld [vmem:[%s1 + $0x80] sm:$0xff]
  %v1646 = vld [vmem:[%s1 + $0x88] sm:$0xff]
  %v1647 = vld [vmem:[%s1 + $0x90] sm:$0xff]
  %v1648 = vld [vmem:[%s1 + $0x98] sm:$0xff]
  %v1649 = vld [vmem:[%s1 + $0xa0] sm:$0xff]
  %v1650 = vld [vmem:[%s1 + $0xa8] sm:$0xff]
  %v1651 = vld [vmem:[%s1 + $0xb0] sm:$0xff]
  %v1652 = vld [vmem:[%s1 + $0xb8] sm:$0xff]
  %v1653 = vld [vmem:[%s1 + $0xc0] sm:$0xff]
  %v1654 = vld [vmem:[%s1 + $0xc8] sm:$0xff]
  %v1655 = vld [vmem:[%s1 + $0xd0] sm:$0xff]
  %v1656 = vld [vmem:[%s1 + $0xd8] sm:$0xff]
  %v1657 = vld [vmem:[%s1 + $0xe0] sm:$0xff]
  %v1658 = vld [vmem:[%s1 + $0xe8] sm:$0xff]
  %v1659 = vld [vmem:[%s1 + $0xf0] sm:$0xff]
  %v1660 = vld [vmem:[%s1 + $0xf8] sm:$0xff]
  %v1693 = vunpack.c.l.b16 %v1629
  %v1694 = vunpack.c.h.b16 %v1629
  %v1695 = vunpack.c.l.b16 %v1630
  %v1696 = vunpack.c.h.b16 %v1630
  %v1697 = vunpack.c.l.b16 %v1631
  %v1698 = vunpack.c.h.b16 %v1631
  %v1699 = vunpack.c.l.b16 %v1632
  %v1700 = vunpack.c.h.b16 %v1632
  %v1701 = vunpack.c.l.b16 %v1633
  %v1702 = vunpack.c.h.b16 %v1633
  %v1703 = vunpack.c.l.b16 %v1634
  %v1704 = vunpack.c.h.b16 %v1634
  %v1705 = vunpack.c.l.b16 %v1635
  %v1706 = vunpack.c.h.b16 %v1635
  %v1707 = vunpack.c.l.b16 %v1636
  %v1708 = vunpack.c.h.b16 %v1636
  %v1709 = vunpack.c.l.b16 %v1637
  %v1710 = vunpack.c.h.b16 %v1637
  %v1711 = vunpack.c.l.b16 %v1638
  %v1712 = vunpack.c.h.b16 %v1638
  %v1713 = vunpack.c.l.b16 %v1639
  %v1714 = vunpack.c.h.b16 %v1639
  %v1715 = vunpack.c.l.b16 %v1640
  %v1716 = vunpack.c.h.b16 %v1640
  %v1717 = vunpack.c.l.b16 %v1641
  %v1718 = vunpack.c.h.b16 %v1641
  %v1719 = vunpack.c.l.b16 %v1642
  %v1720 = vunpack.c.h.b16 %v1642
  %v1721 = vunpack.c.l.b16 %v1643
  %v1722 = vunpack.c.h.b16 %v1643
  %v1723 = vunpack.c.l.b16 %v1644
  %v1724 = vunpack.c.h.b16 %v1644
  %v1725 = vunpack.c.l.b16 %v1645
  %v1726 = vunpack.c.h.b16 %v1645
  %v1727 = vunpack.c.l.b16 %v1646
  %v1728 = vunpack.c.h.b16 %v1646
  %v1729 = vunpack.c.l.b16 %v1647
  %v1730 = vunpack.c.h.b16 %v1647
  %v1731 = vunpack.c.l.b16 %v1648
  %v1732 = vunpack.c.h.b16 %v1648
  %v1733 = vunpack.c.l.b16 %v1649
  %v1734 = vunpack.c.h.b16 %v1649
  %v1735 = vunpack.c.l.b16 %v1650
  %v1736 = vunpack.c.h.b16 %v1650
  %v1737 = vunpack.c.l.b16 %v1651
  %v1738 = vunpack.c.h.b16 %v1651
  %v1739 = vunpack.c.l.b16 %v1652
  %v1740 = vunpack.c.h.b16 %v1652
  %v1741 = vunpack.c.l.b16 %v1653
  %v1742 = vunpack.c.h.b16 %v1653
  %v1743 = vunpack.c.l.b16 %v1654
  %v1744 = vunpack.c.h.b16 %v1654
  %v1745 = vunpack.c.l.b16 %v1655
  %v1746 = vunpack.c.h.b16 %v1655
  %v1747 = vunpack.c.l.b16 %v1656
  %v1748 = vunpack.c.h.b16 %v1656
  %v1749 = vunpack.c.l.b16 %v1657
  %v1750 = vunpack.c.h.b16 %v1657
  %v1751 = vunpack.c.l.b16 %v1658
  %v1752 = vunpack.c.h.b16 %v1658
  %v1753 = vunpack.c.l.b16 %v1659
  %v1754 = vunpack.c.h.b16 %v1659
  %v1755 = vunpack.c.l.b16 %v1660
  %v1756 = vunpack.c.h.b16 %v1660
  %v1757 = vpack.c.b16 %v1697, %v1693
  %v1758 = vpack.c.b16 %v1698, %v1694
  %v1759 = vpack.c.b16 %v1699, %v1695
  %v1760 = vpack.c.b16 %v1700, %v1696
  %v1761 = vpack.c.b16 %v1705, %v1701
  %v1762 = vpack.c.b16 %v1706, %v1702
  %v1763 = vpack.c.b16 %v1707, %v1703
  %v1764 = vpack.c.b16 %v1708, %v1704
  %v1765 = vpack.c.b16 %v1713, %v1709
  %v1766 = vpack.c.b16 %v1714, %v1710
  %v1767 = vpack.c.b16 %v1715, %v1711
  %v1768 = vpack.c.b16 %v1716, %v1712
  %v1769 = vpack.c.b16 %v1721, %v1717
  %v1770 = vpack.c.b16 %v1722, %v1718
  %v1771 = vpack.c.b16 %v1723, %v1719
  %v1772 = vpack.c.b16 %v1724, %v1720
  %v1773 = vpack.c.b16 %v1729, %v1725
  %v1774 = vpack.c.b16 %v1730, %v1726
  %v1775 = vpack.c.b16 %v1731, %v1727
  %v1776 = vpack.c.b16 %v1732, %v1728
  %v1777 = vpack.c.b16 %v1737, %v1733
  %v1778 = vpack.c.b16 %v1738, %v1734
  %v1779 = vpack.c.b16 %v1739, %v1735
  %v1780 = vpack.c.b16 %v1740, %v1736
  %v1781 = vpack.c.b16 %v1745, %v1741
  %v1782 = vpack.c.b16 %v1746, %v1742
  %v1783 = vpack.c.b16 %v1747, %v1743
  %v1784 = vpack.c.b16 %v1748, %v1744
  %v1785 = vpack.c.b16 %v1753, %v1749
  %v1786 = vpack.c.b16 %v1754, %v1750
  %v1787 = vpack.c.b16 %v1755, %v1751
  %v1788 = vpack.c.b16 %v1756, %v1752
  %1821 = vmatpush.bf16.msra.mxu0 %v1785
  %1822 = vmatpush.bf16.msra.mxu0 %v1781
  %1823 = vmatpush.bf16.msra.mxu0 %v1777
  %1824 = vmatpush.bf16.msra.mxu0 %v1773
  %1825 = vmatpush.bf16.msra.mxu0 %v1769
  %1826 = vmatpush.bf16.msra.mxu0 %v1765
  %1827 = vmatpush.bf16.msra.mxu0 %v1761
  %1828 = vmatpush.bf16.msra.mxu0 %v1757
  %1829 = vmatmul.bf16.gmra.mxu0 %v1621
  %v1830 = vpop.f32.mrf.mxu0
  %v1831 = vadd.f32 0.0, %v1830
  %v1832 = vpop.f32.mrf.mxu0
  %1833 = vdwg.mxu0
  %1834 = vmatpush.bf16.msra.mxu0 %v1786
  %1835 = vmatpush.bf16.msra.mxu0 %v1782
  %1836 = vmatpush.bf16.msra.mxu0 %v1778
  %1837 = vmatpush.bf16.msra.mxu0 %v1774
  %1838 = vmatpush.bf16.msra.mxu0 %v1770
  %1839 = vmatpush.bf16.msra.mxu0 %v1766
  %1840 = vmatpush.bf16.msra.mxu0 %v1762
  %1841 = vmatpush.bf16.msra.mxu0 %v1758
  %1842 = vmatmul.bf16.gmra.mxu0 %v1621
  %v1843 = vpop.f32.mrf.mxu0
  %v1844 = vadd.f32 0.0, %v1843
  %v1845 = vpop.f32.mrf.mxu0
  %1846 = vdwg.mxu0
  %1847 = vmatpush.bf16.msra.mxu0 %v1787
  %1848 = vmatpush.bf16.msra.mxu0 %v1783
  %1849 = vmatpush.bf16.msra.mxu0 %v1779
  %1850 = vmatpush.bf16.msra.mxu0 %v1775
  %1851 = vmatpush.bf16.msra.mxu0 %v1771
  %1852 = vmatpush.bf16.msra.mxu0 %v1767
  %1853 = vmatpush.bf16.msra.mxu0 %v1763
  %1854 = vmatpush.bf16.msra.mxu0 %v1759
  %1855 = vmatmul.bf16.gmra.mxu0 %v1621
  %v1856 = vpop.f32.mrf.mxu0
  %v1857 = vadd.f32 0.0, %v1856
  %v1858 = vpop.f32.mrf.mxu0
  %1859 = vdwg.mxu0
  %1860 = vmatpush.bf16.msra.mxu0 %v1788
  %1861 = vmatpush.bf16.msra.mxu0 %v1784
  %1862 = vmatpush.bf16.msra.mxu0 %v1780
  %1863 = vmatpush.bf16.msra.mxu0 %v1776
  %1864 = vmatpush.bf16.msra.mxu0 %v1772
  %1865 = vmatpush.bf16.msra.mxu0 %v1768
  %1866 = vmatpush.bf16.msra.mxu0 %v1764
  %1867 = vmatpush.bf16.msra.mxu0 %v1760
  %1868 = vmatmul.bf16.gmra.mxu0 %v1621
  %v1869 = vpop.f32.mrf.mxu0
  %v1870 = vadd.f32 0.0, %v1869
  %v1871 = vpop.f32.mrf.mxu0
  %1872 = vdwg.mxu0
  %v1873 = vadd.f32 %v1625, %v1831
  %v1874 = vadd.f32 %v1626, %v1844
  %v1875 = vadd.f32 %v1627, %v1857
  %v1876 = vadd.f32 %v1628, %v1870
  %v1877 = vxor.u32 %v1873, 2147483648
  %v1878 = vmul.f32 %v1877, 1.442695
  %v1879 = vpow.pop %v1878
  %v1880 = vadd.f32 %v1879, 1.0
  %v1881 = vrcp.pop %v1880
  %v1882 = vmul.f32 %v1880, %v1881
  %v1883 = vsub.f32 1.0, %v1882
  %v1884 = vmul.f32 %v1881, %v1883
  %v1885 = vadd.f32 %v1881, %v1884
  %vm1886 = vweird.f32 %v1880
  %vm1887 = vweird.f32 %v1881
  %vm1888 = vmor %vm1886, %vm1887
  %v1889 = vsel %vm1888, %v1881, %v1885
  %v1890 = vand.u32 2147483647, %v1880
  %vm1891 = vcmp.eq.f32.partialorder %v1890, 8.507059e+37
  %v1892 = vand.u32 %v1880, 2147483648
  %v1893 = vor.u32 1.1754944e-38, %v1892
  %v1894 = vsel %vm1891, %v1893, %v1889
  %v1895 = vmul.f32 1.0, %v1894
  %v1896 = vxor.u32 %v1874, 2147483648
  %v1897 = vmul.f32 %v1896, 1.442695
  %v1898 = vpow.pop %v1897
  %v1899 = vadd.f32 %v1898, 1.0
  %v1900 = vrcp.pop %v1899
  %v1901 = vmul.f32 %v1899, %v1900
  %v1902 = vsub.f32 1.0, %v1901
  %v1903 = vmul.f32 %v1900, %v1902
  %v1904 = vadd.f32 %v1900, %v1903
  %vm1905 = vweird.f32 %v1899
  %vm1906 = vweird.f32 %v1900
  %vm1907 = vmor %vm1905, %vm1906
  %v1908 = vsel %vm1907, %v1900, %v1904
  %v1909 = vand.u32 2147483647, %v1899
  %vm1910 = vcmp.eq.f32.partialorder %v1909, 8.507059e+37
  %v1911 = vand.u32 %v1899, 2147483648
  %v1912 = vor.u32 1.1754944e-38, %v1911
  %v1913 = vsel %vm1910, %v1912, %v1908
  %v1914 = vmul.f32 1.0, %v1913
  %v1915 = vtanh.pop %v1875
  %v1916 = vxor.u32 %v1876, 2147483648
  %v1917 = vmul.f32 %v1916, 1.442695
  %v1918 = vpow.pop %v1917
  %v1919 = vadd.f32 %v1918, 1.0
  %v1920 = vrcp.pop %v1919
  %v1921 = vmul.f32 %v1919, %v1920
  %v1922 = vsub.f32 1.0, %v1921
  %v1923 = vmul.f32 %v1920, %v1922
  %v1924 = vadd.f32 %v1920, %v1923
  %vm1925 = vweird.f32 %v1919
  %vm1926 = vweird.f32 %v1920
  %vm1927 = vmor %vm1925, %vm1926
  %v1928 = vsel %vm1927, %v1920, %v1924
  %v1929 = vand.u32 2147483647, %v1919
  %vm1930 = vcmp.eq.f32.partialorder %v1929, 8.507059e+37
  %v1931 = vand.u32 %v1919, 2147483648
  %v1932 = vor.u32 1.1754944e-38, %v1931
  %v1933 = vsel %vm1930, %v1932, %v1928
  %v1934 = vmul.f32 1.0, %v1933
  %v1935 = vmul.f32 %v1914, %v1618
  %v1936 = vmul.f32 %v1895, %v1915
  %v1937 = vadd.f32 %v1935, %v1936
  %v1938 = vtanh.pop %v1937
  %v1939 = vmul.f32 %v1934, %v1938
  %v1940 = vpack.c.bf16 %v1939, %v1939
  %s1941 = scalar_lea.vmem %s4, 20
  %1942 = vst [vmem:[%s1941] sm:$0xf] %v1940
  %s1943 = scalar_lea.vmem %s0, 192
  %v1944 = vld [vmem:[%s1943] sm:$0xff]
  %v1945 = vld [vmem:[%s1943 + $0x8] sm:$0xff]
  %v1946 = vld [vmem:[%s1943 + $0x10] sm:$0xff]
  %v1947 = vld [vmem:[%s1943 + $0x18] sm:$0xff]
  %v1948 = vld [vmem:[%s1] sm:$0xff]
  %v1949 = vld [vmem:[%s1 + $0x8] sm:$0xff]
  %v1950 = vld [vmem:[%s1 + $0x10] sm:$0xff]
  %v1951 = vld [vmem:[%s1 + $0x18] sm:$0xff]
  %v1952 = vld [vmem:[%s1 + $0x20] sm:$0xff]
  %v1953 = vld [vmem:[%s1 + $0x28] sm:$0xff]
  %v1954 = vld [vmem:[%s1 + $0x30] sm:$0xff]
  %v1955 = vld [vmem:[%s1 + $0x38] sm:$0xff]
  %v1956 = vld [vmem:[%s1 + $0x40] sm:$0xff]
  %v1957 = vld [vmem:[%s1 + $0x48] sm:$0xff]
  %v1958 = vld [vmem:[%s1 + $0x50] sm:$0xff]
  %v1959 = vld [vmem:[%s1 + $0x58] sm:$0xff]
  %v1960 = vld [vmem:[%s1 + $0x60] sm:$0xff]
  %v1961 = vld [vmem:[%s1 + $0x68] sm:$0xff]
  %v1962 = vld [vmem:[%s1 + $0x70] sm:$0xff]
  %v1963 = vld [vmem:[%s1 + $0x78] sm:$0xff]
  %v1964 = vld [vmem:[%s1 + $0x80] sm:$0xff]
  %v1965 = vld [vmem:[%s1 + $0x88] sm:$0xff]
  %v1966 = vld [vmem:[%s1 + $0x90] sm:$0xff]
  %v1967 = vld [vmem:[%s1 + $0x98] sm:$0xff]
  %v1968 = vld [vmem:[%s1 + $0xa0] sm:$0xff]
  %v1969 = vld [vmem:[%s1 + $0xa8] sm:$0xff]
  %v1970 = vld [vmem:[%s1 + $0xb0] sm:$0xff]
  %v1971 = vld [vmem:[%s1 + $0xb8] sm:$0xff]
  %v1972 = vld [vmem:[%s1 + $0xc0] sm:$0xff]
  %v1973 = vld [vmem:[%s1 + $0xc8] sm:$0xff]
  %v1974 = vld [vmem:[%s1 + $0xd0] sm:$0xff]
  %v1975 = vld [vmem:[%s1 + $0xd8] sm:$0xff]
  %v1976 = vld [vmem:[%s1 + $0xe0] sm:$0xff]
  %v1977 = vld [vmem:[%s1 + $0xe8] sm:$0xff]
  %v1978 = vld [vmem:[%s1 + $0xf0] sm:$0xff]
  %v1979 = vld [vmem:[%s1 + $0xf8] sm:$0xff]
  %v2012 = vunpack.c.l.b16 %v1948
  %v2013 = vunpack.c.h.b16 %v1948
  %v2014 = vunpack.c.l.b16 %v1949
  %v2015 = vunpack.c.h.b16 %v1949
  %v2016 = vunpack.c.l.b16 %v1950
  %v2017 = vunpack.c.h.b16 %v1950
  %v2018 = vunpack.c.l.b16 %v1951
  %v2019 = vunpack.c.h.b16 %v1951
  %v2020 = vunpack.c.l.b16 %v1952
  %v2021 = vunpack.c.h.b16 %v1952
  %v2022 = vunpack.c.l.b16 %v1953
  %v2023 = vunpack.c.h.b16 %v1953
  %v2024 = vunpack.c.l.b16 %v1954
  %v2025 = vunpack.c.h.b16 %v1954
  %v2026 = vunpack.c.l.b16 %v1955
  %v2027 = vunpack.c.h.b16 %v1955
  %v2028 = vunpack.c.l.b16 %v1956
  %v2029 = vunpack.c.h.b16 %v1956
  %v2030 = vunpack.c.l.b16 %v1957
  %v2031 = vunpack.c.h.b16 %v1957
  %v2032 = vunpack.c.l.b16 %v1958
  %v2033 = vunpack.c.h.b16 %v1958
  %v2034 = vunpack.c.l.b16 %v1959
  %v2035 = vunpack.c.h.b16 %v1959
  %v2036 = vunpack.c.l.b16 %v1960
  %v2037 = vunpack.c.h.b16 %v1960
  %v2038 = vunpack.c.l.b16 %v1961
  %v2039 = vunpack.c.h.b16 %v1961
  %v2040 = vunpack.c.l.b16 %v1962
  %v2041 = vunpack.c.h.b16 %v1962
  %v2042 = vunpack.c.l.b16 %v1963
  %v2043 = vunpack.c.h.b16 %v1963
  %v2044 = vunpack.c.l.b16 %v1964
  %v2045 = vunpack.c.h.b16 %v1964
  %v2046 = vunpack.c.l.b16 %v1965
  %v2047 = vunpack.c.h.b16 %v1965
  %v2048 = vunpack.c.l.b16 %v1966
  %v2049 = vunpack.c.h.b16 %v1966
  %v2050 = vunpack.c.l.b16 %v1967
  %v2051 = vunpack.c.h.b16 %v1967
  %v2052 = vunpack.c.l.b16 %v1968
  %v2053 = vunpack.c.h.b16 %v1968
  %v2054 = vunpack.c.l.b16 %v1969
  %v2055 = vunpack.c.h.b16 %v1969
  %v2056 = vunpack.c.l.b16 %v1970
  %v2057 = vunpack.c.h.b16 %v1970
  %v2058 = vunpack.c.l.b16 %v1971
  %v2059 = vunpack.c.h.b16 %v1971
  %v2060 = vunpack.c.l.b16 %v1972
  %v2061 = vunpack.c.h.b16 %v1972
  %v2062 = vunpack.c.l.b16 %v1973
  %v2063 = vunpack.c.h.b16 %v1973
  %v2064 = vunpack.c.l.b16 %v1974
  %v2065 = vunpack.c.h.b16 %v1974
  %v2066 = vunpack.c.l.b16 %v1975
  %v2067 = vunpack.c.h.b16 %v1975
  %v2068 = vunpack.c.l.b16 %v1976
  %v2069 = vunpack.c.h.b16 %v1976
  %v2070 = vunpack.c.l.b16 %v1977
  %v2071 = vunpack.c.h.b16 %v1977
  %v2072 = vunpack.c.l.b16 %v1978
  %v2073 = vunpack.c.h.b16 %v1978
  %v2074 = vunpack.c.l.b16 %v1979
  %v2075 = vunpack.c.h.b16 %v1979
  %v2076 = vpack.c.b16 %v2016, %v2012
  %v2077 = vpack.c.b16 %v2017, %v2013
  %v2078 = vpack.c.b16 %v2018, %v2014
  %v2079 = vpack.c.b16 %v2019, %v2015
  %v2080 = vpack.c.b16 %v2024, %v2020
  %v2081 = vpack.c.b16 %v2025, %v2021
  %v2082 = vpack.c.b16 %v2026, %v2022
  %v2083 = vpack.c.b16 %v2027, %v2023
  %v2084 = vpack.c.b16 %v2032, %v2028
  %v2085 = vpack.c.b16 %v2033, %v2029
  %v2086 = vpack.c.b16 %v2034, %v2030
  %v2087 = vpack.c.b16 %v2035, %v2031
  %v2088 = vpack.c.b16 %v2040, %v2036
  %v2089 = vpack.c.b16 %v2041, %v2037
  %v2090 = vpack.c.b16 %v2042, %v2038
  %v2091 = vpack.c.b16 %v2043, %v2039
  %v2092 = vpack.c.b16 %v2048, %v2044
  %v2093 = vpack.c.b16 %v2049, %v2045
  %v2094 = vpack.c.b16 %v2050, %v2046
  %v2095 = vpack.c.b16 %v2051, %v2047
  %v2096 = vpack.c.b16 %v2056, %v2052
  %v2097 = vpack.c.b16 %v2057, %v2053
  %v2098 = vpack.c.b16 %v2058, %v2054
  %v2099 = vpack.c.b16 %v2059, %v2055
  %v2100 = vpack.c.b16 %v2064, %v2060
  %v2101 = vpack.c.b16 %v2065, %v2061
  %v2102 = vpack.c.b16 %v2066, %v2062
  %v2103 = vpack.c.b16 %v2067, %v2063
  %v2104 = vpack.c.b16 %v2072, %v2068
  %v2105 = vpack.c.b16 %v2073, %v2069
  %v2106 = vpack.c.b16 %v2074, %v2070
  %v2107 = vpack.c.b16 %v2075, %v2071
  %2140 = vmatpush.bf16.msra.mxu0 %v2104
  %2141 = vmatpush.bf16.msra.mxu0 %v2100
  %2142 = vmatpush.bf16.msra.mxu0 %v2096
  %2143 = vmatpush.bf16.msra.mxu0 %v2092
  %2144 = vmatpush.bf16.msra.mxu0 %v2088
  %2145 = vmatpush.bf16.msra.mxu0 %v2084
  %2146 = vmatpush.bf16.msra.mxu0 %v2080
  %2147 = vmatpush.bf16.msra.mxu0 %v2076
  %2148 = vmatmul.bf16.gmra.mxu0 %v1940
  %v2149 = vpop.f32.mrf.mxu0
  %v2150 = vadd.f32 0.0, %v2149
  %v2151 = vpop.f32.mrf.mxu0
  %2152 = vdwg.mxu0
  %2153 = vmatpush.bf16.msra.mxu0 %v2105
  %2154 = vmatpush.bf16.msra.mxu0 %v2101
  %2155 = vmatpush.bf16.msra.mxu0 %v2097
  %2156 = vmatpush.bf16.msra.mxu0 %v2093
  %2157 = vmatpush.bf16.msra.mxu0 %v2089
  %2158 = vmatpush.bf16.msra.mxu0 %v2085
  %2159 = vmatpush.bf16.msra.mxu0 %v2081
  %2160 = vmatpush.bf16.msra.mxu0 %v2077
  %2161 = vmatmul.bf16.gmra.mxu0 %v1940
  %v2162 = vpop.f32.mrf.mxu0
  %v2163 = vadd.f32 0.0, %v2162
  %v2164 = vpop.f32.mrf.mxu0
  %2165 = vdwg.mxu0
  %2166 = vmatpush.bf16.msra.mxu0 %v2106
  %2167 = vmatpush.bf16.msra.mxu0 %v2102
  %2168 = vmatpush.bf16.msra.mxu0 %v2098
  %2169 = vmatpush.bf16.msra.mxu0 %v2094
  %2170 = vmatpush.bf16.msra.mxu0 %v2090
  %2171 = vmatpush.bf16.msra.mxu0 %v2086
  %2172 = vmatpush.bf16.msra.mxu0 %v2082
  %2173 = vmatpush.bf16.msra.mxu0 %v2078
  %2174 = vmatmul.bf16.gmra.mxu0 %v1940
  %v2175 = vpop.f32.mrf.mxu0
  %v2176 = vadd.f32 0.0, %v2175
  %v2177 = vpop.f32.mrf.mxu0
  %2178 = vdwg.mxu0
  %2179 = vmatpush.bf16.msra.mxu0 %v2107
  %2180 = vmatpush.bf16.msra.mxu0 %v2103
  %2181 = vmatpush.bf16.msra.mxu0 %v2099
  %2182 = vmatpush.bf16.msra.mxu0 %v2095
  %2183 = vmatpush.bf16.msra.mxu0 %v2091
  %2184 = vmatpush.bf16.msra.mxu0 %v2087
  %2185 = vmatpush.bf16.msra.mxu0 %v2083
  %2186 = vmatpush.bf16.msra.mxu0 %v2079
  %2187 = vmatmul.bf16.gmra.mxu0 %v1940
  %v2188 = vpop.f32.mrf.mxu0
  %v2189 = vadd.f32 0.0, %v2188
  %v2190 = vpop.f32.mrf.mxu0
  %2191 = vdwg.mxu0
  %v2192 = vadd.f32 %v1944, %v2150
  %v2193 = vadd.f32 %v1945, %v2163
  %v2194 = vadd.f32 %v1946, %v2176
  %v2195 = vadd.f32 %v1947, %v2189
  %v2196 = vxor.u32 %v2192, 2147483648
  %v2197 = vmul.f32 %v2196, 1.442695
  %v2198 = vpow.pop %v2197
  %v2199 = vadd.f32 %v2198, 1.0
  %v2200 = vrcp.pop %v2199
  %v2201 = vmul.f32 %v2199, %v2200
  %v2202 = vsub.f32 1.0, %v2201
  %v2203 = vmul.f32 %v2200, %v2202
  %v2204 = vadd.f32 %v2200, %v2203
  %vm2205 = vweird.f32 %v2199
  %vm2206 = vweird.f32 %v2200
  %vm2207 = vmor %vm2205, %vm2206
  %v2208 = vsel %vm2207, %v2200, %v2204
  %v2209 = vand.u32 2147483647, %v2199
  %vm2210 = vcmp.eq.f32.partialorder %v2209, 8.507059e+37
  %v2211 = vand.u32 %v2199, 2147483648
  %v2212 = vor.u32 1.1754944e-38, %v2211
  %v2213 = vsel %vm2210, %v2212, %v2208
  %v2214 = vmul.f32 1.0, %v2213
  %v2215 = vxor.u32 %v2193, 2147483648
  %v2216 = vmul.f32 %v2215, 1.442695
  %v2217 = vpow.pop %v2216
  %v2218 = vadd.f32 %v2217, 1.0
  %v2219 = vrcp.pop %v2218
  %v2220 = vmul.f32 %v2218, %v2219
  %v2221 = vsub.f32 1.0, %v2220
  %v2222 = vmul.f32 %v2219, %v2221
  %v2223 = vadd.f32 %v2219, %v2222
  %vm2224 = vweird.f32 %v2218
  %vm2225 = vweird.f32 %v2219
  %vm2226 = vmor %vm2224, %vm2225
  %v2227 = vsel %vm2226, %v2219, %v2223
  %v2228 = vand.u32 2147483647, %v2218
  %vm2229 = vcmp.eq.f32.partialorder %v2228, 8.507059e+37
  %v2230 = vand.u32 %v2218, 2147483648
  %v2231 = vor.u32 1.1754944e-38, %v2230
  %v2232 = vsel %vm2229, %v2231, %v2227
  %v2233 = vmul.f32 1.0, %v2232
  %v2234 = vtanh.pop %v2194
  %v2235 = vxor.u32 %v2195, 2147483648
  %v2236 = vmul.f32 %v2235, 1.442695
  %v2237 = vpow.pop %v2236
  %v2238 = vadd.f32 %v2237, 1.0
  %v2239 = vrcp.pop %v2238
  %v2240 = vmul.f32 %v2238, %v2239
  %v2241 = vsub.f32 1.0, %v2240
  %v2242 = vmul.f32 %v2239, %v2241
  %v2243 = vadd.f32 %v2239, %v2242
  %vm2244 = vweird.f32 %v2238
  %vm2245 = vweird.f32 %v2239
  %vm2246 = vmor %vm2244, %vm2245
  %v2247 = vsel %vm2246, %v2239, %v2243
  %v2248 = vand.u32 2147483647, %v2238
  %vm2249 = vcmp.eq.f32.partialorder %v2248, 8.507059e+37
  %v2250 = vand.u32 %v2238, 2147483648
  %v2251 = vor.u32 1.1754944e-38, %v2250
  %v2252 = vsel %vm2249, %v2251, %v2247
  %v2253 = vmul.f32 1.0, %v2252
  %v2254 = vmul.f32 %v2233, %v1937
  %v2255 = vmul.f32 %v2214, %v2234
  %v2256 = vadd.f32 %v2254, %v2255
  %v2257 = vtanh.pop %v2256
  %v2258 = vmul.f32 %v2253, %v2257
  %v2259 = vpack.c.bf16 %v2258, %v2258
  %s2260 = scalar_lea.vmem %s4, 24
  %2261 = vst [vmem:[%s2260] sm:$0xf] %v2259
  %s2262 = scalar_lea.vmem %s0, 224
  %v2263 = vld [vmem:[%s2262] sm:$0xff]
  %v2264 = vld [vmem:[%s2262 + $0x8] sm:$0xff]
  %v2265 = vld [vmem:[%s2262 + $0x10] sm:$0xff]
  %v2266 = vld [vmem:[%s2262 + $0x18] sm:$0xff]
  %v2267 = vld [vmem:[%s1] sm:$0xff]
  %v2268 = vld [vmem:[%s1 + $0x8] sm:$0xff]
  %v2269 = vld [vmem:[%s1 + $0x10] sm:$0xff]
  %v2270 = vld [vmem:[%s1 + $0x18] sm:$0xff]
  %v2271 = vld [vmem:[%s1 + $0x20] sm:$0xff]
  %v2272 = vld [vmem:[%s1 + $0x28] sm:$0xff]
  %v2273 = vld [vmem:[%s1 + $0x30] sm:$0xff]
  %v2274 = vld [vmem:[%s1 + $0x38] sm:$0xff]
  %v2275 = vld [vmem:[%s1 + $0x40] sm:$0xff]
  %v2276 = vld [vmem:[%s1 + $0x48] sm:$0xff]
  %v2277 = vld [vmem:[%s1 + $0x50] sm:$0xff]
  %v2278 = vld [vmem:[%s1 + $0x58] sm:$0xff]
  %v2279 = vld [vmem:[%s1 + $0x60] sm:$0xff]
  %v2280 = vld [vmem:[%s1 + $0x68] sm:$0xff]
  %v2281 = vld [vmem:[%s1 + $0x70] sm:$0xff]
  %v2282 = vld [vmem:[%s1 + $0x78] sm:$0xff]
  %v2283 = vld [vmem:[%s1 + $0x80] sm:$0xff]
  %v2284 = vld [vmem:[%s1 + $0x88] sm:$0xff]
  %v2285 = vld [vmem:[%s1 + $0x90] sm:$0xff]
  %v2286 = vld [vmem:[%s1 + $0x98] sm:$0xff]
  %v2287 = vld [vmem:[%s1 + $0xa0] sm:$0xff]
  %v2288 = vld [vmem:[%s1 + $0xa8] sm:$0xff]
  %v2289 = vld [vmem:[%s1 + $0xb0] sm:$0xff]
  %v2290 = vld [vmem:[%s1 + $0xb8] sm:$0xff]
  %v2291 = vld [vmem:[%s1 + $0xc0] sm:$0xff]
  %v2292 = vld [vmem:[%s1 + $0xc8] sm:$0xff]
  %v2293 = vld [vmem:[%s1 + $0xd0] sm:$0xff]
  %v2294 = vld [vmem:[%s1 + $0xd8] sm:$0xff]
  %v2295 = vld [vmem:[%s1 + $0xe0] sm:$0xff]
  %v2296 = vld [vmem:[%s1 + $0xe8] sm:$0xff]
  %v2297 = vld [vmem:[%s1 + $0xf0] sm:$0xff]
  %v2298 = vld [vmem:[%s1 + $0xf8] sm:$0xff]
  %v2331 = vunpack.c.l.b16 %v2267
  %v2332 = vunpack.c.h.b16 %v2267
  %v2333 = vunpack.c.l.b16 %v2268
  %v2334 = vunpack.c.h.b16 %v2268
  %v2335 = vunpack.c.l.b16 %v2269
  %v2336 = vunpack.c.h.b16 %v2269
  %v2337 = vunpack.c.l.b16 %v2270
  %v2338 = vunpack.c.h.b16 %v2270
  %v2339 = vunpack.c.l.b16 %v2271
  %v2340 = vunpack.c.h.b16 %v2271
  %v2341 = vunpack.c.l.b16 %v2272
  %v2342 = vunpack.c.h.b16 %v2272
  %v2343 = vunpack.c.l.b16 %v2273
  %v2344 = vunpack.c.h.b16 %v2273
  %v2345 = vunpack.c.l.b16 %v2274
  %v2346 = vunpack.c.h.b16 %v2274
  %v2347 = vunpack.c.l.b16 %v2275
  %v2348 = vunpack.c.h.b16 %v2275
  %v2349 = vunpack.c.l.b16 %v2276
  %v2350 = vunpack.c.h.b16 %v2276
  %v2351 = vunpack.c.l.b16 %v2277
  %v2352 = vunpack.c.h.b16 %v2277
  %v2353 = vunpack.c.l.b16 %v2278
  %v2354 = vunpack.c.h.b16 %v2278
  %v2355 = vunpack.c.l.b16 %v2279
  %v2356 = vunpack.c.h.b16 %v2279
  %v2357 = vunpack.c.l.b16 %v2280
  %v2358 = vunpack.c.h.b16 %v2280
  %v2359 = vunpack.c.l.b16 %v2281
  %v2360 = vunpack.c.h.b16 %v2281
  %v2361 = vunpack.c.l.b16 %v2282
  %v2362 = vunpack.c.h.b16 %v2282
  %v2363 = vunpack.c.l.b16 %v2283
  %v2364 = vunpack.c.h.b16 %v2283
  %v2365 = vunpack.c.l.b16 %v2284
  %v2366 = vunpack.c.h.b16 %v2284
  %v2367 = vunpack.c.l.b16 %v2285
  %v2368 = vunpack.c.h.b16 %v2285
  %v2369 = vunpack.c.l.b16 %v2286
  %v2370 = vunpack.c.h.b16 %v2286
  %v2371 = vunpack.c.l.b16 %v2287
  %v2372 = vunpack.c.h.b16 %v2287
  %v2373 = vunpack.c.l.b16 %v2288
  %v2374 = vunpack.c.h.b16 %v2288
  %v2375 = vunpack.c.l.b16 %v2289
  %v2376 = vunpack.c.h.b16 %v2289
  %v2377 = vunpack.c.l.b16 %v2290
  %v2378 = vunpack.c.h.b16 %v2290
  %v2379 = vunpack.c.l.b16 %v2291
  %v2380 = vunpack.c.h.b16 %v2291
  %v2381 = vunpack.c.l.b16 %v2292
  %v2382 = vunpack.c.h.b16 %v2292
  %v2383 = vunpack.c.l.b16 %v2293
  %v2384 = vunpack.c.h.b16 %v2293
  %v2385 = vunpack.c.l.b16 %v2294
  %v2386 = vunpack.c.h.b16 %v2294
  %v2387 = vunpack.c.l.b16 %v2295
  %v2388 = vunpack.c.h.b16 %v2295
  %v2389 = vunpack.c.l.b16 %v2296
  %v2390 = vunpack.c.h.b16 %v2296
  %v2391 = vunpack.c.l.b16 %v2297
  %v2392 = vunpack.c.h.b16 %v2297
  %v2393 = vunpack.c.l.b16 %v2298
  %v2394 = vunpack.c.h.b16 %v2298
  %v2395 = vpack.c.b16 %v2335, %v2331
  %v2396 = vpack.c.b16 %v2336, %v2332
  %v2397 = vpack.c.b16 %v2337, %v2333
  %v2398 = vpack.c.b16 %v2338, %v2334
  %v2399 = vpack.c.b16 %v2343, %v2339
  %v2400 = vpack.c.b16 %v2344, %v2340
  %v2401 = vpack.c.b16 %v2345, %v2341
  %v2402 = vpack.c.b16 %v2346, %v2342
  %v2403 = vpack.c.b16 %v2351, %v2347
  %v2404 = vpack.c.b16 %v2352, %v2348
  %v2405 = vpack.c.b16 %v2353, %v2349
  %v2406 = vpack.c.b16 %v2354, %v2350
  %v2407 = vpack.c.b16 %v2359, %v2355
  %v2408 = vpack.c.b16 %v2360, %v2356
  %v2409 = vpack.c.b16 %v2361, %v2357
  %v2410 = vpack.c.b16 %v2362, %v2358
  %v2411 = vpack.c.b16 %v2367, %v2363
  %v2412 = vpack.c.b16 %v2368, %v2364
  %v2413 = vpack.c.b16 %v2369, %v2365
  %v2414 = vpack.c.b16 %v2370, %v2366
  %v2415 = vpack.c.b16 %v2375, %v2371
  %v2416 = vpack.c.b16 %v2376, %v2372
  %v2417 = vpack.c.b16 %v2377, %v2373
  %v2418 = vpack.c.b16 %v2378, %v2374
  %v2419 = vpack.c.b16 %v2383, %v2379
  %v2420 = vpack.c.b16 %v2384, %v2380
  %v2421 = vpack.c.b16 %v2385, %v2381
  %v2422 = vpack.c.b16 %v2386, %v2382
  %v2423 = vpack.c.b16 %v2391, %v2387
  %v2424 = vpack.c.b16 %v2392, %v2388
  %v2425 = vpack.c.b16 %v2393, %v2389
  %v2426 = vpack.c.b16 %v2394, %v2390
  %2459 = vmatpush.bf16.msra.mxu0 %v2423
  %2460 = vmatpush.bf16.msra.mxu0 %v2419
  %2461 = vmatpush.bf16.msra.mxu0 %v2415
  %2462 = vmatpush.bf16.msra.mxu0 %v2411
  %2463 = vmatpush.bf16.msra.mxu0 %v2407
  %2464 = vmatpush.bf16.msra.mxu0 %v2403
  %2465 = vmatpush.bf16.msra.mxu0 %v2399
  %2466 = vmatpush.bf16.msra.mxu0 %v2395
  %2467 = vmatmul.bf16.gmra.mxu0 %v2259
  %v2468 = vpop.f32.mrf.mxu0
  %v2469 = vadd.f32 0.0, %v2468
  %v2470 = vpop.f32.mrf.mxu0
  %2471 = vdwg.mxu0
  %2472 = vmatpush.bf16.msra.mxu0 %v2424
  %2473 = vmatpush.bf16.msra.mxu0 %v2420
  %2474 = vmatpush.bf16.msra.mxu0 %v2416
  %2475 = vmatpush.bf16.msra.mxu0 %v2412
  %2476 = vmatpush.bf16.msra.mxu0 %v2408
  %2477 = vmatpush.bf16.msra.mxu0 %v2404
  %2478 = vmatpush.bf16.msra.mxu0 %v2400
  %2479 = vmatpush.bf16.msra.mxu0 %v2396
  %2480 = vmatmul.bf16.gmra.mxu0 %v2259
  %v2481 = vpop.f32.mrf.mxu0
  %v2482 = vadd.f32 0.0, %v2481
  %v2483 = vpop.f32.mrf.mxu0
  %2484 = vdwg.mxu0
  %2485 = vmatpush.bf16.msra.mxu0 %v2425
  %2486 = vmatpush.bf16.msra.mxu0 %v2421
  %2487 = vmatpush.bf16.msra.mxu0 %v2417
  %2488 = vmatpush.bf16.msra.mxu0 %v2413
  %2489 = vmatpush.bf16.msra.mxu0 %v2409
  %2490 = vmatpush.bf16.msra.mxu0 %v2405
  %2491 = vmatpush.bf16.msra.mxu0 %v2401
  %2492 = vmatpush.bf16.msra.mxu0 %v2397
  %2493 = vmatmul.bf16.gmra.mxu0 %v2259
  %v2494 = vpop.f32.mrf.mxu0
  %v2495 = vadd.f32 0.0, %v2494
  %v2496 = vpop.f32.mrf.mxu0
  %2497 = vdwg.mxu0
  %2498 = vmatpush.bf16.msra.mxu0 %v2426
  %2499 = vmatpush.bf16.msra.mxu0 %v2422
  %2500 = vmatpush.bf16.msra.mxu0 %v2418
  %2501 = vmatpush.bf16.msra.mxu0 %v2414
  %2502 = vmatpush.bf16.msra.mxu0 %v2410
  %2503 = vmatpush.bf16.msra.mxu0 %v2406
  %2504 = vmatpush.bf16.msra.mxu0 %v2402
  %2505 = vmatpush.bf16.msra.mxu0 %v2398
  %2506 = vmatmul.bf16.gmra.mxu0 %v2259
  %v2507 = vpop.f32.mrf.mxu0
  %v2508 = vadd.f32 0.0, %v2507
  %v2509 = vpop.f32.mrf.mxu0
  %2510 = vdwg.mxu0
  %v2511 = vadd.f32 %v2263, %v2469
  %v2512 = vadd.f32 %v2264, %v2482
  %v2513 = vadd.f32 %v2265, %v2495
  %v2514 = vadd.f32 %v2266, %v2508
  %v2515 = vxor.u32 %v2511, 2147483648
  %v2516 = vmul.f32 %v2515, 1.442695
  %v2517 = vpow.pop %v2516
  %v2518 = vadd.f32 %v2517, 1.0
  %v2519 = vrcp.pop %v2518
  %v2520 = vmul.f32 %v2518, %v2519
  %v2521 = vsub.f32 1.0, %v2520
  %v2522 = vmul.f32 %v2519, %v2521
  %v2523 = vadd.f32 %v2519, %v2522
  %vm2524 = vweird.f32 %v2518
  %vm2525 = vweird.f32 %v2519
  %vm2526 = vmor %vm2524, %vm2525
  %v2527 = vsel %vm2526, %v2519, %v2523
  %v2528 = vand.u32 2147483647, %v2518
  %vm2529 = vcmp.eq.f32.partialorder %v2528, 8.507059e+37
  %v2530 = vand.u32 %v2518, 2147483648
  %v2531 = vor.u32 1.1754944e-38, %v2530
  %v2532 = vsel %vm2529, %v2531, %v2527
  %v2533 = vmul.f32 1.0, %v2532
  %v2534 = vxor.u32 %v2512, 2147483648
  %v2535 = vmul.f32 %v2534, 1.442695
  %v2536 = vpow.pop %v2535
  %v2537 = vadd.f32 %v2536, 1.0
  %v2538 = vrcp.pop %v2537
  %v2539 = vmul.f32 %v2537, %v2538
  %v2540 = vsub.f32 1.0, %v2539
  %v2541 = vmul.f32 %v2538, %v2540
  %v2542 = vadd.f32 %v2538, %v2541
  %vm2543 = vweird.f32 %v2537
  %vm2544 = vweird.f32 %v2538
  %vm2545 = vmor %vm2543, %vm2544
  %v2546 = vsel %vm2545, %v2538, %v2542
  %v2547 = vand.u32 2147483647, %v2537
  %vm2548 = vcmp.eq.f32.partialorder %v2547, 8.507059e+37
  %v2549 = vand.u32 %v2537, 2147483648
  %v2550 = vor.u32 1.1754944e-38, %v2549
  %v2551 = vsel %vm2548, %v2550, %v2546
  %v2552 = vmul.f32 1.0, %v2551
  %v2553 = vtanh.pop %v2513
  %v2554 = vxor.u32 %v2514, 2147483648
  %v2555 = vmul.f32 %v2554, 1.442695
  %v2556 = vpow.pop %v2555
  %v2557 = vadd.f32 %v2556, 1.0
  %v2558 = vrcp.pop %v2557
  %v2559 = vmul.f32 %v2557, %v2558
  %v2560 = vsub.f32 1.0, %v2559
  %v2561 = vmul.f32 %v2558, %v2560
  %v2562 = vadd.f32 %v2558, %v2561
  %vm2563 = vweird.f32 %v2557
  %vm2564 = vweird.f32 %v2558
  %vm2565 = vmor %vm2563, %vm2564
  %v2566 = vsel %vm2565, %v2558, %v2562
  %v2567 = vand.u32 2147483647, %v2557
  %vm2568 = vcmp.eq.f32.partialorder %v2567, 8.507059e+37
  %v2569 = vand.u32 %v2557, 2147483648
  %v2570 = vor.u32 1.1754944e-38, %v2569
  %v2571 = vsel %vm2568, %v2570, %v2566
  %v2572 = vmul.f32 1.0, %v2571
  %v2573 = vmul.f32 %v2552, %v2256
  %v2574 = vmul.f32 %v2533, %v2553
  %v2575 = vadd.f32 %v2573, %v2574
  %v2576 = vtanh.pop %v2575
  %v2577 = vmul.f32 %v2572, %v2576
  %v2578 = vpack.c.bf16 %v2577, %v2577
  %s2579 = scalar_lea.vmem %s4, 28
  %2580 = vst [vmem:[%s2579] sm:$0xf] %v2578
  %2581 = vst [vmem:[#allocation2] sm:$0xff] %v2577
  %2582 = vst [vmem:[#allocation3] sm:$0xff] %v2575
  %2583 = vst [vmem:[%s5] sm:$0xff] %v2577
  %2584 = vst [vmem:[%s6] sm:$0xff] %v2575
  // Predicated region
  $region22: #{lstm_lm_forward.5} parent=0 // pred_check
    _
  $region23: #{lstm_lm_forward.5} parent=0 // pred_check_branch
    %2586 = sbr.rel (0) target = $region25
  $region24: #{lstm_lm_forward.5} parent=0 // pred_region
    _
  $region25: #{lstm_lm_forward.5} parent=0 // pred_fallthru
    _
  // Predicated region
  $region26: #{lstm_lm_forward.5} parent=0 // pred_check
    _
  $region27: #{lstm_lm_forward.5} parent=0 // pred_check_branch
    %2588 = sbr.rel (0) target = $region29
  $region28: #{lstm_lm_forward.5} parent=0 // pred_region
    _
  $region29: #{lstm_lm_forward.5} parent=0 // pred_fallthru
    _
  // Predicated region
  $region30: #{lstm_lm_forward.5} parent=0 // pred_check
    _
  $region31: #{lstm_lm_forward.5} parent=0 // pred_check_branch
    %2590 = sbr.rel (0) target = $region33
  $region32: #{lstm_lm_forward.5} parent=0 // pred_region
    _
  $region33: #{lstm_lm_forward.5} parent=0 // pred_fallthru
    _
  // Predicated region
  $region34: #{lstm_lm_forward.5} parent=0 // pred_check
    _
  $region35: #{lstm_lm_forward.5} parent=0 // pred_check_branch
    %2592 = sbr.rel (0) target = $region37
  $region36: #{lstm_lm_forward.5} parent=0 // pred_region
    _
  $region37: #{lstm_lm_forward.5} parent=0 // pred_fallthru
    _
  // Predicated region
  $region38: #{lstm_lm_forward.5} parent=0 // pred_check
    _
  $region39: #{lstm_lm_forward.5} parent=0 // pred_check_branch
    %2594 = sbr.rel (0) target = $region41
  $region40: #{lstm_lm_forward.5} parent=0 // pred_region
    _
  $region41: #{lstm_lm_forward.5} parent=0 // pred_fallthru
    _
  // Predicated region
  $region42: #{lstm_lm_forward.5} parent=0 // pred_check
    _
  $region43: #{lstm_lm_forward.5} parent=0 // pred_check_branch
    %2596 = sbr.rel (0) target = $region45
  $region44: #{lstm_lm_forward.5} parent=0 // pred_region
    _
  $region45: #{lstm_lm_forward.5} parent=0 // pred_fallthru
    _

</llo_original>
